<compile_context>
chip_gen: v7x
topology: tpu7x:2x2x1
jax: 0.10.0
libtpu: 0.0.40
codegen_flags: <defaults>
</compile_context>

<pallas_src>
import numpy as np
import jax
import jax.numpy as jnp
from jax import lax
from jax.experimental import pallas as pl
from jax.experimental.pallas import tpu as pltpu


def _make_kernel(C, Wp, Wh, L, LE, BP, PADH):
    """Builds the fused kernel with static geometry baked in via closure."""

    def kernel(x_ref, w1_ref, b1_ref, sel_ref, w2_ref, mask_ref, b2_ref, o_ref):
        # x_ref   : (1, LPAD)   B zero-padded samples, flattened + concatenated on lanes
        # w1_ref  : (C, 9)      conv1 taps [channel, tap]
        # b1_ref  : (C, 1)
        # sel_ref : (L, 2*BP)   0/1 pooling selection matrix (even | odd columns)
        # w2_ref  : (C, 9)      conv2 taps [channel, tap]
        # mask_ref: (9, BP)     conv2 zero-padding validity masks per tap
        # b2_ref  : (1, 1)      SMEM scalar
        # o_ref   : (1, BP)     lane-dense output row for this grid step
        x_row = x_ref[...]                                     # load once
        w1 = w1_ref[...]

        # ---- conv1 (1->C, 3x3, pad=1): channels-major, 9 lane-shifted VPU FMAs ----
        acc1 = w1[:, 0:1] * x_row[:, 0:LE]                     # tap (ky=0, kx=0)
        for t in range(1, 9):
            ky, kx = divmod(t, 3)
            off = ky * Wp + kx
            acc1 = acc1 + w1[:, t:t + 1] * x_row[:, off:off + LE]
        y = jnp.maximum(acc1 + b1_ref[...], 0.0)               # (C, LE), bias + ReLU

        # ---- 2x2 max-pool ----
        # H direction: static lane shift by one padded row + elementwise max.
        yh = jnp.maximum(y[:, :L], y[:, Wp:Wp + L])            # (C, L)
        # W direction + stride-2 compaction: one fused selection matmul on the MXU.
        p2 = jnp.dot(yh, sel_ref[...], preferred_element_type=jnp.float32)  # (C, 2*BP)
        pool = jnp.maximum(p2[:, :BP], p2[:, BP:])             # (C, BP) channels-major

        # ---- conv2 (C->1, 3x3, pad=1): 9 lane-shifted taps, ONE channel reduction ----
        w2 = w2_ref[...]
        mask = mask_ref[...]
        zpad = jnp.zeros((C, PADH), jnp.float32)
        ppad = jnp.concatenate([zpad, pool, zpad], axis=1)     # (C, BP + 2*PADH)
        acc2 = jnp.zeros((C, BP), jnp.float32)
        for t in range(9):
            dy, dx = t // 3 - 1, t % 3 - 1
            d = dy * Wh + dx
            shifted = ppad[:, PADH + d:PADH + d + BP]          # (C, BP) static lane slice
            acc2 = acc2 + (shifted * mask[t:t + 1, :]) * w2[:, t:t + 1]
        out = jnp.sum(acc2, axis=0, keepdims=True)             # (1, BP): single XLU reduce
        o_ref[...] = jax.nn.sigmoid(out + b2_ref[0, 0])        # lane-dense store

    return kernel


def unet_forward(x, params, *, samples_per_step=2):
    """x: (N, 1, H, W) float32 NCHW. Returns (N, 1, H//2, W//2) float32."""
    w1, b1, w2, b2 = params["w1"], params["b1"], params["w2"], params["b2"]
    N, Cin, H, W = x.shape
    assert Cin == 1 and H % 2 == 0 and W % 2 == 0
    C = w1.shape[0]                                            # 64
    Hh, Wh = H // 2, W // 2
    Hp, Wp = H + 2, W + 2

    # Samples per grid step (keeps output lane-dense; falls back cleanly for small/odd N).
    B = max(1, min(samples_per_step, N))
    while N % B:
        B -= 1
    n_steps = N // B

    P = Hh * Wh               # pooled pixels per sample
    BP = B * P                # pooled pixels per step (output lane width, 128 for B=2)
    SAMP = Hp * Wp            # padded-flat pixels per sample
    L = B * SAMP              # padded-flat pixels per step
    LE = L + Wp               # extended so the H-pool partner row is a static slice
    max_off = 2 * Wp + 2      # largest conv1 tap offset
    LPAD = ((LE + max_off + 127) // 128) * 128
    PADH = Wh + 1             # conv2 lane halo

    # ---- input-side glue: zero-pad, flatten, concatenate B samples per lane-dense row ----
    xpad = jnp.pad(x[:, 0], ((0, 0), (1, 1), (1, 1)))                    # (N, Hp, Wp)
    xflat = xpad.reshape(n_steps, 1, L)
    xflat = jnp.pad(xflat, ((0, 0), (0, 0), (0, LPAD - L)))              # (n_steps, 1, LPAD)

    w1_mat = w1.reshape(C, 9).astype(jnp.float32)
    b1_col = b1.reshape(C, 1).astype(jnp.float32)
    w2_mat = w2.reshape(C, 9).astype(jnp.float32)
    b2_sc = b2.reshape(1, 1).astype(jnp.float32)

    # ---- constants hoisted out of the kernel (built once, constant index_map) ----
    # Pooling selection matrix: column j<BP selects the even W-column of pooled pixel j
    # from padded-flat conv column i; column BP+j selects the odd W-column.
    j = np.arange(BP)
    b_idx, p_idx = j // P, j % P
    hh, wh = p_idx // Wh, p_idx % Wh
    src_even = b_idx * SAMP + (2 * hh) * Wp + 2 * wh                     # (BP,)
    i = np.arange(L)[:, None]
    sel = np.concatenate(
        [(i == src_even[None, :]), (i == (src_even + 1)[None, :])],
        axis=1).astype(np.float32)                                       # (L, 2*BP)

    # conv2 zero-padding validity mask per tap (identical for every sample in the step).
    mask = np.zeros((9, BP), np.float32)
    for t in range(9):
        dy, dx = t // 3 - 1, t % 3 - 1
        mask[t] = ((hh + dy >= 0) & (hh + dy < Hh) &
                   (wh + dx >= 0) & (wh + dx < Wh)).astype(np.float32)

    kernel = _make_kernel(C, Wp, Wh, L, LE, BP, PADH)

    out = pl.pallas_call(
        kernel,
        out_shape=jax.ShapeDtypeStruct((n_steps, 1, BP), jnp.float32),
        grid=(n_steps,),
        in_specs=[
            pl.BlockSpec((None, 1, LPAD), lambda s: (s, 0, 0)),
            pl.BlockSpec((C, 9), lambda s: (0, 0)),
            pl.BlockSpec((C, 1), lambda s: (0, 0)),
            pl.BlockSpec((L, 2 * BP), lambda s: (0, 0)),
            pl.BlockSpec((C, 9), lambda s: (0, 0)),
            pl.BlockSpec((9, BP), lambda s: (0, 0)),
            pl.BlockSpec(memory_space=pltpu.MemorySpace.SMEM),
        ],
        out_specs=pl.BlockSpec((None, 1, BP), lambda s: (s, 0, 0)),
        compiler_params=pltpu.CompilerParams(dimension_semantics=("parallel",)),
    )(xflat, w1_mat, b1_col, jnp.asarray(sel), w2_mat, jnp.asarray(mask), b2_sc)

    # (n_steps, 1, B*P) -> (N, 1, Hh, Wh): step-row lanes are [sample-in-step, hh, wh].
    return out.reshape(N, 1, Hh, Wh)


# ------------------------- pure-JAX reference (for checking) -------------------
def unet_reference(x, params):
    w1, b1, w2, b2 = params["w1"], params["b1"], params["w2"], params["b2"]
    dn = ("NCHW", "OIHW", "NCHW")
    y = lax.conv_general_dilated(x, w1, (1, 1), ((1, 1), (1, 1)), dimension_numbers=dn)
    y = jnp.maximum(y + b1.reshape(1, -1, 1, 1), 0.0)
    y = lax.reduce_window(y, -jnp.inf, lax.max, (1, 1, 2, 2), (1, 1, 2, 2), "VALID")
    y = lax.conv_general_dilated(y, w2, (1, 1), ((1, 1), (1, 1)), dimension_numbers=dn)
    return jax.nn.sigmoid(y + b2.reshape(1, -1, 1, 1))


if __name__ == "__main__":
    key = jax.random.PRNGKey(0)
    k_x, k_w1, k_b1, k_w2, k_b2 = jax.random.split(key, 5)
    N, H, W, C = 4, 16, 16, 64

    x = jax.random.normal(k_x, (N, 1, H, W), jnp.float32)
    params = {
        "w1": 0.1 * jax.random.normal(k_w1, (C, 1, 3, 3), jnp.float32),   # Conv2d(1, 64, 3)
        "b1": 0.1 * jax.random.normal(k_b1, (C,), jnp.float32),
        "w2": 0.1 * jax.random.normal(k_w2, (1, C, 3, 3), jnp.float32),   # Conv2d(64, 1, 3)
        "b2": 0.1 * jax.random.normal(k_b2, (1,), jnp.float32),
    }

    fwd = jax.jit(unet_forward)
    out = jax.block_until_ready(fwd(x, params))
    ref = jax.block_until_ready(unet_reference(x, params))

    assert out.shape == (N, 1, H // 2, W // 2), out.shape
    max_err = float(jnp.max(jnp.abs(out - ref)))
    assert jnp.allclose(out, ref, atol=5e-5, rtol=5e-5), f"max abs err = {max_err}"
    print("KERNEL_OK")
</pallas_src>

<mosaic_0001>
module attributes {stable_mosaic.version = 11 : i64} {
  func.func @kernel(%arg0: i32, %arg1: memref<1x1x768xf32, #tpu.memory_space<vmem>>, %arg2: memref<64x9xf32, #tpu.memory_space<vmem>>, %arg3: memref<64x1xf32, #tpu.memory_space<vmem>>, %arg4: memref<648x256xf32, #tpu.memory_space<vmem>>, %arg5: memref<64x9xf32, #tpu.memory_space<vmem>>, %arg6: memref<9x128xf32, #tpu.memory_space<vmem>>, %arg7: memref<1x1xf32, #tpu.memory_space<smem>>, %arg8: memref<1x1x128xf32, #tpu.memory_space<vmem>>) attributes {dimension_semantics = [#tpu.dimension_semantics<parallel>], iteration_bounds = array<i64: 2>, scalar_prefetch = 0 : i64, scratch_operands = 0 : i64, tpu.core_type = #tpu.core_type<tc>, window_params = [{transform_indices = @transform_0, window_bounds = array<i64: 1, 1, 768>}, {pipeline_mode = #tpu.pipeline_mode<synchronous>, transform_indices = @transform_1, window_bounds = array<i64: 64, 9>}, {pipeline_mode = #tpu.pipeline_mode<synchronous>, transform_indices = @transform_2, window_bounds = array<i64: 64, 1>}, {pipeline_mode = #tpu.pipeline_mode<synchronous>, transform_indices = @transform_3, window_bounds = array<i64: 648, 256>}, {pipeline_mode = #tpu.pipeline_mode<synchronous>, transform_indices = @transform_4, window_bounds = array<i64: 64, 9>}, {pipeline_mode = #tpu.pipeline_mode<synchronous>, transform_indices = @transform_5, window_bounds = array<i64: 9, 128>}, {transform_indices = @transform_6, window_bounds = array<i64: 1, 1>}, {transform_indices = @transform_7, window_bounds = array<i64: 1, 1, 128>}]} {
    %c0 = arith.constant 0 : index
    %c0_0 = arith.constant 0 : index
    %c0_1 = arith.constant 0 : index
    %0 = vector.load %arg1[%c0, %c0_0, %c0_1] : memref<1x1x768xf32, #tpu.memory_space<vmem>>, vector<1x1x768xf32>
    %1 = vector.shape_cast %0 : vector<1x1x768xf32> to vector<1x768xf32>
    %c0_2 = arith.constant 0 : index
    %c0_3 = arith.constant 0 : index
    %2 = vector.load %arg2[%c0_2, %c0_3] : memref<64x9xf32, #tpu.memory_space<vmem>>, vector<64x9xf32>
    %3 = vector.extract_strided_slice %2 {offsets = [0, 0], sizes = [64, 1], strides = [1, 1]} : vector<64x9xf32> to vector<64x1xf32>
    %4 = vector.extract_strided_slice %1 {offsets = [0, 0], sizes = [1, 666], strides = [1, 1]} : vector<1x768xf32> to vector<1x666xf32>
    %5 = vector.broadcast %3 : vector<64x1xf32> to vector<64x666xf32>
    %6 = vector.broadcast %4 : vector<1x666xf32> to vector<64x666xf32>
    %7 = arith.mulf %5, %6 : vector<64x666xf32>
    %8 = vector.extract_strided_slice %2 {offsets = [0, 1], sizes = [64, 1], strides = [1, 1]} : vector<64x9xf32> to vector<64x1xf32>
    %9 = vector.extract_strided_slice %1 {offsets = [0, 1], sizes = [1, 666], strides = [1, 1]} : vector<1x768xf32> to vector<1x666xf32>
    %10 = vector.broadcast %8 : vector<64x1xf32> to vector<64x666xf32>
    %11 = vector.broadcast %9 : vector<1x666xf32> to vector<64x666xf32>
    %12 = arith.mulf %10, %11 : vector<64x666xf32>
    %13 = arith.addf %7, %12 : vector<64x666xf32>
    %14 = vector.extract_strided_slice %2 {offsets = [0, 2], sizes = [64, 1], strides = [1, 1]} : vector<64x9xf32> to vector<64x1xf32>
    %15 = vector.extract_strided_slice %1 {offsets = [0, 2], sizes = [1, 666], strides = [1, 1]} : vector<1x768xf32> to vector<1x666xf32>
    %16 = vector.broadcast %14 : vector<64x1xf32> to vector<64x666xf32>
    %17 = vector.broadcast %15 : vector<1x666xf32> to vector<64x666xf32>
    %18 = arith.mulf %16, %17 : vector<64x666xf32>
    %19 = arith.addf %13, %18 : vector<64x666xf32>
    %20 = vector.extract_strided_slice %2 {offsets = [0, 3], sizes = [64, 1], strides = [1, 1]} : vector<64x9xf32> to vector<64x1xf32>
    %21 = vector.extract_strided_slice %1 {offsets = [0, 18], sizes = [1, 666], strides = [1, 1]} : vector<1x768xf32> to vector<1x666xf32>
    %22 = vector.broadcast %20 : vector<64x1xf32> to vector<64x666xf32>
    %23 = vector.broadcast %21 : vector<1x666xf32> to vector<64x666xf32>
    %24 = arith.mulf %22, %23 : vector<64x666xf32>
    %25 = arith.addf %19, %24 : vector<64x666xf32>
    %26 = vector.extract_strided_slice %2 {offsets = [0, 4], sizes = [64, 1], strides = [1, 1]} : vector<64x9xf32> to vector<64x1xf32>
    %27 = vector.extract_strided_slice %1 {offsets = [0, 19], sizes = [1, 666], strides = [1, 1]} : vector<1x768xf32> to vector<1x666xf32>
    %28 = vector.broadcast %26 : vector<64x1xf32> to vector<64x666xf32>
    %29 = vector.broadcast %27 : vector<1x666xf32> to vector<64x666xf32>
    %30 = arith.mulf %28, %29 : vector<64x666xf32>
    %31 = arith.addf %25, %30 : vector<64x666xf32>
    %32 = vector.extract_strided_slice %2 {offsets = [0, 5], sizes = [64, 1], strides = [1, 1]} : vector<64x9xf32> to vector<64x1xf32>
    %33 = vector.extract_strided_slice %1 {offsets = [0, 20], sizes = [1, 666], strides = [1, 1]} : vector<1x768xf32> to vector<1x666xf32>
    %34 = vector.broadcast %32 : vector<64x1xf32> to vector<64x666xf32>
    %35 = vector.broadcast %33 : vector<1x666xf32> to vector<64x666xf32>
    %36 = arith.mulf %34, %35 : vector<64x666xf32>
    %37 = arith.addf %31, %36 : vector<64x666xf32>
    %38 = vector.extract_strided_slice %2 {offsets = [0, 6], sizes = [64, 1], strides = [1, 1]} : vector<64x9xf32> to vector<64x1xf32>
    %39 = vector.extract_strided_slice %1 {offsets = [0, 36], sizes = [1, 666], strides = [1, 1]} : vector<1x768xf32> to vector<1x666xf32>
    %40 = vector.broadcast %38 : vector<64x1xf32> to vector<64x666xf32>
    %41 = vector.broadcast %39 : vector<1x666xf32> to vector<64x666xf32>
    %42 = arith.mulf %40, %41 : vector<64x666xf32>
    %43 = arith.addf %37, %42 : vector<64x666xf32>
    %44 = vector.extract_strided_slice %2 {offsets = [0, 7], sizes = [64, 1], strides = [1, 1]} : vector<64x9xf32> to vector<64x1xf32>
    %45 = vector.extract_strided_slice %1 {offsets = [0, 37], sizes = [1, 666], strides = [1, 1]} : vector<1x768xf32> to vector<1x666xf32>
    %46 = vector.broadcast %44 : vector<64x1xf32> to vector<64x666xf32>
    %47 = vector.broadcast %45 : vector<1x666xf32> to vector<64x666xf32>
    %48 = arith.mulf %46, %47 : vector<64x666xf32>
    %49 = arith.addf %43, %48 : vector<64x666xf32>
    %50 = vector.extract_strided_slice %2 {offsets = [0, 8], sizes = [64, 1], strides = [1, 1]} : vector<64x9xf32> to vector<64x1xf32>
    %51 = vector.extract_strided_slice %1 {offsets = [0, 38], sizes = [1, 666], strides = [1, 1]} : vector<1x768xf32> to vector<1x666xf32>
    %52 = vector.broadcast %50 : vector<64x1xf32> to vector<64x666xf32>
    %53 = vector.broadcast %51 : vector<1x666xf32> to vector<64x666xf32>
    %54 = arith.mulf %52, %53 : vector<64x666xf32>
    %55 = arith.addf %49, %54 : vector<64x666xf32>
    %c0_4 = arith.constant 0 : index
    %c0_5 = arith.constant 0 : index
    %56 = vector.load %arg3[%c0_4, %c0_5] : memref<64x1xf32, #tpu.memory_space<vmem>>, vector<64x1xf32>
    %57 = vector.broadcast %56 : vector<64x1xf32> to vector<64x666xf32>
    %58 = arith.addf %55, %57 : vector<64x666xf32>
    %cst = arith.constant 0.000000e+00 : f32
    %59 = vector.broadcast %cst : f32 to vector<64x666xf32>
    %60 = arith.maximumf %58, %59 : vector<64x666xf32>
    %61 = vector.extract_strided_slice %60 {offsets = [0, 0], sizes = [64, 648], strides = [1, 1]} : vector<64x666xf32> to vector<64x648xf32>
    %62 = vector.extract_strided_slice %60 {offsets = [0, 18], sizes = [64, 648], strides = [1, 1]} : vector<64x666xf32> to vector<64x648xf32>
    %63 = arith.maximumf %61, %62 : vector<64x648xf32>
    %c0_6 = arith.constant 0 : index
    %c0_7 = arith.constant 0 : index
    %64 = vector.load %arg4[%c0_6, %c0_7] : memref<648x256xf32, #tpu.memory_space<vmem>>, vector<648x256xf32>
    %cst_8 = arith.constant dense<0.000000e+00> : vector<64x256xf32>
    %65 = tpu.matmul %63, %64, %cst_8 {dimension_numbers = #tpu.dot_dimension_numbers<[1], [0], [0], [1], [0, 0, 1, 1], [], []>} : vector<64x648xf32>, vector<648x256xf32>, vector<64x256xf32> -> vector<64x256xf32>
    %66 = vector.extract_strided_slice %65 {offsets = [0, 0], sizes = [64, 128], strides = [1, 1]} : vector<64x256xf32> to vector<64x128xf32>
    %67 = vector.extract_strided_slice %65 {offsets = [0, 128], sizes = [64, 128], strides = [1, 1]} : vector<64x256xf32> to vector<64x128xf32>
    %68 = arith.maximumf %66, %67 : vector<64x128xf32>
    %c0_9 = arith.constant 0 : index
    %c0_10 = arith.constant 0 : index
    %69 = vector.load %arg5[%c0_9, %c0_10] : memref<64x9xf32, #tpu.memory_space<vmem>>, vector<64x9xf32>
    %c0_11 = arith.constant 0 : index
    %c0_12 = arith.constant 0 : index
    %70 = vector.load %arg6[%c0_11, %c0_12] : memref<9x128xf32, #tpu.memory_space<vmem>>, vector<9x128xf32>
    %cst_13 = arith.constant 0.000000e+00 : f32
    %71 = vector.broadcast %cst_13 : f32 to vector<64x9xf32>
    %72 = tpu.concatenate %71, %68, %71 in 1 : vector<64x9xf32>, vector<64x128xf32>, vector<64x9xf32> -> vector<64x146xf32>
    %cst_14 = arith.constant 0.000000e+00 : f32
    %73 = vector.broadcast %cst_14 : f32 to vector<64x128xf32>
    %74 = vector.extract_strided_slice %72 {offsets = [0, 0], sizes = [64, 128], strides = [1, 1]} : vector<64x146xf32> to vector<64x128xf32>
    %75 = vector.extract_strided_slice %70 {offsets = [0, 0], sizes = [1, 128], strides = [1, 1]} : vector<9x128xf32> to vector<1x128xf32>
    %76 = vector.broadcast %75 : vector<1x128xf32> to vector<64x128xf32>
    %77 = arith.mulf %74, %76 : vector<64x128xf32>
    %78 = vector.extract_strided_slice %69 {offsets = [0, 0], sizes = [64, 1], strides = [1, 1]} : vector<64x9xf32> to vector<64x1xf32>
    %79 = vector.broadcast %78 : vector<64x1xf32> to vector<64x128xf32>
    %80 = arith.mulf %77, %79 : vector<64x128xf32>
    %81 = arith.addf %73, %80 : vector<64x128xf32>
    %82 = vector.extract_strided_slice %72 {offsets = [0, 1], sizes = [64, 128], strides = [1, 1]} : vector<64x146xf32> to vector<64x128xf32>
    %83 = vector.extract_strided_slice %70 {offsets = [1, 0], sizes = [1, 128], strides = [1, 1]} : vector<9x128xf32> to vector<1x128xf32>
    %84 = vector.broadcast %83 : vector<1x128xf32> to vector<64x128xf32>
    %85 = arith.mulf %82, %84 : vector<64x128xf32>
    %86 = vector.extract_strided_slice %69 {offsets = [0, 1], sizes = [64, 1], strides = [1, 1]} : vector<64x9xf32> to vector<64x1xf32>
    %87 = vector.broadcast %86 : vector<64x1xf32> to vector<64x128xf32>
    %88 = arith.mulf %85, %87 : vector<64x128xf32>
    %89 = arith.addf %81, %88 : vector<64x128xf32>
    %90 = vector.extract_strided_slice %72 {offsets = [0, 2], sizes = [64, 128], strides = [1, 1]} : vector<64x146xf32> to vector<64x128xf32>
    %91 = vector.extract_strided_slice %70 {offsets = [2, 0], sizes = [1, 128], strides = [1, 1]} : vector<9x128xf32> to vector<1x128xf32>
    %92 = vector.broadcast %91 : vector<1x128xf32> to vector<64x128xf32>
    %93 = arith.mulf %90, %92 : vector<64x128xf32>
    %94 = vector.extract_strided_slice %69 {offsets = [0, 2], sizes = [64, 1], strides = [1, 1]} : vector<64x9xf32> to vector<64x1xf32>
    %95 = vector.broadcast %94 : vector<64x1xf32> to vector<64x128xf32>
    %96 = arith.mulf %93, %95 : vector<64x128xf32>
    %97 = arith.addf %89, %96 : vector<64x128xf32>
    %98 = vector.extract_strided_slice %72 {offsets = [0, 8], sizes = [64, 128], strides = [1, 1]} : vector<64x146xf32> to vector<64x128xf32>
    %99 = vector.extract_strided_slice %70 {offsets = [3, 0], sizes = [1, 128], strides = [1, 1]} : vector<9x128xf32> to vector<1x128xf32>
    %100 = vector.broadcast %99 : vector<1x128xf32> to vector<64x128xf32>
    %101 = arith.mulf %98, %100 : vector<64x128xf32>
    %102 = vector.extract_strided_slice %69 {offsets = [0, 3], sizes = [64, 1], strides = [1, 1]} : vector<64x9xf32> to vector<64x1xf32>
    %103 = vector.broadcast %102 : vector<64x1xf32> to vector<64x128xf32>
    %104 = arith.mulf %101, %103 : vector<64x128xf32>
    %105 = arith.addf %97, %104 : vector<64x128xf32>
    %106 = vector.extract_strided_slice %72 {offsets = [0, 9], sizes = [64, 128], strides = [1, 1]} : vector<64x146xf32> to vector<64x128xf32>
    %107 = vector.extract_strided_slice %70 {offsets = [4, 0], sizes = [1, 128], strides = [1, 1]} : vector<9x128xf32> to vector<1x128xf32>
    %108 = vector.broadcast %107 : vector<1x128xf32> to vector<64x128xf32>
    %109 = arith.mulf %106, %108 : vector<64x128xf32>
    %110 = vector.extract_strided_slice %69 {offsets = [0, 4], sizes = [64, 1], strides = [1, 1]} : vector<64x9xf32> to vector<64x1xf32>
    %111 = vector.broadcast %110 : vector<64x1xf32> to vector<64x128xf32>
    %112 = arith.mulf %109, %111 : vector<64x128xf32>
    %113 = arith.addf %105, %112 : vector<64x128xf32>
    %114 = vector.extract_strided_slice %72 {offsets = [0, 10], sizes = [64, 128], strides = [1, 1]} : vector<64x146xf32> to vector<64x128xf32>
    %115 = vector.extract_strided_slice %70 {offsets = [5, 0], sizes = [1, 128], strides = [1, 1]} : vector<9x128xf32> to vector<1x128xf32>
    %116 = vector.broadcast %115 : vector<1x128xf32> to vector<64x128xf32>
    %117 = arith.mulf %114, %116 : vector<64x128xf32>
    %118 = vector.extract_strided_slice %69 {offsets = [0, 5], sizes = [64, 1], strides = [1, 1]} : vector<64x9xf32> to vector<64x1xf32>
    %119 = vector.broadcast %118 : vector<64x1xf32> to vector<64x128xf32>
    %120 = arith.mulf %117, %119 : vector<64x128xf32>
    %121 = arith.addf %113, %120 : vector<64x128xf32>
    %122 = vector.extract_strided_slice %72 {offsets = [0, 16], sizes = [64, 128], strides = [1, 1]} : vector<64x146xf32> to vector<64x128xf32>
    %123 = vector.extract_strided_slice %70 {offsets = [6, 0], sizes = [1, 128], strides = [1, 1]} : vector<9x128xf32> to vector<1x128xf32>
    %124 = vector.broadcast %123 : vector<1x128xf32> to vector<64x128xf32>
    %125 = arith.mulf %122, %124 : vector<64x128xf32>
    %126 = vector.extract_strided_slice %69 {offsets = [0, 6], sizes = [64, 1], strides = [1, 1]} : vector<64x9xf32> to vector<64x1xf32>
    %127 = vector.broadcast %126 : vector<64x1xf32> to vector<64x128xf32>
    %128 = arith.mulf %125, %127 : vector<64x128xf32>
    %129 = arith.addf %121, %128 : vector<64x128xf32>
    %130 = vector.extract_strided_slice %72 {offsets = [0, 17], sizes = [64, 128], strides = [1, 1]} : vector<64x146xf32> to vector<64x128xf32>
    %131 = vector.extract_strided_slice %70 {offsets = [7, 0], sizes = [1, 128], strides = [1, 1]} : vector<9x128xf32> to vector<1x128xf32>
    %132 = vector.broadcast %131 : vector<1x128xf32> to vector<64x128xf32>
    %133 = arith.mulf %130, %132 : vector<64x128xf32>
    %134 = vector.extract_strided_slice %69 {offsets = [0, 7], sizes = [64, 1], strides = [1, 1]} : vector<64x9xf32> to vector<64x1xf32>
    %135 = vector.broadcast %134 : vector<64x1xf32> to vector<64x128xf32>
    %136 = arith.mulf %133, %135 : vector<64x128xf32>
    %137 = arith.addf %129, %136 : vector<64x128xf32>
    %138 = vector.extract_strided_slice %72 {offsets = [0, 18], sizes = [64, 128], strides = [1, 1]} : vector<64x146xf32> to vector<64x128xf32>
    %139 = vector.extract_strided_slice %70 {offsets = [8, 0], sizes = [1, 128], strides = [1, 1]} : vector<9x128xf32> to vector<1x128xf32>
    %140 = vector.broadcast %139 : vector<1x128xf32> to vector<64x128xf32>
    %141 = arith.mulf %138, %140 : vector<64x128xf32>
    %142 = vector.extract_strided_slice %69 {offsets = [0, 8], sizes = [64, 1], strides = [1, 1]} : vector<64x9xf32> to vector<64x1xf32>
    %143 = vector.broadcast %142 : vector<64x1xf32> to vector<64x128xf32>
    %144 = arith.mulf %141, %143 : vector<64x128xf32>
    %145 = arith.addf %137, %144 : vector<64x128xf32>
    %cst_15 = arith.constant dense<0.000000e+00> : vector<128xf32>
    %146 = vector.multi_reduction <add>, %145, %cst_15 [0] : vector<64x128xf32> to vector<128xf32>
    %147 = vector.shape_cast %146 : vector<128xf32> to vector<1x128xf32>
    %c0_16 = arith.constant 0 : index
    %c0_17 = arith.constant 0 : index
    %148 = memref.load %arg7[%c0_16, %c0_17] : memref<1x1xf32, #tpu.memory_space<smem>>
    %149 = vector.broadcast %148 : f32 to vector<1x128xf32>
    %150 = arith.addf %147, %149 : vector<1x128xf32>
    %151 = arith.negf %150 : vector<1x128xf32>
    %152 = math.exp %151 : vector<1x128xf32>
    %cst_18 = arith.constant 1.000000e+00 : f32
    %153 = vector.broadcast %cst_18 : f32 to vector<1x128xf32>
    %154 = arith.addf %153, %152 : vector<1x128xf32>
    %155 = arith.divf %153, %154 : vector<1x128xf32>
    %c0_19 = arith.constant 0 : index
    %c0_20 = arith.constant 0 : index
    %c0_21 = arith.constant 0 : index
    %156 = vector.load %arg8[%c0_19, %c0_20, %c0_21] : memref<1x1x128xf32, #tpu.memory_space<vmem>>, vector<1x1x128xf32>
    %157 = vector.shape_cast %156 : vector<1x1x128xf32> to vector<1x128xf32>
    %158 = vector.shape_cast %155 : vector<1x128xf32> to vector<1x1x128xf32>
    tpu.vector_store %arg8[%c0_19, %c0_20, %c0_21], %158 {strides = array<i32>} : memref<1x1x128xf32, #tpu.memory_space<vmem>>, vector<1x1x128xf32>,
    return
  }
  func.func @transform_0(%arg0: i32) -> (i32, i32, i32) {
    %c0_i32 = arith.constant 0 : i32
    %c0_i32_0 = arith.constant 0 : i32
    %c0_i32_1 = arith.constant 0 : i32
    return %arg0, %c0_i32, %c0_i32_0 : i32, i32, i32
  }
  func.func @transform_1(%arg0: i32) -> (i32, i32) {
    %c0_i32 = arith.constant 0 : i32
    %c0_i32_0 = arith.constant 0 : i32
    %c0_i32_1 = arith.constant 0 : i32
    return %c0_i32, %c0_i32_0 : i32, i32
  }
  func.func @transform_2(%arg0: i32) -> (i32, i32) {
    %c0_i32 = arith.constant 0 : i32
    %c0_i32_0 = arith.constant 0 : i32
    %c0_i32_1 = arith.constant 0 : i32
    return %c0_i32, %c0_i32_0 : i32, i32
  }
  func.func @transform_3(%arg0: i32) -> (i32, i32) {
    %c0_i32 = arith.constant 0 : i32
    %c0_i32_0 = arith.constant 0 : i32
    %c0_i32_1 = arith.constant 0 : i32
    return %c0_i32, %c0_i32_0 : i32, i32
  }
  func.func @transform_4(%arg0: i32) -> (i32, i32) {
    %c0_i32 = arith.constant 0 : i32
    %c0_i32_0 = arith.constant 0 : i32
    %c0_i32_1 = arith.constant 0 : i32
    return %c0_i32, %c0_i32_0 : i32, i32
  }
  func.func @transform_5(%arg0: i32) -> (i32, i32) {
    %c0_i32 = arith.constant 0 : i32
    %c0_i32_0 = arith.constant 0 : i32
    %c0_i32_1 = arith.constant 0 : i32
    return %c0_i32, %c0_i32_0 : i32, i32
  }
  func.func @transform_6(%arg0: i32) -> (i32, i32) {
    %c0_i32 = arith.constant 0 : i32
    %c0_i32_0 = arith.constant 0 : i32
    %c0_i32_1 = arith.constant 0 : i32
    return %c0_i32, %c0_i32_0 : i32, i32
  }
  func.func @transform_7(%arg0: i32) -> (i32, i32, i32) {
    %c0_i32 = arith.constant 0 : i32
    %c0_i32_0 = arith.constant 0 : i32
    %c0_i32_1 = arith.constant 0 : i32
    return %arg0, %c0_i32, %c0_i32_0 : i32, i32, i32
  }
}

</mosaic_0001>

<llo_original>
// kernel: unet_forward.1
$region0: #{unet_forward.1}
  #allocation0 [shape = 'u32[]', space=smem, size = 0x4, offset = 0x4, fixed_abs, tag = 'smem constant byte address 0x4 - core index']
  #allocation1 [shape = 'u32[144,128]{1,0:T(1,128)}', space=vmem, size = 0x12000, scoped, tag = 'internal scratch']
  #allocation2 [shape = 'f32[1,1]{1,0:T(1,128)S(6)}', space=smem, size = 0x200, scoped, tag = 'scoped memory for unet_forward.1']
  %s0 = inlined_call_operand.vmem [shape: f32[2,1,768], index: 0, kind: input, shape index: {}]
  %s1 = inlined_call_operand.vmem [shape: f32[64,9], index: 1, kind: input, shape index: {}]
  %s2 = inlined_call_operand.vmem [shape: f32[64,1], index: 2, kind: input, shape index: {}]
  %s3 = inlined_call_operand.hbm [shape: f32[648,256], index: 3, kind: input, shape index: {}]
  %s4 = inlined_call_operand.vmem [shape: f32[64,9], index: 4, kind: input, shape index: {}]
  %s5 = inlined_call_operand.vmem [shape: f32[9,128], index: 5, kind: input, shape index: {}]
  %s6 = inlined_call_operand.<no memory space> [shape: f32[1,1], index: 6, kind: input, shape index: {}]
  %s7 = inlined_call_operand.vmem [shape: f32[2,1,128], index: 7, kind: output, shape index: {}]
  %s8 = sld [smem:[#allocation0]]
  $region65: #{unet_forward.1} parent=0
    _
  %s10 = ssub.s32 1, %s8
  %s11 = scalar_select 0, %s10, %s8
  %12 = sst [smem:[#allocation2]] %s6
  $region1: #{unet_forward.1} parent=0
    #allocation3 [shape = 'u8[663552]{0}', space=vmem, size = 0xa2000, scoped, tag = 'input window, operand 3, single buffered']
    #allocation4 [shape = 's32[2]{0}', space=sflag, size = 0x8, scoped, tag = 'scoped memory for unet_forward.1']
    %13 = vsyncpa [#allocation4], 0
    loop: start=0, step=1, limit=4
    $region2: #{unet_forward.1} parent=1 // loop_pre_header
      _
    $region3: #{unet_forward.1} parent=1 // loop_header
      %s15 = sphi 0, %s19
      %p16 = scmp.ge.s32.totalorder %s15, 4
      %s25 = sphi 0, %s27
      %s28 = sphi 0, %s25
      %s29 = sphi 0, %s28
      %s45 = sphi 0, %s29
      %s49 = sphi 0, %s49
      %s51 = sphi 0, %s49
      %s52 = sphi 0, %s51
      %s66 = sphi 0, %s52
      %s70 = sphi 0, %s70
      %s72 = sphi 0, %s70
      %s73 = sphi 0, %s72
      %s87 = sphi 0, %s73
      %s91 = sphi 0, %s91
      %s93 = sphi 0, %s91
      %s94 = sphi 0, %s93
      %s108 = sphi 0, %s94
      %s112 = sphi 0, %s112
      %s114 = sphi 0, %s112
      %s115 = sphi 0, %s114
      %s129 = sphi 0, %s115
      %s133 = sphi 0, %s133
      %s135 = sphi 0, %s133
      %s136 = sphi 0, %s135
      %s150 = sphi 0, %s136
      %s154 = sphi 0, %s154
      %s156 = sphi 0, %s154
      %s157 = sphi 0, %s156
      %s171 = sphi 0, %s157
      %s177 = sphi 0, %s179
      %s180 = sphi 0, %s177
      %s181 = sphi 0, %s180
      %s197 = sphi 0, %s181
    $region4: #{unet_forward.1} parent=1 // loop_header_branch
      %18 = sbr.rel (%p16) target = $region8
    $region5: #{unet_forward.1} parent=1 // loop_body
      %s20 = ssub.s32 %s15, 1
      %s21 = ssub.s32 %s15, 2
      %s22 = sadd.s32 %s15, 1
      %s23 = ssub.s32 %s15, %s22
      %p24 = scmp.eq.s32.totalorder %s23, 0
      %s26 = sadd.s32 %s25, 1
      %s27 = scalar_select %p24, %s25, %s26
      %p30 = pneg %p24
      %p31 = scmp.eq.s32.totalorder %s15, 1
      %p32 = por %p30, %p31
      %p33 = scmp.ne.s32.totalorder %s25, %s28
      %p34 = scmp.eq.s32.totalorder %s15, 0
      %p35 = por %p33, %p34
      %p36 = scmp.ne.s32.totalorder %s25, %s28
      %p37 = scmp.eq.s32.totalorder %s20, 1
      %p38 = por %p36, %p37
      %p39 = scmp.ne.s32.totalorder %s28, %s29
      %p40 = scmp.eq.s32.totalorder %s20, 0
      %p41 = por %p39, %p40
      %p42 = scmp.ne.s32.totalorder %s28, %s29
      %p43 = scmp.eq.s32.totalorder %s21, 1
      %p44 = por %p42, %p43
      %p46 = scmp.ne.s32.totalorder %s29, %s45
      %p47 = scmp.eq.s32.totalorder %s21, 0
      %p48 = por %p46, %p47
      %s50 = sadd.s32 %s49, 1
      %p53 = scmp.eq.s32.totalorder %s15, 1
      %p54 = scmp.ne.s32.totalorder %s49, %s51
      %p55 = scmp.eq.s32.totalorder %s15, 0
      %p56 = por %p54, %p55
      %p57 = scmp.ne.s32.totalorder %s49, %s51
      %p58 = scmp.eq.s32.totalorder %s20, 1
      %p59 = por %p57, %p58
      %p60 = scmp.ne.s32.totalorder %s51, %s52
      %p61 = scmp.eq.s32.totalorder %s20, 0
      %p62 = por %p60, %p61
      %p63 = scmp.ne.s32.totalorder %s51, %s52
      %p64 = scmp.eq.s32.totalorder %s21, 1
      %p65 = por %p63, %p64
      %p67 = scmp.ne.s32.totalorder %s52, %s66
      %p68 = scmp.eq.s32.totalorder %s21, 0
      %p69 = por %p67, %p68
      %s71 = sadd.s32 %s70, 1
      %p74 = scmp.eq.s32.totalorder %s15, 1
      %p75 = scmp.ne.s32.totalorder %s70, %s72
      %p76 = scmp.eq.s32.totalorder %s15, 0
      %p77 = por %p75, %p76
      %p78 = scmp.ne.s32.totalorder %s70, %s72
      %p79 = scmp.eq.s32.totalorder %s20, 1
      %p80 = por %p78, %p79
      %p81 = scmp.ne.s32.totalorder %s72, %s73
      %p82 = scmp.eq.s32.totalorder %s20, 0
      %p83 = por %p81, %p82
      %p84 = scmp.ne.s32.totalorder %s72, %s73
      %p85 = scmp.eq.s32.totalorder %s21, 1
      %p86 = por %p84, %p85
      %p88 = scmp.ne.s32.totalorder %s73, %s87
      %p89 = scmp.eq.s32.totalorder %s21, 0
      %p90 = por %p88, %p89
      %s92 = sadd.s32 %s91, 1
      %p95 = scmp.eq.s32.totalorder %s15, 1
      %p96 = scmp.ne.s32.totalorder %s91, %s93
      %p97 = scmp.eq.s32.totalorder %s15, 0
      %p98 = por %p96, %p97
      %p99 = scmp.ne.s32.totalorder %s91, %s93
      %p100 = scmp.eq.s32.totalorder %s20, 1
      %p101 = por %p99, %p100
      %p102 = scmp.ne.s32.totalorder %s93, %s94
      %p103 = scmp.eq.s32.totalorder %s20, 0
      %p104 = por %p102, %p103
      %p105 = scmp.ne.s32.totalorder %s93, %s94
      %p106 = scmp.eq.s32.totalorder %s21, 1
      %p107 = por %p105, %p106
      %p109 = scmp.ne.s32.totalorder %s94, %s108
      %p110 = scmp.eq.s32.totalorder %s21, 0
      %p111 = por %p109, %p110
      %s113 = sadd.s32 %s112, 1
      %p116 = scmp.eq.s32.totalorder %s15, 1
      %p117 = scmp.ne.s32.totalorder %s112, %s114
      %p118 = scmp.eq.s32.totalorder %s15, 0
      %p119 = por %p117, %p118
      %p120 = scmp.ne.s32.totalorder %s112, %s114
      %p121 = scmp.eq.s32.totalorder %s20, 1
      %p122 = por %p120, %p121
      %p123 = scmp.ne.s32.totalorder %s114, %s115
      %p124 = scmp.eq.s32.totalorder %s20, 0
      %p125 = por %p123, %p124
      %p126 = scmp.ne.s32.totalorder %s114, %s115
      %p127 = scmp.eq.s32.totalorder %s21, 1
      %p128 = por %p126, %p127
      %p130 = scmp.ne.s32.totalorder %s115, %s129
      %p131 = scmp.eq.s32.totalorder %s21, 0
      %p132 = por %p130, %p131
      %s134 = sadd.s32 %s133, 1
      %p137 = scmp.eq.s32.totalorder %s15, 1
      %p138 = scmp.ne.s32.totalorder %s133, %s135
      %p139 = scmp.eq.s32.totalorder %s15, 0
      %p140 = por %p138, %p139
      %p141 = scmp.ne.s32.totalorder %s133, %s135
      %p142 = scmp.eq.s32.totalorder %s20, 1
      %p143 = por %p141, %p142
      %p144 = scmp.ne.s32.totalorder %s135, %s136
      %p145 = scmp.eq.s32.totalorder %s20, 0
      %p146 = por %p144, %p145
      %p147 = scmp.ne.s32.totalorder %s135, %s136
      %p148 = scmp.eq.s32.totalorder %s21, 1
      %p149 = por %p147, %p148
      %p151 = scmp.ne.s32.totalorder %s136, %s150
      %p152 = scmp.eq.s32.totalorder %s21, 0
      %p153 = por %p151, %p152
      %s155 = sadd.s32 %s154, 1
      %p158 = scmp.eq.s32.totalorder %s15, 1
      %p159 = scmp.ne.s32.totalorder %s154, %s156
      %p160 = scmp.eq.s32.totalorder %s15, 0
      %p161 = por %p159, %p160
      %p162 = scmp.ne.s32.totalorder %s154, %s156
      %p163 = scmp.eq.s32.totalorder %s20, 1
      %p164 = por %p162, %p163
      %p165 = scmp.ne.s32.totalorder %s156, %s157
      %p166 = scmp.eq.s32.totalorder %s20, 0
      %p167 = por %p165, %p166
      %p168 = scmp.ne.s32.totalorder %s156, %s157
      %p169 = scmp.eq.s32.totalorder %s21, 1
      %p170 = por %p168, %p169
      %p172 = scmp.ne.s32.totalorder %s157, %s171
      %p173 = scmp.eq.s32.totalorder %s21, 0
      %p174 = por %p172, %p173
      %s175 = ssub.s32 %s15, %s22
      %p176 = scmp.eq.s32.totalorder %s175, 0
      %s178 = sadd.s32 %s177, 1
      %s179 = scalar_select %p176, %s177, %s178
      %p182 = pneg %p176
      %p183 = scmp.eq.s32.totalorder %s15, 1
      %p184 = por %p182, %p183
      %p185 = scmp.ne.s32.totalorder %s177, %s180
      %p186 = scmp.eq.s32.totalorder %s15, 0
      %p187 = por %p185, %p186
      %p188 = scmp.ne.s32.totalorder %s177, %s180
      %p189 = scmp.eq.s32.totalorder %s20, 1
      %p190 = por %p188, %p189
      %p191 = scmp.ne.s32.totalorder %s180, %s181
      %p192 = scmp.eq.s32.totalorder %s20, 0
      %p193 = por %p191, %p192
      %p194 = scmp.ne.s32.totalorder %s180, %s181
      %p195 = scmp.eq.s32.totalorder %s21, 1
      %p196 = por %p194, %p195
      %p198 = scmp.ne.s32.totalorder %s181, %s197
      %p199 = scmp.eq.s32.totalorder %s21, 0
      %p200 = por %p198, %p199
      %p201 = scmp.le.s32.totalorder 1, %s15
      %p202 = scmp.lt.s32.totalorder %s15, 3
      %p203 = pnand %p201, %p202
      %p204 = pneg %p203
      // Predicated region
      $region9: #{unet_forward.1} parent=5 // pred_check
        _
      $region10: #{unet_forward.1} parent=5 // pred_check_branch
        %206 = sbr.rel (%p203) target = $region12
      $region11: #{unet_forward.1} parent=5 // pred_region
        %s207 = ssub.s32 %s15, 1
        // Predicated region
        $region13: #{unet_forward.1} parent=11 // pred_check
          %p208 = pneg %p62
        $region14: #{unet_forward.1} parent=11 // pred_check_branch
          %210 = sbr.rel (%p208) target = $region16
        $region15: #{unet_forward.1} parent=11 // pred_region
          _
        $region16: #{unet_forward.1} parent=11 // pred_fallthru
          _
        // Predicated region
        $region17: #{unet_forward.1} parent=11 // pred_check
          %p211 = pneg %p83
        $region18: #{unet_forward.1} parent=11 // pred_check_branch
          %213 = sbr.rel (%p211) target = $region20
        $region19: #{unet_forward.1} parent=11 // pred_region
          _
        $region20: #{unet_forward.1} parent=11 // pred_fallthru
          _
        // Predicated region
        $region21: #{unet_forward.1} parent=11 // pred_check
          %p214 = pneg %p104
        $region22: #{unet_forward.1} parent=11 // pred_check_branch
          %216 = sbr.rel (%p214) target = $region24
        $region23: #{unet_forward.1} parent=11 // pred_region
          %s218 = ssub.s32 20736, 20736
          %219 = vsyncadd [#allocation4], %s218
          %s220 = sshll.u32 [#allocation3], 4
          %s221 = int_to_ptr.vmem [resolvable:$true] %s220
          %226 = dma.hbm_to_vmem [thread:$0]  %s3, 20736, %s221, [#allocation4], 256, 256, 16
        $region24: #{unet_forward.1} parent=11 // pred_fallthru
          _
        // Predicated region
        $region25: #{unet_forward.1} parent=11 // pred_check
          %p227 = pneg %p125
        $region26: #{unet_forward.1} parent=11 // pred_check_branch
          %229 = sbr.rel (%p227) target = $region28
        $region27: #{unet_forward.1} parent=11 // pred_region
          _
        $region28: #{unet_forward.1} parent=11 // pred_fallthru
          _
        // Predicated region
        $region29: #{unet_forward.1} parent=11 // pred_check
          %p230 = pneg %p146
        $region30: #{unet_forward.1} parent=11 // pred_check_branch
          %232 = sbr.rel (%p230) target = $region32
        $region31: #{unet_forward.1} parent=11 // pred_region
          _
        $region32: #{unet_forward.1} parent=11 // pred_fallthru
          _
        // Predicated region
        $region33: #{unet_forward.1} parent=11 // pred_check
          %p233 = pneg %p167
        $region34: #{unet_forward.1} parent=11 // pred_check_branch
          %235 = sbr.rel (%p233) target = $region36
        $region35: #{unet_forward.1} parent=11 // pred_region
          _
        $region36: #{unet_forward.1} parent=11 // pred_fallthru
          _
      $region12: #{unet_forward.1} parent=5 // pred_fallthru
        _
      %p236 = scmp.lt.s32.totalorder %s15, 2
      // Predicated region
      $region37: #{unet_forward.1} parent=5 // pred_check
        %p237 = pneg %p236
      $region38: #{unet_forward.1} parent=5 // pred_check_branch
        %239 = sbr.rel (%p237) target = $region40
      $region39: #{unet_forward.1} parent=5 // pred_region
        // Predicated region
        $region41: #{unet_forward.1} parent=39 // pred_check
          %p240 = pneg %p35
        $region42: #{unet_forward.1} parent=39 // pred_check_branch
          %242 = sbr.rel (%p240) target = $region44
        $region43: #{unet_forward.1} parent=39 // pred_region
          %p243 = scmp.lt.s32.totalorder %s15, 1
          %s244 = scalar_select %p243, %s15, 1
          %s245 = smul.addr %s244, 6
          %s246 = scalar_lea.vmem %s0, %s245
        $region44: #{unet_forward.1} parent=39 // pred_fallthru
          _
      $region40: #{unet_forward.1} parent=5 // pred_fallthru
        _
      %p247 = scmp.le.s32.totalorder 1, %s15
      %p248 = scmp.lt.s32.totalorder %s15, 3
      %p249 = pnand %p247, %p248
      %p250 = pneg %p249
      // Predicated region
      $region45: #{unet_forward.1} parent=5 // pred_check
        _
      $region46: #{unet_forward.1} parent=5 // pred_check_branch
        %252 = sbr.rel (%p249) target = $region48
      $region47: #{unet_forward.1} parent=5 // pred_region
        %s253 = ssub.s32 %s15, 1
        // Predicated region
        $region49: #{unet_forward.1} parent=47 // pred_check
          %p254 = pneg %p104
        $region50: #{unet_forward.1} parent=47 // pred_check_branch
          %256 = sbr.rel (%p254) target = $region52
        $region51: #{unet_forward.1} parent=47 // pred_region
          %257 = dma.done [#allocation4], 20736
        $region52: #{unet_forward.1} parent=47 // pred_fallthru
          _
        %p258 = scmp.lt.s32.totalorder %s20, 1
        %s259 = scalar_select %p258, %s20, 1
        %s260 = smul.addr %s259, 6
        %s261 = scalar_lea.vmem %s0, %s260
        %p262 = pneg %p41
        %p263 = pneg %p38
        %p264 = pneg %p62
        %p265 = pneg %p59
        %p266 = pneg %p83
        %p267 = pneg %p80
        %p268 = pneg %p104
        %p269 = pneg %p101
        %p270 = pneg %p125
        %p271 = pneg %p122
        %p272 = pneg %p146
        %p273 = pneg %p143
        %p274 = pneg %p167
        %p275 = pneg %p164
        %p276 = pneg %p193
        %p277 = pneg %p190
        %p278 = scmp.lt.s32.totalorder %s20, 1
        %s279 = scalar_select %p278, %s20, 1
        %s280 = scalar_lea.vmem %s7, %s279
        %p281 = scmp.lt.s32.totalorder %s20, 1
        %s282 = scalar_select %p281, %s20, 1
        %s283 = smul.addr %s282, 6
        %s284 = scalar_lea.vmem %s0, %s283
        %p285 = scmp.lt.s32.totalorder %s20, 1
        %s286 = scalar_select %p285, %s20, 1
        %s287 = scalar_lea.vmem %s7, %s286
        %v288 = vld [vmem:[%s284] sm:$0x3f]
        %v289 = vld [vmem:[%s1] sm:$0xff]
        %v290 = vld [vmem:[%s1 + $0x8] sm:$0xff]
        %v291 = vld [vmem:[%s1 + $0x10] sm:$0xff]
        %v292 = vld [vmem:[%s1 + $0x18] sm:$0xff]
        %v293 = vld [vmem:[%s1 + $0x20] sm:$0xff]
        %v294 = vld [vmem:[%s1 + $0x28] sm:$0xff]
        %v295 = vld [vmem:[%s1 + $0x30] sm:$0xff]
        %v296 = vld [vmem:[%s1 + $0x38] sm:$0xff]
        %298 = vset.pattern.permute.xlu0 0
        %299 = vperm.xlu0 %298, %v289
        %v300 = vpop.permute.xlu0 %299
        %303 = vset.pattern.permute.xlu0 0
        %304 = vperm.xlu0 %303, %v290
        %v305 = vpop.permute.xlu0 %304
        %308 = vset.pattern.permute.xlu0 0
        %309 = vperm.xlu0 %308, %v291
        %v310 = vpop.permute.xlu0 %309
        %313 = vset.pattern.permute.xlu0 0
        %314 = vperm.xlu0 %313, %v292
        %v315 = vpop.permute.xlu0 %314
        %318 = vset.pattern.permute.xlu0 0
        %319 = vperm.xlu0 %318, %v293
        %v320 = vpop.permute.xlu0 %319
        %323 = vset.pattern.permute.xlu0 0
        %324 = vperm.xlu0 %323, %v294
        %v325 = vpop.permute.xlu0 %324
        %328 = vset.pattern.permute.xlu0 0
        %329 = vperm.xlu0 %328, %v295
        %v330 = vpop.permute.xlu0 %329
        %333 = vset.pattern.permute.xlu0 0
        %334 = vperm.xlu0 %333, %v296
        %v335 = vpop.permute.xlu0 %334
        %v338 = vlaneseq
        %v339 = vshrl.u32 %v338, 7
        %v340 = vsub.s32 0, %v339
        %v341 = vrot.slane %v288, %v340
        %v342 = vlaneseq
        %v343 = vshrl.u32 %v342, 7
        %v344 = vsub.s32 1, %v343
        %v345 = vrot.slane %v288, %v344
        %v346 = vlaneseq
        %v347 = vshrl.u32 %v346, 7
        %v348 = vsub.s32 2, %v347
        %v349 = vrot.slane %v288, %v348
        %v350 = vlaneseq
        %v351 = vshrl.u32 %v350, 7
        %v352 = vsub.s32 3, %v351
        %v353 = vrot.slane %v288, %v352
        %v354 = vlaneseq
        %v355 = vshrl.u32 %v354, 7
        %v356 = vsub.s32 4, %v355
        %v357 = vrot.slane %v288, %v356
        %v358 = vlaneseq
        %v359 = vshrl.u32 %v358, 7
        %v360 = vsub.s32 5, %v359
        %v361 = vrot.slane %v288, %v360
        %v368 = vmul.f32 %v300, %v341
        %v369 = vmul.f32 %v300, %v345
        %v370 = vmul.f32 %v300, %v349
        %v371 = vmul.f32 %v300, %v353
        %v372 = vmul.f32 %v300, %v357
        %v373 = vmul.f32 %v300, %v361
        %v374 = vmul.f32 %v305, %v341
        %v375 = vmul.f32 %v305, %v345
        %v376 = vmul.f32 %v305, %v349
        %v377 = vmul.f32 %v305, %v353
        %v378 = vmul.f32 %v305, %v357
        %v379 = vmul.f32 %v305, %v361
        %v380 = vmul.f32 %v310, %v341
        %v381 = vmul.f32 %v310, %v345
        %v382 = vmul.f32 %v310, %v349
        %v383 = vmul.f32 %v310, %v353
        %v384 = vmul.f32 %v310, %v357
        %v385 = vmul.f32 %v310, %v361
        %v386 = vmul.f32 %v315, %v341
        %v387 = vmul.f32 %v315, %v345
        %v388 = vmul.f32 %v315, %v349
        %v389 = vmul.f32 %v315, %v353
        %v390 = vmul.f32 %v315, %v357
        %v391 = vmul.f32 %v315, %v361
        %v392 = vmul.f32 %v320, %v341
        %v393 = vmul.f32 %v320, %v345
        %v394 = vmul.f32 %v320, %v349
        %v395 = vmul.f32 %v320, %v353
        %v396 = vmul.f32 %v320, %v357
        %v397 = vmul.f32 %v320, %v361
        %v398 = vmul.f32 %v325, %v341
        %v399 = vmul.f32 %v325, %v345
        %v400 = vmul.f32 %v325, %v349
        %v401 = vmul.f32 %v325, %v353
        %v402 = vmul.f32 %v325, %v357
        %v403 = vmul.f32 %v325, %v361
        %v404 = vmul.f32 %v330, %v341
        %v405 = vmul.f32 %v330, %v345
        %v406 = vmul.f32 %v330, %v349
        %v407 = vmul.f32 %v330, %v353
        %v408 = vmul.f32 %v330, %v357
        %v409 = vmul.f32 %v330, %v361
        %v410 = vmul.f32 %v335, %v341
        %v411 = vmul.f32 %v335, %v345
        %v412 = vmul.f32 %v335, %v349
        %v413 = vmul.f32 %v335, %v353
        %v414 = vmul.f32 %v335, %v357
        %v415 = vmul.f32 %v335, %v361
        %416 = vset.pattern.permute.xlu0 1
        %417 = vperm.xlu0 %416, %v289
        %v418 = vpop.permute.xlu0 %417
        %420 = vset.pattern.permute.xlu0 1
        %421 = vperm.xlu0 %420, %v290
        %v422 = vpop.permute.xlu0 %421
        %424 = vset.pattern.permute.xlu0 1
        %425 = vperm.xlu0 %424, %v291
        %v426 = vpop.permute.xlu0 %425
        %428 = vset.pattern.permute.xlu0 1
        %429 = vperm.xlu0 %428, %v292
        %v430 = vpop.permute.xlu0 %429
        %432 = vset.pattern.permute.xlu0 1
        %433 = vperm.xlu0 %432, %v293
        %v434 = vpop.permute.xlu0 %433
        %436 = vset.pattern.permute.xlu0 1
        %437 = vperm.xlu0 %436, %v294
        %v438 = vpop.permute.xlu0 %437
        %440 = vset.pattern.permute.xlu0 1
        %441 = vperm.xlu0 %440, %v295
        %v442 = vpop.permute.xlu0 %441
        %444 = vset.pattern.permute.xlu0 1
        %445 = vperm.xlu0 %444, %v296
        %v446 = vpop.permute.xlu0 %445
        %v448 = vmul.f32 %v418, %v341
        %v449 = vmul.f32 %v418, %v345
        %v450 = vmul.f32 %v418, %v349
        %v451 = vmul.f32 %v418, %v353
        %v452 = vmul.f32 %v418, %v357
        %v453 = vmul.f32 %v418, %v361
        %v454 = vmul.f32 %v422, %v341
        %v455 = vmul.f32 %v422, %v345
        %v456 = vmul.f32 %v422, %v349
        %v457 = vmul.f32 %v422, %v353
        %v458 = vmul.f32 %v422, %v357
        %v459 = vmul.f32 %v422, %v361
        %v460 = vmul.f32 %v426, %v341
        %v461 = vmul.f32 %v426, %v345
        %v462 = vmul.f32 %v426, %v349
        %v463 = vmul.f32 %v426, %v353
        %v464 = vmul.f32 %v426, %v357
        %v465 = vmul.f32 %v426, %v361
        %v466 = vmul.f32 %v430, %v341
        %v467 = vmul.f32 %v430, %v345
        %v468 = vmul.f32 %v430, %v349
        %v469 = vmul.f32 %v430, %v353
        %v470 = vmul.f32 %v430, %v357
        %v471 = vmul.f32 %v430, %v361
        %v472 = vmul.f32 %v434, %v341
        %v473 = vmul.f32 %v434, %v345
        %v474 = vmul.f32 %v434, %v349
        %v475 = vmul.f32 %v434, %v353
        %v476 = vmul.f32 %v434, %v357
        %v477 = vmul.f32 %v434, %v361
        %v478 = vmul.f32 %v438, %v341
        %v479 = vmul.f32 %v438, %v345
        %v480 = vmul.f32 %v438, %v349
        %v481 = vmul.f32 %v438, %v353
        %v482 = vmul.f32 %v438, %v357
        %v483 = vmul.f32 %v438, %v361
        %v484 = vmul.f32 %v442, %v341
        %v485 = vmul.f32 %v442, %v345
        %v486 = vmul.f32 %v442, %v349
        %v487 = vmul.f32 %v442, %v353
        %v488 = vmul.f32 %v442, %v357
        %v489 = vmul.f32 %v442, %v361
        %v490 = vmul.f32 %v446, %v341
        %v491 = vmul.f32 %v446, %v345
        %v492 = vmul.f32 %v446, %v349
        %v493 = vmul.f32 %v446, %v353
        %v494 = vmul.f32 %v446, %v357
        %v495 = vmul.f32 %v446, %v361
        %544 = vrot.lane.b32.xlu0 %v448, 127
        %v545 = vpop.permute.xlu0 %544
        %546 = vrot.lane.b32.xlu0 %v449, 127
        %v547 = vpop.permute.xlu0 %546
        %548 = vrot.lane.b32.xlu0 %v450, 127
        %v549 = vpop.permute.xlu0 %548
        %550 = vrot.lane.b32.xlu0 %v451, 127
        %v551 = vpop.permute.xlu0 %550
        %552 = vrot.lane.b32.xlu0 %v452, 127
        %v553 = vpop.permute.xlu0 %552
        %554 = vrot.lane.b32.xlu0 %v453, 127
        %v555 = vpop.permute.xlu0 %554
        %556 = vrot.lane.b32.xlu0 %v454, 127
        %v557 = vpop.permute.xlu0 %556
        %558 = vrot.lane.b32.xlu0 %v455, 127
        %v559 = vpop.permute.xlu0 %558
        %560 = vrot.lane.b32.xlu0 %v456, 127
        %v561 = vpop.permute.xlu0 %560
        %562 = vrot.lane.b32.xlu0 %v457, 127
        %v563 = vpop.permute.xlu0 %562
        %564 = vrot.lane.b32.xlu0 %v458, 127
        %v565 = vpop.permute.xlu0 %564
        %566 = vrot.lane.b32.xlu0 %v459, 127
        %v567 = vpop.permute.xlu0 %566
        %568 = vrot.lane.b32.xlu0 %v460, 127
        %v569 = vpop.permute.xlu0 %568
        %570 = vrot.lane.b32.xlu0 %v461, 127
        %v571 = vpop.permute.xlu0 %570
        %572 = vrot.lane.b32.xlu0 %v462, 127
        %v573 = vpop.permute.xlu0 %572
        %574 = vrot.lane.b32.xlu0 %v463, 127
        %v575 = vpop.permute.xlu0 %574
        %576 = vrot.lane.b32.xlu0 %v464, 127
        %v577 = vpop.permute.xlu0 %576
        %578 = vrot.lane.b32.xlu0 %v465, 127
        %v579 = vpop.permute.xlu0 %578
        %580 = vrot.lane.b32.xlu0 %v466, 127
        %v581 = vpop.permute.xlu0 %580
        %582 = vrot.lane.b32.xlu0 %v467, 127
        %v583 = vpop.permute.xlu0 %582
        %584 = vrot.lane.b32.xlu0 %v468, 127
        %v585 = vpop.permute.xlu0 %584
        %586 = vrot.lane.b32.xlu0 %v469, 127
        %v587 = vpop.permute.xlu0 %586
        %588 = vrot.lane.b32.xlu0 %v470, 127
        %v589 = vpop.permute.xlu0 %588
        %590 = vrot.lane.b32.xlu0 %v471, 127
        %v591 = vpop.permute.xlu0 %590
        %592 = vrot.lane.b32.xlu0 %v472, 127
        %v593 = vpop.permute.xlu0 %592
        %594 = vrot.lane.b32.xlu0 %v473, 127
        %v595 = vpop.permute.xlu0 %594
        %596 = vrot.lane.b32.xlu0 %v474, 127
        %v597 = vpop.permute.xlu0 %596
        %598 = vrot.lane.b32.xlu0 %v475, 127
        %v599 = vpop.permute.xlu0 %598
        %600 = vrot.lane.b32.xlu0 %v476, 127
        %v601 = vpop.permute.xlu0 %600
        %602 = vrot.lane.b32.xlu0 %v477, 127
        %v603 = vpop.permute.xlu0 %602
        %604 = vrot.lane.b32.xlu0 %v478, 127
        %v605 = vpop.permute.xlu0 %604
        %606 = vrot.lane.b32.xlu0 %v479, 127
        %v607 = vpop.permute.xlu0 %606
        %608 = vrot.lane.b32.xlu0 %v480, 127
        %v609 = vpop.permute.xlu0 %608
        %610 = vrot.lane.b32.xlu0 %v481, 127
        %v611 = vpop.permute.xlu0 %610
        %612 = vrot.lane.b32.xlu0 %v482, 127
        %v613 = vpop.permute.xlu0 %612
        %614 = vrot.lane.b32.xlu0 %v483, 127
        %v615 = vpop.permute.xlu0 %614
        %616 = vrot.lane.b32.xlu0 %v484, 127
        %v617 = vpop.permute.xlu0 %616
        %618 = vrot.lane.b32.xlu0 %v485, 127
        %v619 = vpop.permute.xlu0 %618
        %620 = vrot.lane.b32.xlu0 %v486, 127
        %v621 = vpop.permute.xlu0 %620
        %622 = vrot.lane.b32.xlu0 %v487, 127
        %v623 = vpop.permute.xlu0 %622
        %624 = vrot.lane.b32.xlu0 %v488, 127
        %v625 = vpop.permute.xlu0 %624
        %626 = vrot.lane.b32.xlu0 %v489, 127
        %v627 = vpop.permute.xlu0 %626
        %628 = vrot.lane.b32.xlu0 %v490, 127
        %v629 = vpop.permute.xlu0 %628
        %630 = vrot.lane.b32.xlu0 %v491, 127
        %v631 = vpop.permute.xlu0 %630
        %632 = vrot.lane.b32.xlu0 %v492, 127
        %v633 = vpop.permute.xlu0 %632
        %634 = vrot.lane.b32.xlu0 %v493, 127
        %v635 = vpop.permute.xlu0 %634
        %636 = vrot.lane.b32.xlu0 %v494, 127
        %v637 = vpop.permute.xlu0 %636
        %638 = vrot.lane.b32.xlu0 %v495, 127
        %v639 = vpop.permute.xlu0 %638
        %vm640 = vcmask 1039360
        %v641 = vsel %vm640, %v545, %v547
        %v642 = vsel %vm640, %v547, %v549
        %v643 = vsel %vm640, %v549, %v551
        %v644 = vsel %vm640, %v551, %v553
        %v645 = vsel %vm640, %v553, %v555
        %v646 = vsel %vm640, %v557, %v559
        %v647 = vsel %vm640, %v559, %v561
        %v648 = vsel %vm640, %v561, %v563
        %v649 = vsel %vm640, %v563, %v565
        %v650 = vsel %vm640, %v565, %v567
        %v651 = vsel %vm640, %v569, %v571
        %v652 = vsel %vm640, %v571, %v573
        %v653 = vsel %vm640, %v573, %v575
        %v654 = vsel %vm640, %v575, %v577
        %v655 = vsel %vm640, %v577, %v579
        %v656 = vsel %vm640, %v581, %v583
        %v657 = vsel %vm640, %v583, %v585
        %v658 = vsel %vm640, %v585, %v587
        %v659 = vsel %vm640, %v587, %v589
        %v660 = vsel %vm640, %v589, %v591
        %v661 = vsel %vm640, %v593, %v595
        %v662 = vsel %vm640, %v595, %v597
        %v663 = vsel %vm640, %v597, %v599
        %v664 = vsel %vm640, %v599, %v601
        %v665 = vsel %vm640, %v601, %v603
        %v666 = vsel %vm640, %v605, %v607
        %v667 = vsel %vm640, %v607, %v609
        %v668 = vsel %vm640, %v609, %v611
        %v669 = vsel %vm640, %v611, %v613
        %v670 = vsel %vm640, %v613, %v615
        %v671 = vsel %vm640, %v617, %v619
        %v672 = vsel %vm640, %v619, %v621
        %v673 = vsel %vm640, %v621, %v623
        %v674 = vsel %vm640, %v623, %v625
        %v675 = vsel %vm640, %v625, %v627
        %v676 = vsel %vm640, %v629, %v631
        %v677 = vsel %vm640, %v631, %v633
        %v678 = vsel %vm640, %v633, %v635
        %v679 = vsel %vm640, %v635, %v637
        %v680 = vsel %vm640, %v637, %v639
        %v729 = vadd.f32 %v368, %v641
        %v730 = vadd.f32 %v369, %v642
        %v731 = vadd.f32 %v370, %v643
        %v732 = vadd.f32 %v371, %v644
        %v733 = vadd.f32 %v372, %v645
        %v734 = vadd.f32 %v373, %v555
        %v735 = vadd.f32 %v374, %v646
        %v736 = vadd.f32 %v375, %v647
        %v737 = vadd.f32 %v376, %v648
        %v738 = vadd.f32 %v377, %v649
        %v739 = vadd.f32 %v378, %v650
        %v740 = vadd.f32 %v379, %v567
        %v741 = vadd.f32 %v380, %v651
        %v742 = vadd.f32 %v381, %v652
        %v743 = vadd.f32 %v382, %v653
        %v744 = vadd.f32 %v383, %v654
        %v745 = vadd.f32 %v384, %v655
        %v746 = vadd.f32 %v385, %v579
        %v747 = vadd.f32 %v386, %v656
        %v748 = vadd.f32 %v387, %v657
        %v749 = vadd.f32 %v388, %v658
        %v750 = vadd.f32 %v389, %v659
        %v751 = vadd.f32 %v390, %v660
        %v752 = vadd.f32 %v391, %v591
        %v753 = vadd.f32 %v392, %v661
        %v754 = vadd.f32 %v393, %v662
        %v755 = vadd.f32 %v394, %v663
        %v756 = vadd.f32 %v395, %v664
        %v757 = vadd.f32 %v396, %v665
        %v758 = vadd.f32 %v397, %v603
        %v759 = vadd.f32 %v398, %v666
        %v760 = vadd.f32 %v399, %v667
        %v761 = vadd.f32 %v400, %v668
        %v762 = vadd.f32 %v401, %v669
        %v763 = vadd.f32 %v402, %v670
        %v764 = vadd.f32 %v403, %v615
        %v765 = vadd.f32 %v404, %v671
        %v766 = vadd.f32 %v405, %v672
        %v767 = vadd.f32 %v406, %v673
        %v768 = vadd.f32 %v407, %v674
        %v769 = vadd.f32 %v408, %v675
        %v770 = vadd.f32 %v409, %v627
        %v771 = vadd.f32 %v410, %v676
        %v772 = vadd.f32 %v411, %v677
        %v773 = vadd.f32 %v412, %v678
        %v774 = vadd.f32 %v413, %v679
        %v775 = vadd.f32 %v414, %v680
        %v776 = vadd.f32 %v415, %v639
        %777 = vset.pattern.permute.xlu0 2
        %778 = vperm.xlu0 %777, %v289
        %v779 = vpop.permute.xlu0 %778
        %781 = vset.pattern.permute.xlu0 2
        %782 = vperm.xlu0 %781, %v290
        %v783 = vpop.permute.xlu0 %782
        %785 = vset.pattern.permute.xlu0 2
        %786 = vperm.xlu0 %785, %v291
        %v787 = vpop.permute.xlu0 %786
        %789 = vset.pattern.permute.xlu0 2
        %790 = vperm.xlu0 %789, %v292
        %v791 = vpop.permute.xlu0 %790
        %793 = vset.pattern.permute.xlu0 2
        %794 = vperm.xlu0 %793, %v293
        %v795 = vpop.permute.xlu0 %794
        %797 = vset.pattern.permute.xlu0 2
        %798 = vperm.xlu0 %797, %v294
        %v799 = vpop.permute.xlu0 %798
        %801 = vset.pattern.permute.xlu0 2
        %802 = vperm.xlu0 %801, %v295
        %v803 = vpop.permute.xlu0 %802
        %805 = vset.pattern.permute.xlu0 2
        %806 = vperm.xlu0 %805, %v296
        %v807 = vpop.permute.xlu0 %806
        %v809 = vmul.f32 %v779, %v341
        %v810 = vmul.f32 %v779, %v345
        %v811 = vmul.f32 %v779, %v349
        %v812 = vmul.f32 %v779, %v353
        %v813 = vmul.f32 %v779, %v357
        %v814 = vmul.f32 %v779, %v361
        %v815 = vmul.f32 %v783, %v341
        %v816 = vmul.f32 %v783, %v345
        %v817 = vmul.f32 %v783, %v349
        %v818 = vmul.f32 %v783, %v353
        %v819 = vmul.f32 %v783, %v357
        %v820 = vmul.f32 %v783, %v361
        %v821 = vmul.f32 %v787, %v341
        %v822 = vmul.f32 %v787, %v345
        %v823 = vmul.f32 %v787, %v349
        %v824 = vmul.f32 %v787, %v353
        %v825 = vmul.f32 %v787, %v357
        %v826 = vmul.f32 %v787, %v361
        %v827 = vmul.f32 %v791, %v341
        %v828 = vmul.f32 %v791, %v345
        %v829 = vmul.f32 %v791, %v349
        %v830 = vmul.f32 %v791, %v353
        %v831 = vmul.f32 %v791, %v357
        %v832 = vmul.f32 %v791, %v361
        %v833 = vmul.f32 %v795, %v341
        %v834 = vmul.f32 %v795, %v345
        %v835 = vmul.f32 %v795, %v349
        %v836 = vmul.f32 %v795, %v353
        %v837 = vmul.f32 %v795, %v357
        %v838 = vmul.f32 %v795, %v361
        %v839 = vmul.f32 %v799, %v341
        %v840 = vmul.f32 %v799, %v345
        %v841 = vmul.f32 %v799, %v349
        %v842 = vmul.f32 %v799, %v353
        %v843 = vmul.f32 %v799, %v357
        %v844 = vmul.f32 %v799, %v361
        %v845 = vmul.f32 %v803, %v341
        %v846 = vmul.f32 %v803, %v345
        %v847 = vmul.f32 %v803, %v349
        %v848 = vmul.f32 %v803, %v353
        %v849 = vmul.f32 %v803, %v357
        %v850 = vmul.f32 %v803, %v361
        %v851 = vmul.f32 %v807, %v341
        %v852 = vmul.f32 %v807, %v345
        %v853 = vmul.f32 %v807, %v349
        %v854 = vmul.f32 %v807, %v353
        %v855 = vmul.f32 %v807, %v357
        %v856 = vmul.f32 %v807, %v361
        %905 = vrot.lane.b32.xlu0 %v809, 126
        %v906 = vpop.permute.xlu0 %905
        %907 = vrot.lane.b32.xlu0 %v810, 126
        %v908 = vpop.permute.xlu0 %907
        %909 = vrot.lane.b32.xlu0 %v811, 126
        %v910 = vpop.permute.xlu0 %909
        %911 = vrot.lane.b32.xlu0 %v812, 126
        %v912 = vpop.permute.xlu0 %911
        %913 = vrot.lane.b32.xlu0 %v813, 126
        %v914 = vpop.permute.xlu0 %913
        %915 = vrot.lane.b32.xlu0 %v814, 126
        %v916 = vpop.permute.xlu0 %915
        %917 = vrot.lane.b32.xlu0 %v815, 126
        %v918 = vpop.permute.xlu0 %917
        %919 = vrot.lane.b32.xlu0 %v816, 126
        %v920 = vpop.permute.xlu0 %919
        %921 = vrot.lane.b32.xlu0 %v817, 126
        %v922 = vpop.permute.xlu0 %921
        %923 = vrot.lane.b32.xlu0 %v818, 126
        %v924 = vpop.permute.xlu0 %923
        %925 = vrot.lane.b32.xlu0 %v819, 126
        %v926 = vpop.permute.xlu0 %925
        %927 = vrot.lane.b32.xlu0 %v820, 126
        %v928 = vpop.permute.xlu0 %927
        %929 = vrot.lane.b32.xlu0 %v821, 126
        %v930 = vpop.permute.xlu0 %929
        %931 = vrot.lane.b32.xlu0 %v822, 126
        %v932 = vpop.permute.xlu0 %931
        %933 = vrot.lane.b32.xlu0 %v823, 126
        %v934 = vpop.permute.xlu0 %933
        %935 = vrot.lane.b32.xlu0 %v824, 126
        %v936 = vpop.permute.xlu0 %935
        %937 = vrot.lane.b32.xlu0 %v825, 126
        %v938 = vpop.permute.xlu0 %937
        %939 = vrot.lane.b32.xlu0 %v826, 126
        %v940 = vpop.permute.xlu0 %939
        %941 = vrot.lane.b32.xlu0 %v827, 126
        %v942 = vpop.permute.xlu0 %941
        %943 = vrot.lane.b32.xlu0 %v828, 126
        %v944 = vpop.permute.xlu0 %943
        %945 = vrot.lane.b32.xlu0 %v829, 126
        %v946 = vpop.permute.xlu0 %945
        %947 = vrot.lane.b32.xlu0 %v830, 126
        %v948 = vpop.permute.xlu0 %947
        %949 = vrot.lane.b32.xlu0 %v831, 126
        %v950 = vpop.permute.xlu0 %949
        %951 = vrot.lane.b32.xlu0 %v832, 126
        %v952 = vpop.permute.xlu0 %951
        %953 = vrot.lane.b32.xlu0 %v833, 126
        %v954 = vpop.permute.xlu0 %953
        %955 = vrot.lane.b32.xlu0 %v834, 126
        %v956 = vpop.permute.xlu0 %955
        %957 = vrot.lane.b32.xlu0 %v835, 126
        %v958 = vpop.permute.xlu0 %957
        %959 = vrot.lane.b32.xlu0 %v836, 126
        %v960 = vpop.permute.xlu0 %959
        %961 = vrot.lane.b32.xlu0 %v837, 126
        %v962 = vpop.permute.xlu0 %961
        %963 = vrot.lane.b32.xlu0 %v838, 126
        %v964 = vpop.permute.xlu0 %963
        %965 = vrot.lane.b32.xlu0 %v839, 126
        %v966 = vpop.permute.xlu0 %965
        %967 = vrot.lane.b32.xlu0 %v840, 126
        %v968 = vpop.permute.xlu0 %967
        %969 = vrot.lane.b32.xlu0 %v841, 126
        %v970 = vpop.permute.xlu0 %969
        %971 = vrot.lane.b32.xlu0 %v842, 126
        %v972 = vpop.permute.xlu0 %971
        %973 = vrot.lane.b32.xlu0 %v843, 126
        %v974 = vpop.permute.xlu0 %973
        %975 = vrot.lane.b32.xlu0 %v844, 126
        %v976 = vpop.permute.xlu0 %975
        %977 = vrot.lane.b32.xlu0 %v845, 126
        %v978 = vpop.permute.xlu0 %977
        %979 = vrot.lane.b32.xlu0 %v846, 126
        %v980 = vpop.permute.xlu0 %979
        %981 = vrot.lane.b32.xlu0 %v847, 126
        %v982 = vpop.permute.xlu0 %981
        %983 = vrot.lane.b32.xlu0 %v848, 126
        %v984 = vpop.permute.xlu0 %983
        %985 = vrot.lane.b32.xlu0 %v849, 126
        %v986 = vpop.permute.xlu0 %985
        %987 = vrot.lane.b32.xlu0 %v850, 126
        %v988 = vpop.permute.xlu0 %987
        %989 = vrot.lane.b32.xlu0 %v851, 126
        %v990 = vpop.permute.xlu0 %989
        %991 = vrot.lane.b32.xlu0 %v852, 126
        %v992 = vpop.permute.xlu0 %991
        %993 = vrot.lane.b32.xlu0 %v853, 126
        %v994 = vpop.permute.xlu0 %993
        %995 = vrot.lane.b32.xlu0 %v854, 126
        %v996 = vpop.permute.xlu0 %995
        %997 = vrot.lane.b32.xlu0 %v855, 126
        %v998 = vpop.permute.xlu0 %997
        %999 = vrot.lane.b32.xlu0 %v856, 126
        %v1000 = vpop.permute.xlu0 %999
        %vm1001 = vcmask 1031168
        %v1002 = vsel %vm1001, %v906, %v908
        %v1003 = vsel %vm1001, %v908, %v910
        %v1004 = vsel %vm1001, %v910, %v912
        %v1005 = vsel %vm1001, %v912, %v914
        %v1006 = vsel %vm1001, %v914, %v916
        %v1007 = vsel %vm1001, %v918, %v920
        %v1008 = vsel %vm1001, %v920, %v922
        %v1009 = vsel %vm1001, %v922, %v924
        %v1010 = vsel %vm1001, %v924, %v926
        %v1011 = vsel %vm1001, %v926, %v928
        %v1012 = vsel %vm1001, %v930, %v932
        %v1013 = vsel %vm1001, %v932, %v934
        %v1014 = vsel %vm1001, %v934, %v936
        %v1015 = vsel %vm1001, %v936, %v938
        %v1016 = vsel %vm1001, %v938, %v940
        %v1017 = vsel %vm1001, %v942, %v944
        %v1018 = vsel %vm1001, %v944, %v946
        %v1019 = vsel %vm1001, %v946, %v948
        %v1020 = vsel %vm1001, %v948, %v950
        %v1021 = vsel %vm1001, %v950, %v952
        %v1022 = vsel %vm1001, %v954, %v956
        %v1023 = vsel %vm1001, %v956, %v958
        %v1024 = vsel %vm1001, %v958, %v960
        %v1025 = vsel %vm1001, %v960, %v962
        %v1026 = vsel %vm1001, %v962, %v964
        %v1027 = vsel %vm1001, %v966, %v968
        %v1028 = vsel %vm1001, %v968, %v970
        %v1029 = vsel %vm1001, %v970, %v972
        %v1030 = vsel %vm1001, %v972, %v974
        %v1031 = vsel %vm1001, %v974, %v976
        %v1032 = vsel %vm1001, %v978, %v980
        %v1033 = vsel %vm1001, %v980, %v982
        %v1034 = vsel %vm1001, %v982, %v984
        %v1035 = vsel %vm1001, %v984, %v986
        %v1036 = vsel %vm1001, %v986, %v988
        %v1037 = vsel %vm1001, %v990, %v992
        %v1038 = vsel %vm1001, %v992, %v994
        %v1039 = vsel %vm1001, %v994, %v996
        %v1040 = vsel %vm1001, %v996, %v998
        %v1041 = vsel %vm1001, %v998, %v1000
        %v1090 = vadd.f32 %v729, %v1002
        %v1091 = vadd.f32 %v730, %v1003
        %v1092 = vadd.f32 %v731, %v1004
        %v1093 = vadd.f32 %v732, %v1005
        %v1094 = vadd.f32 %v733, %v1006
        %v1095 = vadd.f32 %v734, %v916
        %v1096 = vadd.f32 %v735, %v1007
        %v1097 = vadd.f32 %v736, %v1008
        %v1098 = vadd.f32 %v737, %v1009
        %v1099 = vadd.f32 %v738, %v1010
        %v1100 = vadd.f32 %v739, %v1011
        %v1101 = vadd.f32 %v740, %v928
        %v1102 = vadd.f32 %v741, %v1012
        %v1103 = vadd.f32 %v742, %v1013
        %v1104 = vadd.f32 %v743, %v1014
        %v1105 = vadd.f32 %v744, %v1015
        %v1106 = vadd.f32 %v745, %v1016
        %v1107 = vadd.f32 %v746, %v940
        %v1108 = vadd.f32 %v747, %v1017
        %v1109 = vadd.f32 %v748, %v1018
        %v1110 = vadd.f32 %v749, %v1019
        %v1111 = vadd.f32 %v750, %v1020
        %v1112 = vadd.f32 %v751, %v1021
        %v1113 = vadd.f32 %v752, %v952
        %v1114 = vadd.f32 %v753, %v1022
        %v1115 = vadd.f32 %v754, %v1023
        %v1116 = vadd.f32 %v755, %v1024
        %v1117 = vadd.f32 %v756, %v1025
        %v1118 = vadd.f32 %v757, %v1026
        %v1119 = vadd.f32 %v758, %v964
        %v1120 = vadd.f32 %v759, %v1027
        %v1121 = vadd.f32 %v760, %v1028
        %v1122 = vadd.f32 %v761, %v1029
        %v1123 = vadd.f32 %v762, %v1030
        %v1124 = vadd.f32 %v763, %v1031
        %v1125 = vadd.f32 %v764, %v976
        %v1126 = vadd.f32 %v765, %v1032
        %v1127 = vadd.f32 %v766, %v1033
        %v1128 = vadd.f32 %v767, %v1034
        %v1129 = vadd.f32 %v768, %v1035
        %v1130 = vadd.f32 %v769, %v1036
        %v1131 = vadd.f32 %v770, %v988
        %v1132 = vadd.f32 %v771, %v1037
        %v1133 = vadd.f32 %v772, %v1038
        %v1134 = vadd.f32 %v773, %v1039
        %v1135 = vadd.f32 %v774, %v1040
        %v1136 = vadd.f32 %v775, %v1041
        %v1137 = vadd.f32 %v776, %v1000
        %1138 = vset.pattern.permute.xlu0 3
        %1139 = vperm.xlu0 %1138, %v289
        %v1140 = vpop.permute.xlu0 %1139
        %1142 = vset.pattern.permute.xlu0 3
        %1143 = vperm.xlu0 %1142, %v290
        %v1144 = vpop.permute.xlu0 %1143
        %1146 = vset.pattern.permute.xlu0 3
        %1147 = vperm.xlu0 %1146, %v291
        %v1148 = vpop.permute.xlu0 %1147
        %1150 = vset.pattern.permute.xlu0 3
        %1151 = vperm.xlu0 %1150, %v292
        %v1152 = vpop.permute.xlu0 %1151
        %1154 = vset.pattern.permute.xlu0 3
        %1155 = vperm.xlu0 %1154, %v293
        %v1156 = vpop.permute.xlu0 %1155
        %1158 = vset.pattern.permute.xlu0 3
        %1159 = vperm.xlu0 %1158, %v294
        %v1160 = vpop.permute.xlu0 %1159
        %1162 = vset.pattern.permute.xlu0 3
        %1163 = vperm.xlu0 %1162, %v295
        %v1164 = vpop.permute.xlu0 %1163
        %1166 = vset.pattern.permute.xlu0 3
        %1167 = vperm.xlu0 %1166, %v296
        %v1168 = vpop.permute.xlu0 %1167
        %v1170 = vmul.f32 %v1140, %v341
        %v1171 = vmul.f32 %v1140, %v345
        %v1172 = vmul.f32 %v1140, %v349
        %v1173 = vmul.f32 %v1140, %v353
        %v1174 = vmul.f32 %v1140, %v357
        %v1175 = vmul.f32 %v1140, %v361
        %v1176 = vmul.f32 %v1144, %v341
        %v1177 = vmul.f32 %v1144, %v345
        %v1178 = vmul.f32 %v1144, %v349
        %v1179 = vmul.f32 %v1144, %v353
        %v1180 = vmul.f32 %v1144, %v357
        %v1181 = vmul.f32 %v1144, %v361
        %v1182 = vmul.f32 %v1148, %v341
        %v1183 = vmul.f32 %v1148, %v345
        %v1184 = vmul.f32 %v1148, %v349
        %v1185 = vmul.f32 %v1148, %v353
        %v1186 = vmul.f32 %v1148, %v357
        %v1187 = vmul.f32 %v1148, %v361
        %v1188 = vmul.f32 %v1152, %v341
        %v1189 = vmul.f32 %v1152, %v345
        %v1190 = vmul.f32 %v1152, %v349
        %v1191 = vmul.f32 %v1152, %v353
        %v1192 = vmul.f32 %v1152, %v357
        %v1193 = vmul.f32 %v1152, %v361
        %v1194 = vmul.f32 %v1156, %v341
        %v1195 = vmul.f32 %v1156, %v345
        %v1196 = vmul.f32 %v1156, %v349
        %v1197 = vmul.f32 %v1156, %v353
        %v1198 = vmul.f32 %v1156, %v357
        %v1199 = vmul.f32 %v1156, %v361
        %v1200 = vmul.f32 %v1160, %v341
        %v1201 = vmul.f32 %v1160, %v345
        %v1202 = vmul.f32 %v1160, %v349
        %v1203 = vmul.f32 %v1160, %v353
        %v1204 = vmul.f32 %v1160, %v357
        %v1205 = vmul.f32 %v1160, %v361
        %v1206 = vmul.f32 %v1164, %v341
        %v1207 = vmul.f32 %v1164, %v345
        %v1208 = vmul.f32 %v1164, %v349
        %v1209 = vmul.f32 %v1164, %v353
        %v1210 = vmul.f32 %v1164, %v357
        %v1211 = vmul.f32 %v1164, %v361
        %v1212 = vmul.f32 %v1168, %v341
        %v1213 = vmul.f32 %v1168, %v345
        %v1214 = vmul.f32 %v1168, %v349
        %v1215 = vmul.f32 %v1168, %v353
        %v1216 = vmul.f32 %v1168, %v357
        %v1217 = vmul.f32 %v1168, %v361
        %1266 = vrot.lane.b32.xlu0 %v1170, 110
        %v1267 = vpop.permute.xlu0 %1266
        %1268 = vrot.lane.b32.xlu0 %v1171, 110
        %v1269 = vpop.permute.xlu0 %1268
        %1270 = vrot.lane.b32.xlu0 %v1172, 110
        %v1271 = vpop.permute.xlu0 %1270
        %1272 = vrot.lane.b32.xlu0 %v1173, 110
        %v1273 = vpop.permute.xlu0 %1272
        %1274 = vrot.lane.b32.xlu0 %v1174, 110
        %v1275 = vpop.permute.xlu0 %1274
        %1276 = vrot.lane.b32.xlu0 %v1175, 110
        %v1277 = vpop.permute.xlu0 %1276
        %1278 = vrot.lane.b32.xlu0 %v1176, 110
        %v1279 = vpop.permute.xlu0 %1278
        %1280 = vrot.lane.b32.xlu0 %v1177, 110
        %v1281 = vpop.permute.xlu0 %1280
        %1282 = vrot.lane.b32.xlu0 %v1178, 110
        %v1283 = vpop.permute.xlu0 %1282
        %1284 = vrot.lane.b32.xlu0 %v1179, 110
        %v1285 = vpop.permute.xlu0 %1284
        %1286 = vrot.lane.b32.xlu0 %v1180, 110
        %v1287 = vpop.permute.xlu0 %1286
        %1288 = vrot.lane.b32.xlu0 %v1181, 110
        %v1289 = vpop.permute.xlu0 %1288
        %1290 = vrot.lane.b32.xlu0 %v1182, 110
        %v1291 = vpop.permute.xlu0 %1290
        %1292 = vrot.lane.b32.xlu0 %v1183, 110
        %v1293 = vpop.permute.xlu0 %1292
        %1294 = vrot.lane.b32.xlu0 %v1184, 110
        %v1295 = vpop.permute.xlu0 %1294
        %1296 = vrot.lane.b32.xlu0 %v1185, 110
        %v1297 = vpop.permute.xlu0 %1296
        %1298 = vrot.lane.b32.xlu0 %v1186, 110
        %v1299 = vpop.permute.xlu0 %1298
        %1300 = vrot.lane.b32.xlu0 %v1187, 110
        %v1301 = vpop.permute.xlu0 %1300
        %1302 = vrot.lane.b32.xlu0 %v1188, 110
        %v1303 = vpop.permute.xlu0 %1302
        %1304 = vrot.lane.b32.xlu0 %v1189, 110
        %v1305 = vpop.permute.xlu0 %1304
        %1306 = vrot.lane.b32.xlu0 %v1190, 110
        %v1307 = vpop.permute.xlu0 %1306
        %1308 = vrot.lane.b32.xlu0 %v1191, 110
        %v1309 = vpop.permute.xlu0 %1308
        %1310 = vrot.lane.b32.xlu0 %v1192, 110
        %v1311 = vpop.permute.xlu0 %1310
        %1312 = vrot.lane.b32.xlu0 %v1193, 110
        %v1313 = vpop.permute.xlu0 %1312
        %1314 = vrot.lane.b32.xlu0 %v1194, 110
        %v1315 = vpop.permute.xlu0 %1314
        %1316 = vrot.lane.b32.xlu0 %v1195, 110
        %v1317 = vpop.permute.xlu0 %1316
        %1318 = vrot.lane.b32.xlu0 %v1196, 110
        %v1319 = vpop.permute.xlu0 %1318
        %1320 = vrot.lane.b32.xlu0 %v1197, 110
        %v1321 = vpop.permute.xlu0 %1320
        %1322 = vrot.lane.b32.xlu0 %v1198, 110
        %v1323 = vpop.permute.xlu0 %1322
        %1324 = vrot.lane.b32.xlu0 %v1199, 110
        %v1325 = vpop.permute.xlu0 %1324
        %1326 = vrot.lane.b32.xlu0 %v1200, 110
        %v1327 = vpop.permute.xlu0 %1326
        %1328 = vrot.lane.b32.xlu0 %v1201, 110
        %v1329 = vpop.permute.xlu0 %1328
        %1330 = vrot.lane.b32.xlu0 %v1202, 110
        %v1331 = vpop.permute.xlu0 %1330
        %1332 = vrot.lane.b32.xlu0 %v1203, 110
        %v1333 = vpop.permute.xlu0 %1332
        %1334 = vrot.lane.b32.xlu0 %v1204, 110
        %v1335 = vpop.permute.xlu0 %1334
        %1336 = vrot.lane.b32.xlu0 %v1205, 110
        %v1337 = vpop.permute.xlu0 %1336
        %1338 = vrot.lane.b32.xlu0 %v1206, 110
        %v1339 = vpop.permute.xlu0 %1338
        %1340 = vrot.lane.b32.xlu0 %v1207, 110
        %v1341 = vpop.permute.xlu0 %1340
        %1342 = vrot.lane.b32.xlu0 %v1208, 110
        %v1343 = vpop.permute.xlu0 %1342
        %1344 = vrot.lane.b32.xlu0 %v1209, 110
        %v1345 = vpop.permute.xlu0 %1344
        %1346 = vrot.lane.b32.xlu0 %v1210, 110
        %v1347 = vpop.permute.xlu0 %1346
        %1348 = vrot.lane.b32.xlu0 %v1211, 110
        %v1349 = vpop.permute.xlu0 %1348
        %1350 = vrot.lane.b32.xlu0 %v1212, 110
        %v1351 = vpop.permute.xlu0 %1350
        %1352 = vrot.lane.b32.xlu0 %v1213, 110
        %v1353 = vpop.permute.xlu0 %1352
        %1354 = vrot.lane.b32.xlu0 %v1214, 110
        %v1355 = vpop.permute.xlu0 %1354
        %1356 = vrot.lane.b32.xlu0 %v1215, 110
        %v1357 = vpop.permute.xlu0 %1356
        %1358 = vrot.lane.b32.xlu0 %v1216, 110
        %v1359 = vpop.permute.xlu0 %1358
        %1360 = vrot.lane.b32.xlu0 %v1217, 110
        %v1361 = vpop.permute.xlu0 %1360
        %vm1362 = vcmask 900096
        %v1363 = vsel %vm1362, %v1267, %v1269
        %v1364 = vsel %vm1362, %v1269, %v1271
        %v1365 = vsel %vm1362, %v1271, %v1273
        %v1366 = vsel %vm1362, %v1273, %v1275
        %v1367 = vsel %vm1362, %v1275, %v1277
        %v1368 = vsel %vm1362, %v1279, %v1281
        %v1369 = vsel %vm1362, %v1281, %v1283
        %v1370 = vsel %vm1362, %v1283, %v1285
        %v1371 = vsel %vm1362, %v1285, %v1287
        %v1372 = vsel %vm1362, %v1287, %v1289
        %v1373 = vsel %vm1362, %v1291, %v1293
        %v1374 = vsel %vm1362, %v1293, %v1295
        %v1375 = vsel %vm1362, %v1295, %v1297
        %v1376 = vsel %vm1362, %v1297, %v1299
        %v1377 = vsel %vm1362, %v1299, %v1301
        %v1378 = vsel %vm1362, %v1303, %v1305
        %v1379 = vsel %vm1362, %v1305, %v1307
        %v1380 = vsel %vm1362, %v1307, %v1309
        %v1381 = vsel %vm1362, %v1309, %v1311
        %v1382 = vsel %vm1362, %v1311, %v1313
        %v1383 = vsel %vm1362, %v1315, %v1317
        %v1384 = vsel %vm1362, %v1317, %v1319
        %v1385 = vsel %vm1362, %v1319, %v1321
        %v1386 = vsel %vm1362, %v1321, %v1323
        %v1387 = vsel %vm1362, %v1323, %v1325
        %v1388 = vsel %vm1362, %v1327, %v1329
        %v1389 = vsel %vm1362, %v1329, %v1331
        %v1390 = vsel %vm1362, %v1331, %v1333
        %v1391 = vsel %vm1362, %v1333, %v1335
        %v1392 = vsel %vm1362, %v1335, %v1337
        %v1393 = vsel %vm1362, %v1339, %v1341
        %v1394 = vsel %vm1362, %v1341, %v1343
        %v1395 = vsel %vm1362, %v1343, %v1345
        %v1396 = vsel %vm1362, %v1345, %v1347
        %v1397 = vsel %vm1362, %v1347, %v1349
        %v1398 = vsel %vm1362, %v1351, %v1353
        %v1399 = vsel %vm1362, %v1353, %v1355
        %v1400 = vsel %vm1362, %v1355, %v1357
        %v1401 = vsel %vm1362, %v1357, %v1359
        %v1402 = vsel %vm1362, %v1359, %v1361
        %v1451 = vadd.f32 %v1090, %v1363
        %v1452 = vadd.f32 %v1091, %v1364
        %v1453 = vadd.f32 %v1092, %v1365
        %v1454 = vadd.f32 %v1093, %v1366
        %v1455 = vadd.f32 %v1094, %v1367
        %v1456 = vadd.f32 %v1095, %v1277
        %v1457 = vadd.f32 %v1096, %v1368
        %v1458 = vadd.f32 %v1097, %v1369
        %v1459 = vadd.f32 %v1098, %v1370
        %v1460 = vadd.f32 %v1099, %v1371
        %v1461 = vadd.f32 %v1100, %v1372
        %v1462 = vadd.f32 %v1101, %v1289
        %v1463 = vadd.f32 %v1102, %v1373
        %v1464 = vadd.f32 %v1103, %v1374
        %v1465 = vadd.f32 %v1104, %v1375
        %v1466 = vadd.f32 %v1105, %v1376
        %v1467 = vadd.f32 %v1106, %v1377
        %v1468 = vadd.f32 %v1107, %v1301
        %v1469 = vadd.f32 %v1108, %v1378
        %v1470 = vadd.f32 %v1109, %v1379
        %v1471 = vadd.f32 %v1110, %v1380
        %v1472 = vadd.f32 %v1111, %v1381
        %v1473 = vadd.f32 %v1112, %v1382
        %v1474 = vadd.f32 %v1113, %v1313
        %v1475 = vadd.f32 %v1114, %v1383
        %v1476 = vadd.f32 %v1115, %v1384
        %v1477 = vadd.f32 %v1116, %v1385
        %v1478 = vadd.f32 %v1117, %v1386
        %v1479 = vadd.f32 %v1118, %v1387
        %v1480 = vadd.f32 %v1119, %v1325
        %v1481 = vadd.f32 %v1120, %v1388
        %v1482 = vadd.f32 %v1121, %v1389
        %v1483 = vadd.f32 %v1122, %v1390
        %v1484 = vadd.f32 %v1123, %v1391
        %v1485 = vadd.f32 %v1124, %v1392
        %v1486 = vadd.f32 %v1125, %v1337
        %v1487 = vadd.f32 %v1126, %v1393
        %v1488 = vadd.f32 %v1127, %v1394
        %v1489 = vadd.f32 %v1128, %v1395
        %v1490 = vadd.f32 %v1129, %v1396
        %v1491 = vadd.f32 %v1130, %v1397
        %v1492 = vadd.f32 %v1131, %v1349
        %v1493 = vadd.f32 %v1132, %v1398
        %v1494 = vadd.f32 %v1133, %v1399
        %v1495 = vadd.f32 %v1134, %v1400
        %v1496 = vadd.f32 %v1135, %v1401
        %v1497 = vadd.f32 %v1136, %v1402
        %v1498 = vadd.f32 %v1137, %v1361
        %1499 = vset.pattern.permute.xlu0 4
        %1500 = vperm.xlu0 %1499, %v289
        %v1501 = vpop.permute.xlu0 %1500
        %1503 = vset.pattern.permute.xlu0 4
        %1504 = vperm.xlu0 %1503, %v290
        %v1505 = vpop.permute.xlu0 %1504
        %1507 = vset.pattern.permute.xlu0 4
        %1508 = vperm.xlu0 %1507, %v291
        %v1509 = vpop.permute.xlu0 %1508
        %1511 = vset.pattern.permute.xlu0 4
        %1512 = vperm.xlu0 %1511, %v292
        %v1513 = vpop.permute.xlu0 %1512
        %1515 = vset.pattern.permute.xlu0 4
        %1516 = vperm.xlu0 %1515, %v293
        %v1517 = vpop.permute.xlu0 %1516
        %1519 = vset.pattern.permute.xlu0 4
        %1520 = vperm.xlu0 %1519, %v294
        %v1521 = vpop.permute.xlu0 %1520
        %1523 = vset.pattern.permute.xlu0 4
        %1524 = vperm.xlu0 %1523, %v295
        %v1525 = vpop.permute.xlu0 %1524
        %1527 = vset.pattern.permute.xlu0 4
        %1528 = vperm.xlu0 %1527, %v296
        %v1529 = vpop.permute.xlu0 %1528
        %v1531 = vmul.f32 %v1501, %v341
        %v1532 = vmul.f32 %v1501, %v345
        %v1533 = vmul.f32 %v1501, %v349
        %v1534 = vmul.f32 %v1501, %v353
        %v1535 = vmul.f32 %v1501, %v357
        %v1536 = vmul.f32 %v1501, %v361
        %v1537 = vmul.f32 %v1505, %v341
        %v1538 = vmul.f32 %v1505, %v345
        %v1539 = vmul.f32 %v1505, %v349
        %v1540 = vmul.f32 %v1505, %v353
        %v1541 = vmul.f32 %v1505, %v357
        %v1542 = vmul.f32 %v1505, %v361
        %v1543 = vmul.f32 %v1509, %v341
        %v1544 = vmul.f32 %v1509, %v345
        %v1545 = vmul.f32 %v1509, %v349
        %v1546 = vmul.f32 %v1509, %v353
        %v1547 = vmul.f32 %v1509, %v357
        %v1548 = vmul.f32 %v1509, %v361
        %v1549 = vmul.f32 %v1513, %v341
        %v1550 = vmul.f32 %v1513, %v345
        %v1551 = vmul.f32 %v1513, %v349
        %v1552 = vmul.f32 %v1513, %v353
        %v1553 = vmul.f32 %v1513, %v357
        %v1554 = vmul.f32 %v1513, %v361
        %v1555 = vmul.f32 %v1517, %v341
        %v1556 = vmul.f32 %v1517, %v345
        %v1557 = vmul.f32 %v1517, %v349
        %v1558 = vmul.f32 %v1517, %v353
        %v1559 = vmul.f32 %v1517, %v357
        %v1560 = vmul.f32 %v1517, %v361
        %v1561 = vmul.f32 %v1521, %v341
        %v1562 = vmul.f32 %v1521, %v345
        %v1563 = vmul.f32 %v1521, %v349
        %v1564 = vmul.f32 %v1521, %v353
        %v1565 = vmul.f32 %v1521, %v357
        %v1566 = vmul.f32 %v1521, %v361
        %v1567 = vmul.f32 %v1525, %v341
        %v1568 = vmul.f32 %v1525, %v345
        %v1569 = vmul.f32 %v1525, %v349
        %v1570 = vmul.f32 %v1525, %v353
        %v1571 = vmul.f32 %v1525, %v357
        %v1572 = vmul.f32 %v1525, %v361
        %v1573 = vmul.f32 %v1529, %v341
        %v1574 = vmul.f32 %v1529, %v345
        %v1575 = vmul.f32 %v1529, %v349
        %v1576 = vmul.f32 %v1529, %v353
        %v1577 = vmul.f32 %v1529, %v357
        %v1578 = vmul.f32 %v1529, %v361
        %1627 = vrot.lane.b32.xlu0 %v1531, 109
        %v1628 = vpop.permute.xlu0 %1627
        %1629 = vrot.lane.b32.xlu0 %v1532, 109
        %v1630 = vpop.permute.xlu0 %1629
        %1631 = vrot.lane.b32.xlu0 %v1533, 109
        %v1632 = vpop.permute.xlu0 %1631
        %1633 = vrot.lane.b32.xlu0 %v1534, 109
        %v1634 = vpop.permute.xlu0 %1633
        %1635 = vrot.lane.b32.xlu0 %v1535, 109
        %v1636 = vpop.permute.xlu0 %1635
        %1637 = vrot.lane.b32.xlu0 %v1536, 109
        %v1638 = vpop.permute.xlu0 %1637
        %1639 = vrot.lane.b32.xlu0 %v1537, 109
        %v1640 = vpop.permute.xlu0 %1639
        %1641 = vrot.lane.b32.xlu0 %v1538, 109
        %v1642 = vpop.permute.xlu0 %1641
        %1643 = vrot.lane.b32.xlu0 %v1539, 109
        %v1644 = vpop.permute.xlu0 %1643
        %1645 = vrot.lane.b32.xlu0 %v1540, 109
        %v1646 = vpop.permute.xlu0 %1645
        %1647 = vrot.lane.b32.xlu0 %v1541, 109
        %v1648 = vpop.permute.xlu0 %1647
        %1649 = vrot.lane.b32.xlu0 %v1542, 109
        %v1650 = vpop.permute.xlu0 %1649
        %1651 = vrot.lane.b32.xlu0 %v1543, 109
        %v1652 = vpop.permute.xlu0 %1651
        %1653 = vrot.lane.b32.xlu0 %v1544, 109
        %v1654 = vpop.permute.xlu0 %1653
        %1655 = vrot.lane.b32.xlu0 %v1545, 109
        %v1656 = vpop.permute.xlu0 %1655
        %1657 = vrot.lane.b32.xlu0 %v1546, 109
        %v1658 = vpop.permute.xlu0 %1657
        %1659 = vrot.lane.b32.xlu0 %v1547, 109
        %v1660 = vpop.permute.xlu0 %1659
        %1661 = vrot.lane.b32.xlu0 %v1548, 109
        %v1662 = vpop.permute.xlu0 %1661
        %1663 = vrot.lane.b32.xlu0 %v1549, 109
        %v1664 = vpop.permute.xlu0 %1663
        %1665 = vrot.lane.b32.xlu0 %v1550, 109
        %v1666 = vpop.permute.xlu0 %1665
        %1667 = vrot.lane.b32.xlu0 %v1551, 109
        %v1668 = vpop.permute.xlu0 %1667
        %1669 = vrot.lane.b32.xlu0 %v1552, 109
        %v1670 = vpop.permute.xlu0 %1669
        %1671 = vrot.lane.b32.xlu0 %v1553, 109
        %v1672 = vpop.permute.xlu0 %1671
        %1673 = vrot.lane.b32.xlu0 %v1554, 109
        %v1674 = vpop.permute.xlu0 %1673
        %1675 = vrot.lane.b32.xlu0 %v1555, 109
        %v1676 = vpop.permute.xlu0 %1675
        %1677 = vrot.lane.b32.xlu0 %v1556, 109
        %v1678 = vpop.permute.xlu0 %1677
        %1679 = vrot.lane.b32.xlu0 %v1557, 109
        %v1680 = vpop.permute.xlu0 %1679
        %1681 = vrot.lane.b32.xlu0 %v1558, 109
        %v1682 = vpop.permute.xlu0 %1681
        %1683 = vrot.lane.b32.xlu0 %v1559, 109
        %v1684 = vpop.permute.xlu0 %1683
        %1685 = vrot.lane.b32.xlu0 %v1560, 109
        %v1686 = vpop.permute.xlu0 %1685
        %1687 = vrot.lane.b32.xlu0 %v1561, 109
        %v1688 = vpop.permute.xlu0 %1687
        %1689 = vrot.lane.b32.xlu0 %v1562, 109
        %v1690 = vpop.permute.xlu0 %1689
        %1691 = vrot.lane.b32.xlu0 %v1563, 109
        %v1692 = vpop.permute.xlu0 %1691
        %1693 = vrot.lane.b32.xlu0 %v1564, 109
        %v1694 = vpop.permute.xlu0 %1693
        %1695 = vrot.lane.b32.xlu0 %v1565, 109
        %v1696 = vpop.permute.xlu0 %1695
        %1697 = vrot.lane.b32.xlu0 %v1566, 109
        %v1698 = vpop.permute.xlu0 %1697
        %1699 = vrot.lane.b32.xlu0 %v1567, 109
        %v1700 = vpop.permute.xlu0 %1699
        %1701 = vrot.lane.b32.xlu0 %v1568, 109
        %v1702 = vpop.permute.xlu0 %1701
        %1703 = vrot.lane.b32.xlu0 %v1569, 109
        %v1704 = vpop.permute.xlu0 %1703
        %1705 = vrot.lane.b32.xlu0 %v1570, 109
        %v1706 = vpop.permute.xlu0 %1705
        %1707 = vrot.lane.b32.xlu0 %v1571, 109
        %v1708 = vpop.permute.xlu0 %1707
        %1709 = vrot.lane.b32.xlu0 %v1572, 109
        %v1710 = vpop.permute.xlu0 %1709
        %1711 = vrot.lane.b32.xlu0 %v1573, 109
        %v1712 = vpop.permute.xlu0 %1711
        %1713 = vrot.lane.b32.xlu0 %v1574, 109
        %v1714 = vpop.permute.xlu0 %1713
        %1715 = vrot.lane.b32.xlu0 %v1575, 109
        %v1716 = vpop.permute.xlu0 %1715
        %1717 = vrot.lane.b32.xlu0 %v1576, 109
        %v1718 = vpop.permute.xlu0 %1717
        %1719 = vrot.lane.b32.xlu0 %v1577, 109
        %v1720 = vpop.permute.xlu0 %1719
        %1721 = vrot.lane.b32.xlu0 %v1578, 109
        %v1722 = vpop.permute.xlu0 %1721
        %vm1723 = vcmask 891904
        %v1724 = vsel %vm1723, %v1628, %v1630
        %v1725 = vsel %vm1723, %v1630, %v1632
        %v1726 = vsel %vm1723, %v1632, %v1634
        %v1727 = vsel %vm1723, %v1634, %v1636
        %v1728 = vsel %vm1723, %v1636, %v1638
        %v1729 = vsel %vm1723, %v1640, %v1642
        %v1730 = vsel %vm1723, %v1642, %v1644
        %v1731 = vsel %vm1723, %v1644, %v1646
        %v1732 = vsel %vm1723, %v1646, %v1648
        %v1733 = vsel %vm1723, %v1648, %v1650
        %v1734 = vsel %vm1723, %v1652, %v1654
        %v1735 = vsel %vm1723, %v1654, %v1656
        %v1736 = vsel %vm1723, %v1656, %v1658
        %v1737 = vsel %vm1723, %v1658, %v1660
        %v1738 = vsel %vm1723, %v1660, %v1662
        %v1739 = vsel %vm1723, %v1664, %v1666
        %v1740 = vsel %vm1723, %v1666, %v1668
        %v1741 = vsel %vm1723, %v1668, %v1670
        %v1742 = vsel %vm1723, %v1670, %v1672
        %v1743 = vsel %vm1723, %v1672, %v1674
        %v1744 = vsel %vm1723, %v1676, %v1678
        %v1745 = vsel %vm1723, %v1678, %v1680
        %v1746 = vsel %vm1723, %v1680, %v1682
        %v1747 = vsel %vm1723, %v1682, %v1684
        %v1748 = vsel %vm1723, %v1684, %v1686
        %v1749 = vsel %vm1723, %v1688, %v1690
        %v1750 = vsel %vm1723, %v1690, %v1692
        %v1751 = vsel %vm1723, %v1692, %v1694
        %v1752 = vsel %vm1723, %v1694, %v1696
        %v1753 = vsel %vm1723, %v1696, %v1698
        %v1754 = vsel %vm1723, %v1700, %v1702
        %v1755 = vsel %vm1723, %v1702, %v1704
        %v1756 = vsel %vm1723, %v1704, %v1706
        %v1757 = vsel %vm1723, %v1706, %v1708
        %v1758 = vsel %vm1723, %v1708, %v1710
        %v1759 = vsel %vm1723, %v1712, %v1714
        %v1760 = vsel %vm1723, %v1714, %v1716
        %v1761 = vsel %vm1723, %v1716, %v1718
        %v1762 = vsel %vm1723, %v1718, %v1720
        %v1763 = vsel %vm1723, %v1720, %v1722
        %v1812 = vadd.f32 %v1451, %v1724
        %v1813 = vadd.f32 %v1452, %v1725
        %v1814 = vadd.f32 %v1453, %v1726
        %v1815 = vadd.f32 %v1454, %v1727
        %v1816 = vadd.f32 %v1455, %v1728
        %v1817 = vadd.f32 %v1456, %v1638
        %v1818 = vadd.f32 %v1457, %v1729
        %v1819 = vadd.f32 %v1458, %v1730
        %v1820 = vadd.f32 %v1459, %v1731
        %v1821 = vadd.f32 %v1460, %v1732
        %v1822 = vadd.f32 %v1461, %v1733
        %v1823 = vadd.f32 %v1462, %v1650
        %v1824 = vadd.f32 %v1463, %v1734
        %v1825 = vadd.f32 %v1464, %v1735
        %v1826 = vadd.f32 %v1465, %v1736
        %v1827 = vadd.f32 %v1466, %v1737
        %v1828 = vadd.f32 %v1467, %v1738
        %v1829 = vadd.f32 %v1468, %v1662
        %v1830 = vadd.f32 %v1469, %v1739
        %v1831 = vadd.f32 %v1470, %v1740
        %v1832 = vadd.f32 %v1471, %v1741
        %v1833 = vadd.f32 %v1472, %v1742
        %v1834 = vadd.f32 %v1473, %v1743
        %v1835 = vadd.f32 %v1474, %v1674
        %v1836 = vadd.f32 %v1475, %v1744
        %v1837 = vadd.f32 %v1476, %v1745
        %v1838 = vadd.f32 %v1477, %v1746
        %v1839 = vadd.f32 %v1478, %v1747
        %v1840 = vadd.f32 %v1479, %v1748
        %v1841 = vadd.f32 %v1480, %v1686
        %v1842 = vadd.f32 %v1481, %v1749
        %v1843 = vadd.f32 %v1482, %v1750
        %v1844 = vadd.f32 %v1483, %v1751
        %v1845 = vadd.f32 %v1484, %v1752
        %v1846 = vadd.f32 %v1485, %v1753
        %v1847 = vadd.f32 %v1486, %v1698
        %v1848 = vadd.f32 %v1487, %v1754
        %v1849 = vadd.f32 %v1488, %v1755
        %v1850 = vadd.f32 %v1489, %v1756
        %v1851 = vadd.f32 %v1490, %v1757
        %v1852 = vadd.f32 %v1491, %v1758
        %v1853 = vadd.f32 %v1492, %v1710
        %v1854 = vadd.f32 %v1493, %v1759
        %v1855 = vadd.f32 %v1494, %v1760
        %v1856 = vadd.f32 %v1495, %v1761
        %v1857 = vadd.f32 %v1496, %v1762
        %v1858 = vadd.f32 %v1497, %v1763
        %v1859 = vadd.f32 %v1498, %v1722
        %1860 = vset.pattern.permute.xlu0 5
        %1861 = vperm.xlu0 %1860, %v289
        %v1862 = vpop.permute.xlu0 %1861
        %1864 = vset.pattern.permute.xlu0 5
        %1865 = vperm.xlu0 %1864, %v290
        %v1866 = vpop.permute.xlu0 %1865
        %1868 = vset.pattern.permute.xlu0 5
        %1869 = vperm.xlu0 %1868, %v291
        %v1870 = vpop.permute.xlu0 %1869
        %1872 = vset.pattern.permute.xlu0 5
        %1873 = vperm.xlu0 %1872, %v292
        %v1874 = vpop.permute.xlu0 %1873
        %1876 = vset.pattern.permute.xlu0 5
        %1877 = vperm.xlu0 %1876, %v293
        %v1878 = vpop.permute.xlu0 %1877
        %1880 = vset.pattern.permute.xlu0 5
        %1881 = vperm.xlu0 %1880, %v294
        %v1882 = vpop.permute.xlu0 %1881
        %1884 = vset.pattern.permute.xlu0 5
        %1885 = vperm.xlu0 %1884, %v295
        %v1886 = vpop.permute.xlu0 %1885
        %1888 = vset.pattern.permute.xlu0 5
        %1889 = vperm.xlu0 %1888, %v296
        %v1890 = vpop.permute.xlu0 %1889
        %v1892 = vmul.f32 %v1862, %v341
        %v1893 = vmul.f32 %v1862, %v345
        %v1894 = vmul.f32 %v1862, %v349
        %v1895 = vmul.f32 %v1862, %v353
        %v1896 = vmul.f32 %v1862, %v357
        %v1897 = vmul.f32 %v1862, %v361
        %v1898 = vmul.f32 %v1866, %v341
        %v1899 = vmul.f32 %v1866, %v345
        %v1900 = vmul.f32 %v1866, %v349
        %v1901 = vmul.f32 %v1866, %v353
        %v1902 = vmul.f32 %v1866, %v357
        %v1903 = vmul.f32 %v1866, %v361
        %v1904 = vmul.f32 %v1870, %v341
        %v1905 = vmul.f32 %v1870, %v345
        %v1906 = vmul.f32 %v1870, %v349
        %v1907 = vmul.f32 %v1870, %v353
        %v1908 = vmul.f32 %v1870, %v357
        %v1909 = vmul.f32 %v1870, %v361
        %v1910 = vmul.f32 %v1874, %v341
        %v1911 = vmul.f32 %v1874, %v345
        %v1912 = vmul.f32 %v1874, %v349
        %v1913 = vmul.f32 %v1874, %v353
        %v1914 = vmul.f32 %v1874, %v357
        %v1915 = vmul.f32 %v1874, %v361
        %v1916 = vmul.f32 %v1878, %v341
        %v1917 = vmul.f32 %v1878, %v345
        %v1918 = vmul.f32 %v1878, %v349
        %v1919 = vmul.f32 %v1878, %v353
        %v1920 = vmul.f32 %v1878, %v357
        %v1921 = vmul.f32 %v1878, %v361
        %v1922 = vmul.f32 %v1882, %v341
        %v1923 = vmul.f32 %v1882, %v345
        %v1924 = vmul.f32 %v1882, %v349
        %v1925 = vmul.f32 %v1882, %v353
        %v1926 = vmul.f32 %v1882, %v357
        %v1927 = vmul.f32 %v1882, %v361
        %v1928 = vmul.f32 %v1886, %v341
        %v1929 = vmul.f32 %v1886, %v345
        %v1930 = vmul.f32 %v1886, %v349
        %v1931 = vmul.f32 %v1886, %v353
        %v1932 = vmul.f32 %v1886, %v357
        %v1933 = vmul.f32 %v1886, %v361
        %v1934 = vmul.f32 %v1890, %v341
        %v1935 = vmul.f32 %v1890, %v345
        %v1936 = vmul.f32 %v1890, %v349
        %v1937 = vmul.f32 %v1890, %v353
        %v1938 = vmul.f32 %v1890, %v357
        %v1939 = vmul.f32 %v1890, %v361
        %1988 = vrot.lane.b32.xlu0 %v1892, 108
        %v1989 = vpop.permute.xlu0 %1988
        %1990 = vrot.lane.b32.xlu0 %v1893, 108
        %v1991 = vpop.permute.xlu0 %1990
        %1992 = vrot.lane.b32.xlu0 %v1894, 108
        %v1993 = vpop.permute.xlu0 %1992
        %1994 = vrot.lane.b32.xlu0 %v1895, 108
        %v1995 = vpop.permute.xlu0 %1994
        %1996 = vrot.lane.b32.xlu0 %v1896, 108
        %v1997 = vpop.permute.xlu0 %1996
        %1998 = vrot.lane.b32.xlu0 %v1897, 108
        %v1999 = vpop.permute.xlu0 %1998
        %2000 = vrot.lane.b32.xlu0 %v1898, 108
        %v2001 = vpop.permute.xlu0 %2000
        %2002 = vrot.lane.b32.xlu0 %v1899, 108
        %v2003 = vpop.permute.xlu0 %2002
        %2004 = vrot.lane.b32.xlu0 %v1900, 108
        %v2005 = vpop.permute.xlu0 %2004
        %2006 = vrot.lane.b32.xlu0 %v1901, 108
        %v2007 = vpop.permute.xlu0 %2006
        %2008 = vrot.lane.b32.xlu0 %v1902, 108
        %v2009 = vpop.permute.xlu0 %2008
        %2010 = vrot.lane.b32.xlu0 %v1903, 108
        %v2011 = vpop.permute.xlu0 %2010
        %2012 = vrot.lane.b32.xlu0 %v1904, 108
        %v2013 = vpop.permute.xlu0 %2012
        %2014 = vrot.lane.b32.xlu0 %v1905, 108
        %v2015 = vpop.permute.xlu0 %2014
        %2016 = vrot.lane.b32.xlu0 %v1906, 108
        %v2017 = vpop.permute.xlu0 %2016
        %2018 = vrot.lane.b32.xlu0 %v1907, 108
        %v2019 = vpop.permute.xlu0 %2018
        %2020 = vrot.lane.b32.xlu0 %v1908, 108
        %v2021 = vpop.permute.xlu0 %2020
        %2022 = vrot.lane.b32.xlu0 %v1909, 108
        %v2023 = vpop.permute.xlu0 %2022
        %2024 = vrot.lane.b32.xlu0 %v1910, 108
        %v2025 = vpop.permute.xlu0 %2024
        %2026 = vrot.lane.b32.xlu0 %v1911, 108
        %v2027 = vpop.permute.xlu0 %2026
        %2028 = vrot.lane.b32.xlu0 %v1912, 108
        %v2029 = vpop.permute.xlu0 %2028
        %2030 = vrot.lane.b32.xlu0 %v1913, 108
        %v2031 = vpop.permute.xlu0 %2030
        %2032 = vrot.lane.b32.xlu0 %v1914, 108
        %v2033 = vpop.permute.xlu0 %2032
        %2034 = vrot.lane.b32.xlu0 %v1915, 108
        %v2035 = vpop.permute.xlu0 %2034
        %2036 = vrot.lane.b32.xlu0 %v1916, 108
        %v2037 = vpop.permute.xlu0 %2036
        %2038 = vrot.lane.b32.xlu0 %v1917, 108
        %v2039 = vpop.permute.xlu0 %2038
        %2040 = vrot.lane.b32.xlu0 %v1918, 108
        %v2041 = vpop.permute.xlu0 %2040
        %2042 = vrot.lane.b32.xlu0 %v1919, 108
        %v2043 = vpop.permute.xlu0 %2042
        %2044 = vrot.lane.b32.xlu0 %v1920, 108
        %v2045 = vpop.permute.xlu0 %2044
        %2046 = vrot.lane.b32.xlu0 %v1921, 108
        %v2047 = vpop.permute.xlu0 %2046
        %2048 = vrot.lane.b32.xlu0 %v1922, 108
        %v2049 = vpop.permute.xlu0 %2048
        %2050 = vrot.lane.b32.xlu0 %v1923, 108
        %v2051 = vpop.permute.xlu0 %2050
        %2052 = vrot.lane.b32.xlu0 %v1924, 108
        %v2053 = vpop.permute.xlu0 %2052
        %2054 = vrot.lane.b32.xlu0 %v1925, 108
        %v2055 = vpop.permute.xlu0 %2054
        %2056 = vrot.lane.b32.xlu0 %v1926, 108
        %v2057 = vpop.permute.xlu0 %2056
        %2058 = vrot.lane.b32.xlu0 %v1927, 108
        %v2059 = vpop.permute.xlu0 %2058
        %2060 = vrot.lane.b32.xlu0 %v1928, 108
        %v2061 = vpop.permute.xlu0 %2060
        %2062 = vrot.lane.b32.xlu0 %v1929, 108
        %v2063 = vpop.permute.xlu0 %2062
        %2064 = vrot.lane.b32.xlu0 %v1930, 108
        %v2065 = vpop.permute.xlu0 %2064
        %2066 = vrot.lane.b32.xlu0 %v1931, 108
        %v2067 = vpop.permute.xlu0 %2066
        %2068 = vrot.lane.b32.xlu0 %v1932, 108
        %v2069 = vpop.permute.xlu0 %2068
        %2070 = vrot.lane.b32.xlu0 %v1933, 108
        %v2071 = vpop.permute.xlu0 %2070
        %2072 = vrot.lane.b32.xlu0 %v1934, 108
        %v2073 = vpop.permute.xlu0 %2072
        %2074 = vrot.lane.b32.xlu0 %v1935, 108
        %v2075 = vpop.permute.xlu0 %2074
        %2076 = vrot.lane.b32.xlu0 %v1936, 108
        %v2077 = vpop.permute.xlu0 %2076
        %2078 = vrot.lane.b32.xlu0 %v1937, 108
        %v2079 = vpop.permute.xlu0 %2078
        %2080 = vrot.lane.b32.xlu0 %v1938, 108
        %v2081 = vpop.permute.xlu0 %2080
        %2082 = vrot.lane.b32.xlu0 %v1939, 108
        %v2083 = vpop.permute.xlu0 %2082
        %vm2084 = vcmask 883712
        %v2085 = vsel %vm2084, %v1989, %v1991
        %v2086 = vsel %vm2084, %v1991, %v1993
        %v2087 = vsel %vm2084, %v1993, %v1995
        %v2088 = vsel %vm2084, %v1995, %v1997
        %v2089 = vsel %vm2084, %v1997, %v1999
        %v2090 = vsel %vm2084, %v2001, %v2003
        %v2091 = vsel %vm2084, %v2003, %v2005
        %v2092 = vsel %vm2084, %v2005, %v2007
        %v2093 = vsel %vm2084, %v2007, %v2009
        %v2094 = vsel %vm2084, %v2009, %v2011
        %v2095 = vsel %vm2084, %v2013, %v2015
        %v2096 = vsel %vm2084, %v2015, %v2017
        %v2097 = vsel %vm2084, %v2017, %v2019
        %v2098 = vsel %vm2084, %v2019, %v2021
        %v2099 = vsel %vm2084, %v2021, %v2023
        %v2100 = vsel %vm2084, %v2025, %v2027
        %v2101 = vsel %vm2084, %v2027, %v2029
        %v2102 = vsel %vm2084, %v2029, %v2031
        %v2103 = vsel %vm2084, %v2031, %v2033
        %v2104 = vsel %vm2084, %v2033, %v2035
        %v2105 = vsel %vm2084, %v2037, %v2039
        %v2106 = vsel %vm2084, %v2039, %v2041
        %v2107 = vsel %vm2084, %v2041, %v2043
        %v2108 = vsel %vm2084, %v2043, %v2045
        %v2109 = vsel %vm2084, %v2045, %v2047
        %v2110 = vsel %vm2084, %v2049, %v2051
        %v2111 = vsel %vm2084, %v2051, %v2053
        %v2112 = vsel %vm2084, %v2053, %v2055
        %v2113 = vsel %vm2084, %v2055, %v2057
        %v2114 = vsel %vm2084, %v2057, %v2059
        %v2115 = vsel %vm2084, %v2061, %v2063
        %v2116 = vsel %vm2084, %v2063, %v2065
        %v2117 = vsel %vm2084, %v2065, %v2067
        %v2118 = vsel %vm2084, %v2067, %v2069
        %v2119 = vsel %vm2084, %v2069, %v2071
        %v2120 = vsel %vm2084, %v2073, %v2075
        %v2121 = vsel %vm2084, %v2075, %v2077
        %v2122 = vsel %vm2084, %v2077, %v2079
        %v2123 = vsel %vm2084, %v2079, %v2081
        %v2124 = vsel %vm2084, %v2081, %v2083
        %v2173 = vadd.f32 %v1812, %v2085
        %v2174 = vadd.f32 %v1813, %v2086
        %v2175 = vadd.f32 %v1814, %v2087
        %v2176 = vadd.f32 %v1815, %v2088
        %v2177 = vadd.f32 %v1816, %v2089
        %v2178 = vadd.f32 %v1817, %v1999
        %v2179 = vadd.f32 %v1818, %v2090
        %v2180 = vadd.f32 %v1819, %v2091
        %v2181 = vadd.f32 %v1820, %v2092
        %v2182 = vadd.f32 %v1821, %v2093
        %v2183 = vadd.f32 %v1822, %v2094
        %v2184 = vadd.f32 %v1823, %v2011
        %v2185 = vadd.f32 %v1824, %v2095
        %v2186 = vadd.f32 %v1825, %v2096
        %v2187 = vadd.f32 %v1826, %v2097
        %v2188 = vadd.f32 %v1827, %v2098
        %v2189 = vadd.f32 %v1828, %v2099
        %v2190 = vadd.f32 %v1829, %v2023
        %v2191 = vadd.f32 %v1830, %v2100
        %v2192 = vadd.f32 %v1831, %v2101
        %v2193 = vadd.f32 %v1832, %v2102
        %v2194 = vadd.f32 %v1833, %v2103
        %v2195 = vadd.f32 %v1834, %v2104
        %v2196 = vadd.f32 %v1835, %v2035
        %v2197 = vadd.f32 %v1836, %v2105
        %v2198 = vadd.f32 %v1837, %v2106
        %v2199 = vadd.f32 %v1838, %v2107
        %v2200 = vadd.f32 %v1839, %v2108
        %v2201 = vadd.f32 %v1840, %v2109
        %v2202 = vadd.f32 %v1841, %v2047
        %v2203 = vadd.f32 %v1842, %v2110
        %v2204 = vadd.f32 %v1843, %v2111
        %v2205 = vadd.f32 %v1844, %v2112
        %v2206 = vadd.f32 %v1845, %v2113
        %v2207 = vadd.f32 %v1846, %v2114
        %v2208 = vadd.f32 %v1847, %v2059
        %v2209 = vadd.f32 %v1848, %v2115
        %v2210 = vadd.f32 %v1849, %v2116
        %v2211 = vadd.f32 %v1850, %v2117
        %v2212 = vadd.f32 %v1851, %v2118
        %v2213 = vadd.f32 %v1852, %v2119
        %v2214 = vadd.f32 %v1853, %v2071
        %v2215 = vadd.f32 %v1854, %v2120
        %v2216 = vadd.f32 %v1855, %v2121
        %v2217 = vadd.f32 %v1856, %v2122
        %v2218 = vadd.f32 %v1857, %v2123
        %v2219 = vadd.f32 %v1858, %v2124
        %v2220 = vadd.f32 %v1859, %v2083
        %2221 = vset.pattern.permute.xlu0 6
        %2222 = vperm.xlu0 %2221, %v289
        %v2223 = vpop.permute.xlu0 %2222
        %2225 = vset.pattern.permute.xlu0 6
        %2226 = vperm.xlu0 %2225, %v290
        %v2227 = vpop.permute.xlu0 %2226
        %2229 = vset.pattern.permute.xlu0 6
        %2230 = vperm.xlu0 %2229, %v291
        %v2231 = vpop.permute.xlu0 %2230
        %2233 = vset.pattern.permute.xlu0 6
        %2234 = vperm.xlu0 %2233, %v292
        %v2235 = vpop.permute.xlu0 %2234
        %2237 = vset.pattern.permute.xlu0 6
        %2238 = vperm.xlu0 %2237, %v293
        %v2239 = vpop.permute.xlu0 %2238
        %2241 = vset.pattern.permute.xlu0 6
        %2242 = vperm.xlu0 %2241, %v294
        %v2243 = vpop.permute.xlu0 %2242
        %2245 = vset.pattern.permute.xlu0 6
        %2246 = vperm.xlu0 %2245, %v295
        %v2247 = vpop.permute.xlu0 %2246
        %2249 = vset.pattern.permute.xlu0 6
        %2250 = vperm.xlu0 %2249, %v296
        %v2251 = vpop.permute.xlu0 %2250
        %v2253 = vmul.f32 %v2223, %v341
        %v2254 = vmul.f32 %v2223, %v345
        %v2255 = vmul.f32 %v2223, %v349
        %v2256 = vmul.f32 %v2223, %v353
        %v2257 = vmul.f32 %v2223, %v357
        %v2258 = vmul.f32 %v2223, %v361
        %v2259 = vmul.f32 %v2227, %v341
        %v2260 = vmul.f32 %v2227, %v345
        %v2261 = vmul.f32 %v2227, %v349
        %v2262 = vmul.f32 %v2227, %v353
        %v2263 = vmul.f32 %v2227, %v357
        %v2264 = vmul.f32 %v2227, %v361
        %v2265 = vmul.f32 %v2231, %v341
        %v2266 = vmul.f32 %v2231, %v345
        %v2267 = vmul.f32 %v2231, %v349
        %v2268 = vmul.f32 %v2231, %v353
        %v2269 = vmul.f32 %v2231, %v357
        %v2270 = vmul.f32 %v2231, %v361
        %v2271 = vmul.f32 %v2235, %v341
        %v2272 = vmul.f32 %v2235, %v345
        %v2273 = vmul.f32 %v2235, %v349
        %v2274 = vmul.f32 %v2235, %v353
        %v2275 = vmul.f32 %v2235, %v357
        %v2276 = vmul.f32 %v2235, %v361
        %v2277 = vmul.f32 %v2239, %v341
        %v2278 = vmul.f32 %v2239, %v345
        %v2279 = vmul.f32 %v2239, %v349
        %v2280 = vmul.f32 %v2239, %v353
        %v2281 = vmul.f32 %v2239, %v357
        %v2282 = vmul.f32 %v2239, %v361
        %v2283 = vmul.f32 %v2243, %v341
        %v2284 = vmul.f32 %v2243, %v345
        %v2285 = vmul.f32 %v2243, %v349
        %v2286 = vmul.f32 %v2243, %v353
        %v2287 = vmul.f32 %v2243, %v357
        %v2288 = vmul.f32 %v2243, %v361
        %v2289 = vmul.f32 %v2247, %v341
        %v2290 = vmul.f32 %v2247, %v345
        %v2291 = vmul.f32 %v2247, %v349
        %v2292 = vmul.f32 %v2247, %v353
        %v2293 = vmul.f32 %v2247, %v357
        %v2294 = vmul.f32 %v2247, %v361
        %v2295 = vmul.f32 %v2251, %v341
        %v2296 = vmul.f32 %v2251, %v345
        %v2297 = vmul.f32 %v2251, %v349
        %v2298 = vmul.f32 %v2251, %v353
        %v2299 = vmul.f32 %v2251, %v357
        %v2300 = vmul.f32 %v2251, %v361
        %2349 = vrot.lane.b32.xlu0 %v2253, 92
        %v2350 = vpop.permute.xlu0 %2349
        %2351 = vrot.lane.b32.xlu0 %v2254, 92
        %v2352 = vpop.permute.xlu0 %2351
        %2353 = vrot.lane.b32.xlu0 %v2255, 92
        %v2354 = vpop.permute.xlu0 %2353
        %2355 = vrot.lane.b32.xlu0 %v2256, 92
        %v2356 = vpop.permute.xlu0 %2355
        %2357 = vrot.lane.b32.xlu0 %v2257, 92
        %v2358 = vpop.permute.xlu0 %2357
        %2359 = vrot.lane.b32.xlu0 %v2258, 92
        %v2360 = vpop.permute.xlu0 %2359
        %2361 = vrot.lane.b32.xlu0 %v2259, 92
        %v2362 = vpop.permute.xlu0 %2361
        %2363 = vrot.lane.b32.xlu0 %v2260, 92
        %v2364 = vpop.permute.xlu0 %2363
        %2365 = vrot.lane.b32.xlu0 %v2261, 92
        %v2366 = vpop.permute.xlu0 %2365
        %2367 = vrot.lane.b32.xlu0 %v2262, 92
        %v2368 = vpop.permute.xlu0 %2367
        %2369 = vrot.lane.b32.xlu0 %v2263, 92
        %v2370 = vpop.permute.xlu0 %2369
        %2371 = vrot.lane.b32.xlu0 %v2264, 92
        %v2372 = vpop.permute.xlu0 %2371
        %2373 = vrot.lane.b32.xlu0 %v2265, 92
        %v2374 = vpop.permute.xlu0 %2373
        %2375 = vrot.lane.b32.xlu0 %v2266, 92
        %v2376 = vpop.permute.xlu0 %2375
        %2377 = vrot.lane.b32.xlu0 %v2267, 92
        %v2378 = vpop.permute.xlu0 %2377
        %2379 = vrot.lane.b32.xlu0 %v2268, 92
        %v2380 = vpop.permute.xlu0 %2379
        %2381 = vrot.lane.b32.xlu0 %v2269, 92
        %v2382 = vpop.permute.xlu0 %2381
        %2383 = vrot.lane.b32.xlu0 %v2270, 92
        %v2384 = vpop.permute.xlu0 %2383
        %2385 = vrot.lane.b32.xlu0 %v2271, 92
        %v2386 = vpop.permute.xlu0 %2385
        %2387 = vrot.lane.b32.xlu0 %v2272, 92
        %v2388 = vpop.permute.xlu0 %2387
        %2389 = vrot.lane.b32.xlu0 %v2273, 92
        %v2390 = vpop.permute.xlu0 %2389
        %2391 = vrot.lane.b32.xlu0 %v2274, 92
        %v2392 = vpop.permute.xlu0 %2391
        %2393 = vrot.lane.b32.xlu0 %v2275, 92
        %v2394 = vpop.permute.xlu0 %2393
        %2395 = vrot.lane.b32.xlu0 %v2276, 92
        %v2396 = vpop.permute.xlu0 %2395
        %2397 = vrot.lane.b32.xlu0 %v2277, 92
        %v2398 = vpop.permute.xlu0 %2397
        %2399 = vrot.lane.b32.xlu0 %v2278, 92
        %v2400 = vpop.permute.xlu0 %2399
        %2401 = vrot.lane.b32.xlu0 %v2279, 92
        %v2402 = vpop.permute.xlu0 %2401
        %2403 = vrot.lane.b32.xlu0 %v2280, 92
        %v2404 = vpop.permute.xlu0 %2403
        %2405 = vrot.lane.b32.xlu0 %v2281, 92
        %v2406 = vpop.permute.xlu0 %2405
        %2407 = vrot.lane.b32.xlu0 %v2282, 92
        %v2408 = vpop.permute.xlu0 %2407
        %2409 = vrot.lane.b32.xlu0 %v2283, 92
        %v2410 = vpop.permute.xlu0 %2409
        %2411 = vrot.lane.b32.xlu0 %v2284, 92
        %v2412 = vpop.permute.xlu0 %2411
        %2413 = vrot.lane.b32.xlu0 %v2285, 92
        %v2414 = vpop.permute.xlu0 %2413
        %2415 = vrot.lane.b32.xlu0 %v2286, 92
        %v2416 = vpop.permute.xlu0 %2415
        %2417 = vrot.lane.b32.xlu0 %v2287, 92
        %v2418 = vpop.permute.xlu0 %2417
        %2419 = vrot.lane.b32.xlu0 %v2288, 92
        %v2420 = vpop.permute.xlu0 %2419
        %2421 = vrot.lane.b32.xlu0 %v2289, 92
        %v2422 = vpop.permute.xlu0 %2421
        %2423 = vrot.lane.b32.xlu0 %v2290, 92
        %v2424 = vpop.permute.xlu0 %2423
        %2425 = vrot.lane.b32.xlu0 %v2291, 92
        %v2426 = vpop.permute.xlu0 %2425
        %2427 = vrot.lane.b32.xlu0 %v2292, 92
        %v2428 = vpop.permute.xlu0 %2427
        %2429 = vrot.lane.b32.xlu0 %v2293, 92
        %v2430 = vpop.permute.xlu0 %2429
        %2431 = vrot.lane.b32.xlu0 %v2294, 92
        %v2432 = vpop.permute.xlu0 %2431
        %2433 = vrot.lane.b32.xlu0 %v2295, 92
        %v2434 = vpop.permute.xlu0 %2433
        %2435 = vrot.lane.b32.xlu0 %v2296, 92
        %v2436 = vpop.permute.xlu0 %2435
        %2437 = vrot.lane.b32.xlu0 %v2297, 92
        %v2438 = vpop.permute.xlu0 %2437
        %2439 = vrot.lane.b32.xlu0 %v2298, 92
        %v2440 = vpop.permute.xlu0 %2439
        %2441 = vrot.lane.b32.xlu0 %v2299, 92
        %v2442 = vpop.permute.xlu0 %2441
        %2443 = vrot.lane.b32.xlu0 %v2300, 92
        %v2444 = vpop.permute.xlu0 %2443
        %vm2445 = vcmask 752640
        %v2446 = vsel %vm2445, %v2350, %v2352
        %v2447 = vsel %vm2445, %v2352, %v2354
        %v2448 = vsel %vm2445, %v2354, %v2356
        %v2449 = vsel %vm2445, %v2356, %v2358
        %v2450 = vsel %vm2445, %v2358, %v2360
        %v2451 = vsel %vm2445, %v2362, %v2364
        %v2452 = vsel %vm2445, %v2364, %v2366
        %v2453 = vsel %vm2445, %v2366, %v2368
        %v2454 = vsel %vm2445, %v2368, %v2370
        %v2455 = vsel %vm2445, %v2370, %v2372
        %v2456 = vsel %vm2445, %v2374, %v2376
        %v2457 = vsel %vm2445, %v2376, %v2378
        %v2458 = vsel %vm2445, %v2378, %v2380
        %v2459 = vsel %vm2445, %v2380, %v2382
        %v2460 = vsel %vm2445, %v2382, %v2384
        %v2461 = vsel %vm2445, %v2386, %v2388
        %v2462 = vsel %vm2445, %v2388, %v2390
        %v2463 = vsel %vm2445, %v2390, %v2392
        %v2464 = vsel %vm2445, %v2392, %v2394
        %v2465 = vsel %vm2445, %v2394, %v2396
        %v2466 = vsel %vm2445, %v2398, %v2400
        %v2467 = vsel %vm2445, %v2400, %v2402
        %v2468 = vsel %vm2445, %v2402, %v2404
        %v2469 = vsel %vm2445, %v2404, %v2406
        %v2470 = vsel %vm2445, %v2406, %v2408
        %v2471 = vsel %vm2445, %v2410, %v2412
        %v2472 = vsel %vm2445, %v2412, %v2414
        %v2473 = vsel %vm2445, %v2414, %v2416
        %v2474 = vsel %vm2445, %v2416, %v2418
        %v2475 = vsel %vm2445, %v2418, %v2420
        %v2476 = vsel %vm2445, %v2422, %v2424
        %v2477 = vsel %vm2445, %v2424, %v2426
        %v2478 = vsel %vm2445, %v2426, %v2428
        %v2479 = vsel %vm2445, %v2428, %v2430
        %v2480 = vsel %vm2445, %v2430, %v2432
        %v2481 = vsel %vm2445, %v2434, %v2436
        %v2482 = vsel %vm2445, %v2436, %v2438
        %v2483 = vsel %vm2445, %v2438, %v2440
        %v2484 = vsel %vm2445, %v2440, %v2442
        %v2485 = vsel %vm2445, %v2442, %v2444
        %v2534 = vadd.f32 %v2173, %v2446
        %v2535 = vadd.f32 %v2174, %v2447
        %v2536 = vadd.f32 %v2175, %v2448
        %v2537 = vadd.f32 %v2176, %v2449
        %v2538 = vadd.f32 %v2177, %v2450
        %v2539 = vadd.f32 %v2178, %v2360
        %v2540 = vadd.f32 %v2179, %v2451
        %v2541 = vadd.f32 %v2180, %v2452
        %v2542 = vadd.f32 %v2181, %v2453
        %v2543 = vadd.f32 %v2182, %v2454
        %v2544 = vadd.f32 %v2183, %v2455
        %v2545 = vadd.f32 %v2184, %v2372
        %v2546 = vadd.f32 %v2185, %v2456
        %v2547 = vadd.f32 %v2186, %v2457
        %v2548 = vadd.f32 %v2187, %v2458
        %v2549 = vadd.f32 %v2188, %v2459
        %v2550 = vadd.f32 %v2189, %v2460
        %v2551 = vadd.f32 %v2190, %v2384
        %v2552 = vadd.f32 %v2191, %v2461
        %v2553 = vadd.f32 %v2192, %v2462
        %v2554 = vadd.f32 %v2193, %v2463
        %v2555 = vadd.f32 %v2194, %v2464
        %v2556 = vadd.f32 %v2195, %v2465
        %v2557 = vadd.f32 %v2196, %v2396
        %v2558 = vadd.f32 %v2197, %v2466
        %v2559 = vadd.f32 %v2198, %v2467
        %v2560 = vadd.f32 %v2199, %v2468
        %v2561 = vadd.f32 %v2200, %v2469
        %v2562 = vadd.f32 %v2201, %v2470
        %v2563 = vadd.f32 %v2202, %v2408
        %v2564 = vadd.f32 %v2203, %v2471
        %v2565 = vadd.f32 %v2204, %v2472
        %v2566 = vadd.f32 %v2205, %v2473
        %v2567 = vadd.f32 %v2206, %v2474
        %v2568 = vadd.f32 %v2207, %v2475
        %v2569 = vadd.f32 %v2208, %v2420
        %v2570 = vadd.f32 %v2209, %v2476
        %v2571 = vadd.f32 %v2210, %v2477
        %v2572 = vadd.f32 %v2211, %v2478
        %v2573 = vadd.f32 %v2212, %v2479
        %v2574 = vadd.f32 %v2213, %v2480
        %v2575 = vadd.f32 %v2214, %v2432
        %v2576 = vadd.f32 %v2215, %v2481
        %v2577 = vadd.f32 %v2216, %v2482
        %v2578 = vadd.f32 %v2217, %v2483
        %v2579 = vadd.f32 %v2218, %v2484
        %v2580 = vadd.f32 %v2219, %v2485
        %v2581 = vadd.f32 %v2220, %v2444
        %2582 = vset.pattern.permute.xlu0 7
        %2583 = vperm.xlu0 %2582, %v289
        %v2584 = vpop.permute.xlu0 %2583
        %2586 = vset.pattern.permute.xlu0 7
        %2587 = vperm.xlu0 %2586, %v290
        %v2588 = vpop.permute.xlu0 %2587
        %2590 = vset.pattern.permute.xlu0 7
        %2591 = vperm.xlu0 %2590, %v291
        %v2592 = vpop.permute.xlu0 %2591
        %2594 = vset.pattern.permute.xlu0 7
        %2595 = vperm.xlu0 %2594, %v292
        %v2596 = vpop.permute.xlu0 %2595
        %2598 = vset.pattern.permute.xlu0 7
        %2599 = vperm.xlu0 %2598, %v293
        %v2600 = vpop.permute.xlu0 %2599
        %2602 = vset.pattern.permute.xlu0 7
        %2603 = vperm.xlu0 %2602, %v294
        %v2604 = vpop.permute.xlu0 %2603
        %2606 = vset.pattern.permute.xlu0 7
        %2607 = vperm.xlu0 %2606, %v295
        %v2608 = vpop.permute.xlu0 %2607
        %2610 = vset.pattern.permute.xlu0 7
        %2611 = vperm.xlu0 %2610, %v296
        %v2612 = vpop.permute.xlu0 %2611
        %v2614 = vmul.f32 %v2584, %v341
        %v2615 = vmul.f32 %v2584, %v345
        %v2616 = vmul.f32 %v2584, %v349
        %v2617 = vmul.f32 %v2584, %v353
        %v2618 = vmul.f32 %v2584, %v357
        %v2619 = vmul.f32 %v2584, %v361
        %v2620 = vmul.f32 %v2588, %v341
        %v2621 = vmul.f32 %v2588, %v345
        %v2622 = vmul.f32 %v2588, %v349
        %v2623 = vmul.f32 %v2588, %v353
        %v2624 = vmul.f32 %v2588, %v357
        %v2625 = vmul.f32 %v2588, %v361
        %v2626 = vmul.f32 %v2592, %v341
        %v2627 = vmul.f32 %v2592, %v345
        %v2628 = vmul.f32 %v2592, %v349
        %v2629 = vmul.f32 %v2592, %v353
        %v2630 = vmul.f32 %v2592, %v357
        %v2631 = vmul.f32 %v2592, %v361
        %v2632 = vmul.f32 %v2596, %v341
        %v2633 = vmul.f32 %v2596, %v345
        %v2634 = vmul.f32 %v2596, %v349
        %v2635 = vmul.f32 %v2596, %v353
        %v2636 = vmul.f32 %v2596, %v357
        %v2637 = vmul.f32 %v2596, %v361
        %v2638 = vmul.f32 %v2600, %v341
        %v2639 = vmul.f32 %v2600, %v345
        %v2640 = vmul.f32 %v2600, %v349
        %v2641 = vmul.f32 %v2600, %v353
        %v2642 = vmul.f32 %v2600, %v357
        %v2643 = vmul.f32 %v2600, %v361
        %v2644 = vmul.f32 %v2604, %v341
        %v2645 = vmul.f32 %v2604, %v345
        %v2646 = vmul.f32 %v2604, %v349
        %v2647 = vmul.f32 %v2604, %v353
        %v2648 = vmul.f32 %v2604, %v357
        %v2649 = vmul.f32 %v2604, %v361
        %v2650 = vmul.f32 %v2608, %v341
        %v2651 = vmul.f32 %v2608, %v345
        %v2652 = vmul.f32 %v2608, %v349
        %v2653 = vmul.f32 %v2608, %v353
        %v2654 = vmul.f32 %v2608, %v357
        %v2655 = vmul.f32 %v2608, %v361
        %v2656 = vmul.f32 %v2612, %v341
        %v2657 = vmul.f32 %v2612, %v345
        %v2658 = vmul.f32 %v2612, %v349
        %v2659 = vmul.f32 %v2612, %v353
        %v2660 = vmul.f32 %v2612, %v357
        %v2661 = vmul.f32 %v2612, %v361
        %2710 = vrot.lane.b32.xlu0 %v2614, 91
        %v2711 = vpop.permute.xlu0 %2710
        %2712 = vrot.lane.b32.xlu0 %v2615, 91
        %v2713 = vpop.permute.xlu0 %2712
        %2714 = vrot.lane.b32.xlu0 %v2616, 91
        %v2715 = vpop.permute.xlu0 %2714
        %2716 = vrot.lane.b32.xlu0 %v2617, 91
        %v2717 = vpop.permute.xlu0 %2716
        %2718 = vrot.lane.b32.xlu0 %v2618, 91
        %v2719 = vpop.permute.xlu0 %2718
        %2720 = vrot.lane.b32.xlu0 %v2619, 91
        %v2721 = vpop.permute.xlu0 %2720
        %2722 = vrot.lane.b32.xlu0 %v2620, 91
        %v2723 = vpop.permute.xlu0 %2722
        %2724 = vrot.lane.b32.xlu0 %v2621, 91
        %v2725 = vpop.permute.xlu0 %2724
        %2726 = vrot.lane.b32.xlu0 %v2622, 91
        %v2727 = vpop.permute.xlu0 %2726
        %2728 = vrot.lane.b32.xlu0 %v2623, 91
        %v2729 = vpop.permute.xlu0 %2728
        %2730 = vrot.lane.b32.xlu0 %v2624, 91
        %v2731 = vpop.permute.xlu0 %2730
        %2732 = vrot.lane.b32.xlu0 %v2625, 91
        %v2733 = vpop.permute.xlu0 %2732
        %2734 = vrot.lane.b32.xlu0 %v2626, 91
        %v2735 = vpop.permute.xlu0 %2734
        %2736 = vrot.lane.b32.xlu0 %v2627, 91
        %v2737 = vpop.permute.xlu0 %2736
        %2738 = vrot.lane.b32.xlu0 %v2628, 91
        %v2739 = vpop.permute.xlu0 %2738
        %2740 = vrot.lane.b32.xlu0 %v2629, 91
        %v2741 = vpop.permute.xlu0 %2740
        %2742 = vrot.lane.b32.xlu0 %v2630, 91
        %v2743 = vpop.permute.xlu0 %2742
        %2744 = vrot.lane.b32.xlu0 %v2631, 91
        %v2745 = vpop.permute.xlu0 %2744
        %2746 = vrot.lane.b32.xlu0 %v2632, 91
        %v2747 = vpop.permute.xlu0 %2746
        %2748 = vrot.lane.b32.xlu0 %v2633, 91
        %v2749 = vpop.permute.xlu0 %2748
        %2750 = vrot.lane.b32.xlu0 %v2634, 91
        %v2751 = vpop.permute.xlu0 %2750
        %2752 = vrot.lane.b32.xlu0 %v2635, 91
        %v2753 = vpop.permute.xlu0 %2752
        %2754 = vrot.lane.b32.xlu0 %v2636, 91
        %v2755 = vpop.permute.xlu0 %2754
        %2756 = vrot.lane.b32.xlu0 %v2637, 91
        %v2757 = vpop.permute.xlu0 %2756
        %2758 = vrot.lane.b32.xlu0 %v2638, 91
        %v2759 = vpop.permute.xlu0 %2758
        %2760 = vrot.lane.b32.xlu0 %v2639, 91
        %v2761 = vpop.permute.xlu0 %2760
        %2762 = vrot.lane.b32.xlu0 %v2640, 91
        %v2763 = vpop.permute.xlu0 %2762
        %2764 = vrot.lane.b32.xlu0 %v2641, 91
        %v2765 = vpop.permute.xlu0 %2764
        %2766 = vrot.lane.b32.xlu0 %v2642, 91
        %v2767 = vpop.permute.xlu0 %2766
        %2768 = vrot.lane.b32.xlu0 %v2643, 91
        %v2769 = vpop.permute.xlu0 %2768
        %2770 = vrot.lane.b32.xlu0 %v2644, 91
        %v2771 = vpop.permute.xlu0 %2770
        %2772 = vrot.lane.b32.xlu0 %v2645, 91
        %v2773 = vpop.permute.xlu0 %2772
        %2774 = vrot.lane.b32.xlu0 %v2646, 91
        %v2775 = vpop.permute.xlu0 %2774
        %2776 = vrot.lane.b32.xlu0 %v2647, 91
        %v2777 = vpop.permute.xlu0 %2776
        %2778 = vrot.lane.b32.xlu0 %v2648, 91
        %v2779 = vpop.permute.xlu0 %2778
        %2780 = vrot.lane.b32.xlu0 %v2649, 91
        %v2781 = vpop.permute.xlu0 %2780
        %2782 = vrot.lane.b32.xlu0 %v2650, 91
        %v2783 = vpop.permute.xlu0 %2782
        %2784 = vrot.lane.b32.xlu0 %v2651, 91
        %v2785 = vpop.permute.xlu0 %2784
        %2786 = vrot.lane.b32.xlu0 %v2652, 91
        %v2787 = vpop.permute.xlu0 %2786
        %2788 = vrot.lane.b32.xlu0 %v2653, 91
        %v2789 = vpop.permute.xlu0 %2788
        %2790 = vrot.lane.b32.xlu0 %v2654, 91
        %v2791 = vpop.permute.xlu0 %2790
        %2792 = vrot.lane.b32.xlu0 %v2655, 91
        %v2793 = vpop.permute.xlu0 %2792
        %2794 = vrot.lane.b32.xlu0 %v2656, 91
        %v2795 = vpop.permute.xlu0 %2794
        %2796 = vrot.lane.b32.xlu0 %v2657, 91
        %v2797 = vpop.permute.xlu0 %2796
        %2798 = vrot.lane.b32.xlu0 %v2658, 91
        %v2799 = vpop.permute.xlu0 %2798
        %2800 = vrot.lane.b32.xlu0 %v2659, 91
        %v2801 = vpop.permute.xlu0 %2800
        %2802 = vrot.lane.b32.xlu0 %v2660, 91
        %v2803 = vpop.permute.xlu0 %2802
        %2804 = vrot.lane.b32.xlu0 %v2661, 91
        %v2805 = vpop.permute.xlu0 %2804
        %vm2806 = vcmask 744448
        %v2807 = vsel %vm2806, %v2711, %v2713
        %v2808 = vsel %vm2806, %v2713, %v2715
        %v2809 = vsel %vm2806, %v2715, %v2717
        %v2810 = vsel %vm2806, %v2717, %v2719
        %v2811 = vsel %vm2806, %v2719, %v2721
        %v2812 = vsel %vm2806, %v2723, %v2725
        %v2813 = vsel %vm2806, %v2725, %v2727
        %v2814 = vsel %vm2806, %v2727, %v2729
        %v2815 = vsel %vm2806, %v2729, %v2731
        %v2816 = vsel %vm2806, %v2731, %v2733
        %v2817 = vsel %vm2806, %v2735, %v2737
        %v2818 = vsel %vm2806, %v2737, %v2739
        %v2819 = vsel %vm2806, %v2739, %v2741
        %v2820 = vsel %vm2806, %v2741, %v2743
        %v2821 = vsel %vm2806, %v2743, %v2745
        %v2822 = vsel %vm2806, %v2747, %v2749
        %v2823 = vsel %vm2806, %v2749, %v2751
        %v2824 = vsel %vm2806, %v2751, %v2753
        %v2825 = vsel %vm2806, %v2753, %v2755
        %v2826 = vsel %vm2806, %v2755, %v2757
        %v2827 = vsel %vm2806, %v2759, %v2761
        %v2828 = vsel %vm2806, %v2761, %v2763
        %v2829 = vsel %vm2806, %v2763, %v2765
        %v2830 = vsel %vm2806, %v2765, %v2767
        %v2831 = vsel %vm2806, %v2767, %v2769
        %v2832 = vsel %vm2806, %v2771, %v2773
        %v2833 = vsel %vm2806, %v2773, %v2775
        %v2834 = vsel %vm2806, %v2775, %v2777
        %v2835 = vsel %vm2806, %v2777, %v2779
        %v2836 = vsel %vm2806, %v2779, %v2781
        %v2837 = vsel %vm2806, %v2783, %v2785
        %v2838 = vsel %vm2806, %v2785, %v2787
        %v2839 = vsel %vm2806, %v2787, %v2789
        %v2840 = vsel %vm2806, %v2789, %v2791
        %v2841 = vsel %vm2806, %v2791, %v2793
        %v2842 = vsel %vm2806, %v2795, %v2797
        %v2843 = vsel %vm2806, %v2797, %v2799
        %v2844 = vsel %vm2806, %v2799, %v2801
        %v2845 = vsel %vm2806, %v2801, %v2803
        %v2846 = vsel %vm2806, %v2803, %v2805
        %v2895 = vadd.f32 %v2534, %v2807
        %v2896 = vadd.f32 %v2535, %v2808
        %v2897 = vadd.f32 %v2536, %v2809
        %v2898 = vadd.f32 %v2537, %v2810
        %v2899 = vadd.f32 %v2538, %v2811
        %v2900 = vadd.f32 %v2539, %v2721
        %v2901 = vadd.f32 %v2540, %v2812
        %v2902 = vadd.f32 %v2541, %v2813
        %v2903 = vadd.f32 %v2542, %v2814
        %v2904 = vadd.f32 %v2543, %v2815
        %v2905 = vadd.f32 %v2544, %v2816
        %v2906 = vadd.f32 %v2545, %v2733
        %v2907 = vadd.f32 %v2546, %v2817
        %v2908 = vadd.f32 %v2547, %v2818
        %v2909 = vadd.f32 %v2548, %v2819
        %v2910 = vadd.f32 %v2549, %v2820
        %v2911 = vadd.f32 %v2550, %v2821
        %v2912 = vadd.f32 %v2551, %v2745
        %v2913 = vadd.f32 %v2552, %v2822
        %v2914 = vadd.f32 %v2553, %v2823
        %v2915 = vadd.f32 %v2554, %v2824
        %v2916 = vadd.f32 %v2555, %v2825
        %v2917 = vadd.f32 %v2556, %v2826
        %v2918 = vadd.f32 %v2557, %v2757
        %v2919 = vadd.f32 %v2558, %v2827
        %v2920 = vadd.f32 %v2559, %v2828
        %v2921 = vadd.f32 %v2560, %v2829
        %v2922 = vadd.f32 %v2561, %v2830
        %v2923 = vadd.f32 %v2562, %v2831
        %v2924 = vadd.f32 %v2563, %v2769
        %v2925 = vadd.f32 %v2564, %v2832
        %v2926 = vadd.f32 %v2565, %v2833
        %v2927 = vadd.f32 %v2566, %v2834
        %v2928 = vadd.f32 %v2567, %v2835
        %v2929 = vadd.f32 %v2568, %v2836
        %v2930 = vadd.f32 %v2569, %v2781
        %v2931 = vadd.f32 %v2570, %v2837
        %v2932 = vadd.f32 %v2571, %v2838
        %v2933 = vadd.f32 %v2572, %v2839
        %v2934 = vadd.f32 %v2573, %v2840
        %v2935 = vadd.f32 %v2574, %v2841
        %v2936 = vadd.f32 %v2575, %v2793
        %v2937 = vadd.f32 %v2576, %v2842
        %v2938 = vadd.f32 %v2577, %v2843
        %v2939 = vadd.f32 %v2578, %v2844
        %v2940 = vadd.f32 %v2579, %v2845
        %v2941 = vadd.f32 %v2580, %v2846
        %v2942 = vadd.f32 %v2581, %v2805
        %2943 = vset.pattern.permute.xlu0 8
        %2944 = vperm.xlu0 %2943, %v289
        %v2945 = vpop.permute.xlu0 %2944
        %2947 = vset.pattern.permute.xlu0 8
        %2948 = vperm.xlu0 %2947, %v290
        %v2949 = vpop.permute.xlu0 %2948
        %2951 = vset.pattern.permute.xlu0 8
        %2952 = vperm.xlu0 %2951, %v291
        %v2953 = vpop.permute.xlu0 %2952
        %2955 = vset.pattern.permute.xlu0 8
        %2956 = vperm.xlu0 %2955, %v292
        %v2957 = vpop.permute.xlu0 %2956
        %2959 = vset.pattern.permute.xlu0 8
        %2960 = vperm.xlu0 %2959, %v293
        %v2961 = vpop.permute.xlu0 %2960
        %2963 = vset.pattern.permute.xlu0 8
        %2964 = vperm.xlu0 %2963, %v294
        %v2965 = vpop.permute.xlu0 %2964
        %2967 = vset.pattern.permute.xlu0 8
        %2968 = vperm.xlu0 %2967, %v295
        %v2969 = vpop.permute.xlu0 %2968
        %2971 = vset.pattern.permute.xlu0 8
        %2972 = vperm.xlu0 %2971, %v296
        %v2973 = vpop.permute.xlu0 %2972
        %v2975 = vmul.f32 %v2945, %v341
        %v2976 = vmul.f32 %v2945, %v345
        %v2977 = vmul.f32 %v2945, %v349
        %v2978 = vmul.f32 %v2945, %v353
        %v2979 = vmul.f32 %v2945, %v357
        %v2980 = vmul.f32 %v2945, %v361
        %v2981 = vmul.f32 %v2949, %v341
        %v2982 = vmul.f32 %v2949, %v345
        %v2983 = vmul.f32 %v2949, %v349
        %v2984 = vmul.f32 %v2949, %v353
        %v2985 = vmul.f32 %v2949, %v357
        %v2986 = vmul.f32 %v2949, %v361
        %v2987 = vmul.f32 %v2953, %v341
        %v2988 = vmul.f32 %v2953, %v345
        %v2989 = vmul.f32 %v2953, %v349
        %v2990 = vmul.f32 %v2953, %v353
        %v2991 = vmul.f32 %v2953, %v357
        %v2992 = vmul.f32 %v2953, %v361
        %v2993 = vmul.f32 %v2957, %v341
        %v2994 = vmul.f32 %v2957, %v345
        %v2995 = vmul.f32 %v2957, %v349
        %v2996 = vmul.f32 %v2957, %v353
        %v2997 = vmul.f32 %v2957, %v357
        %v2998 = vmul.f32 %v2957, %v361
        %v2999 = vmul.f32 %v2961, %v341
        %v3000 = vmul.f32 %v2961, %v345
        %v3001 = vmul.f32 %v2961, %v349
        %v3002 = vmul.f32 %v2961, %v353
        %v3003 = vmul.f32 %v2961, %v357
        %v3004 = vmul.f32 %v2961, %v361
        %v3005 = vmul.f32 %v2965, %v341
        %v3006 = vmul.f32 %v2965, %v345
        %v3007 = vmul.f32 %v2965, %v349
        %v3008 = vmul.f32 %v2965, %v353
        %v3009 = vmul.f32 %v2965, %v357
        %v3010 = vmul.f32 %v2965, %v361
        %v3011 = vmul.f32 %v2969, %v341
        %v3012 = vmul.f32 %v2969, %v345
        %v3013 = vmul.f32 %v2969, %v349
        %v3014 = vmul.f32 %v2969, %v353
        %v3015 = vmul.f32 %v2969, %v357
        %v3016 = vmul.f32 %v2969, %v361
        %v3017 = vmul.f32 %v2973, %v341
        %v3018 = vmul.f32 %v2973, %v345
        %v3019 = vmul.f32 %v2973, %v349
        %v3020 = vmul.f32 %v2973, %v353
        %v3021 = vmul.f32 %v2973, %v357
        %v3022 = vmul.f32 %v2973, %v361
        %3071 = vrot.lane.b32.xlu0 %v2975, 90
        %v3072 = vpop.permute.xlu0 %3071
        %3073 = vrot.lane.b32.xlu0 %v2976, 90
        %v3074 = vpop.permute.xlu0 %3073
        %3075 = vrot.lane.b32.xlu0 %v2977, 90
        %v3076 = vpop.permute.xlu0 %3075
        %3077 = vrot.lane.b32.xlu0 %v2978, 90
        %v3078 = vpop.permute.xlu0 %3077
        %3079 = vrot.lane.b32.xlu0 %v2979, 90
        %v3080 = vpop.permute.xlu0 %3079
        %3081 = vrot.lane.b32.xlu0 %v2980, 90
        %v3082 = vpop.permute.xlu0 %3081
        %3083 = vrot.lane.b32.xlu0 %v2981, 90
        %v3084 = vpop.permute.xlu0 %3083
        %3085 = vrot.lane.b32.xlu0 %v2982, 90
        %v3086 = vpop.permute.xlu0 %3085
        %3087 = vrot.lane.b32.xlu0 %v2983, 90
        %v3088 = vpop.permute.xlu0 %3087
        %3089 = vrot.lane.b32.xlu0 %v2984, 90
        %v3090 = vpop.permute.xlu0 %3089
        %3091 = vrot.lane.b32.xlu0 %v2985, 90
        %v3092 = vpop.permute.xlu0 %3091
        %3093 = vrot.lane.b32.xlu0 %v2986, 90
        %v3094 = vpop.permute.xlu0 %3093
        %3095 = vrot.lane.b32.xlu0 %v2987, 90
        %v3096 = vpop.permute.xlu0 %3095
        %3097 = vrot.lane.b32.xlu0 %v2988, 90
        %v3098 = vpop.permute.xlu0 %3097
        %3099 = vrot.lane.b32.xlu0 %v2989, 90
        %v3100 = vpop.permute.xlu0 %3099
        %3101 = vrot.lane.b32.xlu0 %v2990, 90
        %v3102 = vpop.permute.xlu0 %3101
        %3103 = vrot.lane.b32.xlu0 %v2991, 90
        %v3104 = vpop.permute.xlu0 %3103
        %3105 = vrot.lane.b32.xlu0 %v2992, 90
        %v3106 = vpop.permute.xlu0 %3105
        %3107 = vrot.lane.b32.xlu0 %v2993, 90
        %v3108 = vpop.permute.xlu0 %3107
        %3109 = vrot.lane.b32.xlu0 %v2994, 90
        %v3110 = vpop.permute.xlu0 %3109
        %3111 = vrot.lane.b32.xlu0 %v2995, 90
        %v3112 = vpop.permute.xlu0 %3111
        %3113 = vrot.lane.b32.xlu0 %v2996, 90
        %v3114 = vpop.permute.xlu0 %3113
        %3115 = vrot.lane.b32.xlu0 %v2997, 90
        %v3116 = vpop.permute.xlu0 %3115
        %3117 = vrot.lane.b32.xlu0 %v2998, 90
        %v3118 = vpop.permute.xlu0 %3117
        %3119 = vrot.lane.b32.xlu0 %v2999, 90
        %v3120 = vpop.permute.xlu0 %3119
        %3121 = vrot.lane.b32.xlu0 %v3000, 90
        %v3122 = vpop.permute.xlu0 %3121
        %3123 = vrot.lane.b32.xlu0 %v3001, 90
        %v3124 = vpop.permute.xlu0 %3123
        %3125 = vrot.lane.b32.xlu0 %v3002, 90
        %v3126 = vpop.permute.xlu0 %3125
        %3127 = vrot.lane.b32.xlu0 %v3003, 90
        %v3128 = vpop.permute.xlu0 %3127
        %3129 = vrot.lane.b32.xlu0 %v3004, 90
        %v3130 = vpop.permute.xlu0 %3129
        %3131 = vrot.lane.b32.xlu0 %v3005, 90
        %v3132 = vpop.permute.xlu0 %3131
        %3133 = vrot.lane.b32.xlu0 %v3006, 90
        %v3134 = vpop.permute.xlu0 %3133
        %3135 = vrot.lane.b32.xlu0 %v3007, 90
        %v3136 = vpop.permute.xlu0 %3135
        %3137 = vrot.lane.b32.xlu0 %v3008, 90
        %v3138 = vpop.permute.xlu0 %3137
        %3139 = vrot.lane.b32.xlu0 %v3009, 90
        %v3140 = vpop.permute.xlu0 %3139
        %3141 = vrot.lane.b32.xlu0 %v3010, 90
        %v3142 = vpop.permute.xlu0 %3141
        %3143 = vrot.lane.b32.xlu0 %v3011, 90
        %v3144 = vpop.permute.xlu0 %3143
        %3145 = vrot.lane.b32.xlu0 %v3012, 90
        %v3146 = vpop.permute.xlu0 %3145
        %3147 = vrot.lane.b32.xlu0 %v3013, 90
        %v3148 = vpop.permute.xlu0 %3147
        %3149 = vrot.lane.b32.xlu0 %v3014, 90
        %v3150 = vpop.permute.xlu0 %3149
        %3151 = vrot.lane.b32.xlu0 %v3015, 90
        %v3152 = vpop.permute.xlu0 %3151
        %3153 = vrot.lane.b32.xlu0 %v3016, 90
        %v3154 = vpop.permute.xlu0 %3153
        %3155 = vrot.lane.b32.xlu0 %v3017, 90
        %v3156 = vpop.permute.xlu0 %3155
        %3157 = vrot.lane.b32.xlu0 %v3018, 90
        %v3158 = vpop.permute.xlu0 %3157
        %3159 = vrot.lane.b32.xlu0 %v3019, 90
        %v3160 = vpop.permute.xlu0 %3159
        %3161 = vrot.lane.b32.xlu0 %v3020, 90
        %v3162 = vpop.permute.xlu0 %3161
        %3163 = vrot.lane.b32.xlu0 %v3021, 90
        %v3164 = vpop.permute.xlu0 %3163
        %3165 = vrot.lane.b32.xlu0 %v3022, 90
        %v3166 = vpop.permute.xlu0 %3165
        %vm3167 = vcmask 736256
        %v3168 = vsel %vm3167, %v3072, %v3074
        %v3169 = vsel %vm3167, %v3074, %v3076
        %v3170 = vsel %vm3167, %v3076, %v3078
        %v3171 = vsel %vm3167, %v3078, %v3080
        %v3172 = vsel %vm3167, %v3080, %v3082
        %v3173 = vsel %vm3167, %v3084, %v3086
        %v3174 = vsel %vm3167, %v3086, %v3088
        %v3175 = vsel %vm3167, %v3088, %v3090
        %v3176 = vsel %vm3167, %v3090, %v3092
        %v3177 = vsel %vm3167, %v3092, %v3094
        %v3178 = vsel %vm3167, %v3096, %v3098
        %v3179 = vsel %vm3167, %v3098, %v3100
        %v3180 = vsel %vm3167, %v3100, %v3102
        %v3181 = vsel %vm3167, %v3102, %v3104
        %v3182 = vsel %vm3167, %v3104, %v3106
        %v3183 = vsel %vm3167, %v3108, %v3110
        %v3184 = vsel %vm3167, %v3110, %v3112
        %v3185 = vsel %vm3167, %v3112, %v3114
        %v3186 = vsel %vm3167, %v3114, %v3116
        %v3187 = vsel %vm3167, %v3116, %v3118
        %v3188 = vsel %vm3167, %v3120, %v3122
        %v3189 = vsel %vm3167, %v3122, %v3124
        %v3190 = vsel %vm3167, %v3124, %v3126
        %v3191 = vsel %vm3167, %v3126, %v3128
        %v3192 = vsel %vm3167, %v3128, %v3130
        %v3193 = vsel %vm3167, %v3132, %v3134
        %v3194 = vsel %vm3167, %v3134, %v3136
        %v3195 = vsel %vm3167, %v3136, %v3138
        %v3196 = vsel %vm3167, %v3138, %v3140
        %v3197 = vsel %vm3167, %v3140, %v3142
        %v3198 = vsel %vm3167, %v3144, %v3146
        %v3199 = vsel %vm3167, %v3146, %v3148
        %v3200 = vsel %vm3167, %v3148, %v3150
        %v3201 = vsel %vm3167, %v3150, %v3152
        %v3202 = vsel %vm3167, %v3152, %v3154
        %v3203 = vsel %vm3167, %v3156, %v3158
        %v3204 = vsel %vm3167, %v3158, %v3160
        %v3205 = vsel %vm3167, %v3160, %v3162
        %v3206 = vsel %vm3167, %v3162, %v3164
        %v3207 = vsel %vm3167, %v3164, %v3166
        %v3256 = vadd.f32 %v2895, %v3168
        %v3257 = vadd.f32 %v2896, %v3169
        %v3258 = vadd.f32 %v2897, %v3170
        %v3259 = vadd.f32 %v2898, %v3171
        %v3260 = vadd.f32 %v2899, %v3172
        %v3261 = vadd.f32 %v2900, %v3082
        %v3262 = vadd.f32 %v2901, %v3173
        %v3263 = vadd.f32 %v2902, %v3174
        %v3264 = vadd.f32 %v2903, %v3175
        %v3265 = vadd.f32 %v2904, %v3176
        %v3266 = vadd.f32 %v2905, %v3177
        %v3267 = vadd.f32 %v2906, %v3094
        %v3268 = vadd.f32 %v2907, %v3178
        %v3269 = vadd.f32 %v2908, %v3179
        %v3270 = vadd.f32 %v2909, %v3180
        %v3271 = vadd.f32 %v2910, %v3181
        %v3272 = vadd.f32 %v2911, %v3182
        %v3273 = vadd.f32 %v2912, %v3106
        %v3274 = vadd.f32 %v2913, %v3183
        %v3275 = vadd.f32 %v2914, %v3184
        %v3276 = vadd.f32 %v2915, %v3185
        %v3277 = vadd.f32 %v2916, %v3186
        %v3278 = vadd.f32 %v2917, %v3187
        %v3279 = vadd.f32 %v2918, %v3118
        %v3280 = vadd.f32 %v2919, %v3188
        %v3281 = vadd.f32 %v2920, %v3189
        %v3282 = vadd.f32 %v2921, %v3190
        %v3283 = vadd.f32 %v2922, %v3191
        %v3284 = vadd.f32 %v2923, %v3192
        %v3285 = vadd.f32 %v2924, %v3130
        %v3286 = vadd.f32 %v2925, %v3193
        %v3287 = vadd.f32 %v2926, %v3194
        %v3288 = vadd.f32 %v2927, %v3195
        %v3289 = vadd.f32 %v2928, %v3196
        %v3290 = vadd.f32 %v2929, %v3197
        %v3291 = vadd.f32 %v2930, %v3142
        %v3292 = vadd.f32 %v2931, %v3198
        %v3293 = vadd.f32 %v2932, %v3199
        %v3294 = vadd.f32 %v2933, %v3200
        %v3295 = vadd.f32 %v2934, %v3201
        %v3296 = vadd.f32 %v2935, %v3202
        %v3297 = vadd.f32 %v2936, %v3154
        %v3298 = vadd.f32 %v2937, %v3203
        %v3299 = vadd.f32 %v2938, %v3204
        %v3300 = vadd.f32 %v2939, %v3205
        %v3301 = vadd.f32 %v2940, %v3206
        %v3302 = vadd.f32 %v2941, %v3207
        %v3303 = vadd.f32 %v2942, %v3166
        %v3304 = vld [vmem:[%s2] sm:$0xff]
        %v3305 = vld [vmem:[%s2 + $0x8] sm:$0xff]
        %v3306 = vld [vmem:[%s2 + $0x10] sm:$0xff]
        %v3307 = vld [vmem:[%s2 + $0x18] sm:$0xff]
        %v3308 = vld [vmem:[%s2 + $0x20] sm:$0xff]
        %v3309 = vld [vmem:[%s2 + $0x28] sm:$0xff]
        %v3310 = vld [vmem:[%s2 + $0x30] sm:$0xff]
        %v3311 = vld [vmem:[%s2 + $0x38] sm:$0xff]
        %3313 = vset.pattern.permute.xlu0 0
        %3314 = vperm.xlu0 %3313, %v3304
        %v3315 = vpop.permute.xlu0 %3314
        %3318 = vset.pattern.permute.xlu0 0
        %3319 = vperm.xlu0 %3318, %v3305
        %v3320 = vpop.permute.xlu0 %3319
        %3323 = vset.pattern.permute.xlu0 0
        %3324 = vperm.xlu0 %3323, %v3306
        %v3325 = vpop.permute.xlu0 %3324
        %3328 = vset.pattern.permute.xlu0 0
        %3329 = vperm.xlu0 %3328, %v3307
        %v3330 = vpop.permute.xlu0 %3329
        %3333 = vset.pattern.permute.xlu0 0
        %3334 = vperm.xlu0 %3333, %v3308
        %v3335 = vpop.permute.xlu0 %3334
        %3338 = vset.pattern.permute.xlu0 0
        %3339 = vperm.xlu0 %3338, %v3309
        %v3340 = vpop.permute.xlu0 %3339
        %3343 = vset.pattern.permute.xlu0 0
        %3344 = vperm.xlu0 %3343, %v3310
        %v3345 = vpop.permute.xlu0 %3344
        %3348 = vset.pattern.permute.xlu0 0
        %3349 = vperm.xlu0 %3348, %v3311
        %v3350 = vpop.permute.xlu0 %3349
        %v3352 = vadd.f32 %v3256, %v3315
        %v3353 = vadd.f32 %v3257, %v3315
        %v3354 = vadd.f32 %v3258, %v3315
        %v3355 = vadd.f32 %v3259, %v3315
        %v3356 = vadd.f32 %v3260, %v3315
        %v3357 = vadd.f32 %v3261, %v3315
        %v3358 = vadd.f32 %v3262, %v3320
        %v3359 = vadd.f32 %v3263, %v3320
        %v3360 = vadd.f32 %v3264, %v3320
        %v3361 = vadd.f32 %v3265, %v3320
        %v3362 = vadd.f32 %v3266, %v3320
        %v3363 = vadd.f32 %v3267, %v3320
        %v3364 = vadd.f32 %v3268, %v3325
        %v3365 = vadd.f32 %v3269, %v3325
        %v3366 = vadd.f32 %v3270, %v3325
        %v3367 = vadd.f32 %v3271, %v3325
        %v3368 = vadd.f32 %v3272, %v3325
        %v3369 = vadd.f32 %v3273, %v3325
        %v3370 = vadd.f32 %v3274, %v3330
        %v3371 = vadd.f32 %v3275, %v3330
        %v3372 = vadd.f32 %v3276, %v3330
        %v3373 = vadd.f32 %v3277, %v3330
        %v3374 = vadd.f32 %v3278, %v3330
        %v3375 = vadd.f32 %v3279, %v3330
        %v3376 = vadd.f32 %v3280, %v3335
        %v3377 = vadd.f32 %v3281, %v3335
        %v3378 = vadd.f32 %v3282, %v3335
        %v3379 = vadd.f32 %v3283, %v3335
        %v3380 = vadd.f32 %v3284, %v3335
        %v3381 = vadd.f32 %v3285, %v3335
        %v3382 = vadd.f32 %v3286, %v3340
        %v3383 = vadd.f32 %v3287, %v3340
        %v3384 = vadd.f32 %v3288, %v3340
        %v3385 = vadd.f32 %v3289, %v3340
        %v3386 = vadd.f32 %v3290, %v3340
        %v3387 = vadd.f32 %v3291, %v3340
        %v3388 = vadd.f32 %v3292, %v3345
        %v3389 = vadd.f32 %v3293, %v3345
        %v3390 = vadd.f32 %v3294, %v3345
        %v3391 = vadd.f32 %v3295, %v3345
        %v3392 = vadd.f32 %v3296, %v3345
        %v3393 = vadd.f32 %v3297, %v3345
        %v3394 = vadd.f32 %v3298, %v3350
        %v3395 = vadd.f32 %v3299, %v3350
        %v3396 = vadd.f32 %v3300, %v3350
        %v3397 = vadd.f32 %v3301, %v3350
        %v3398 = vadd.f32 %v3302, %v3350
        %v3399 = vadd.f32 %v3303, %v3350
        %v3400 = vmax.f32 %v3352, 0.0
        %v3401 = vmax.f32 %v3353, 0.0
        %v3402 = vmax.f32 %v3354, 0.0
        %v3403 = vmax.f32 %v3355, 0.0
        %v3404 = vmax.f32 %v3356, 0.0
        %v3405 = vmax.f32 %v3357, 0.0
        %v3406 = vmax.f32 %v3358, 0.0
        %v3407 = vmax.f32 %v3359, 0.0
        %v3408 = vmax.f32 %v3360, 0.0
        %v3409 = vmax.f32 %v3361, 0.0
        %v3410 = vmax.f32 %v3362, 0.0
        %v3411 = vmax.f32 %v3363, 0.0
        %v3412 = vmax.f32 %v3364, 0.0
        %v3413 = vmax.f32 %v3365, 0.0
        %v3414 = vmax.f32 %v3366, 0.0
        %v3415 = vmax.f32 %v3367, 0.0
        %v3416 = vmax.f32 %v3368, 0.0
        %v3417 = vmax.f32 %v3369, 0.0
        %v3418 = vmax.f32 %v3370, 0.0
        %v3419 = vmax.f32 %v3371, 0.0
        %v3420 = vmax.f32 %v3372, 0.0
        %v3421 = vmax.f32 %v3373, 0.0
        %v3422 = vmax.f32 %v3374, 0.0
        %v3423 = vmax.f32 %v3375, 0.0
        %v3424 = vmax.f32 %v3376, 0.0
        %v3425 = vmax.f32 %v3377, 0.0
        %v3426 = vmax.f32 %v3378, 0.0
        %v3427 = vmax.f32 %v3379, 0.0
        %v3428 = vmax.f32 %v3380, 0.0
        %v3429 = vmax.f32 %v3381, 0.0
        %v3430 = vmax.f32 %v3382, 0.0
        %v3431 = vmax.f32 %v3383, 0.0
        %v3432 = vmax.f32 %v3384, 0.0
        %v3433 = vmax.f32 %v3385, 0.0
        %v3434 = vmax.f32 %v3386, 0.0
        %v3435 = vmax.f32 %v3387, 0.0
        %v3436 = vmax.f32 %v3388, 0.0
        %v3437 = vmax.f32 %v3389, 0.0
        %v3438 = vmax.f32 %v3390, 0.0
        %v3439 = vmax.f32 %v3391, 0.0
        %v3440 = vmax.f32 %v3392, 0.0
        %v3441 = vmax.f32 %v3393, 0.0
        %v3442 = vmax.f32 %v3394, 0.0
        %v3443 = vmax.f32 %v3395, 0.0
        %v3444 = vmax.f32 %v3396, 0.0
        %v3445 = vmax.f32 %v3397, 0.0
        %v3446 = vmax.f32 %v3398, 0.0
        %v3447 = vmax.f32 %v3399, 0.0
        %3496 = vrot.lane.b32.xlu0 %v3400, 110
        %v3497 = vpop.permute.xlu0 %3496
        %3498 = vrot.lane.b32.xlu0 %v3401, 110
        %v3499 = vpop.permute.xlu0 %3498
        %3500 = vrot.lane.b32.xlu0 %v3402, 110
        %v3501 = vpop.permute.xlu0 %3500
        %3502 = vrot.lane.b32.xlu0 %v3403, 110
        %v3503 = vpop.permute.xlu0 %3502
        %3504 = vrot.lane.b32.xlu0 %v3404, 110
        %v3505 = vpop.permute.xlu0 %3504
        %3506 = vrot.lane.b32.xlu0 %v3405, 110
        %v3507 = vpop.permute.xlu0 %3506
        %3508 = vrot.lane.b32.xlu0 %v3406, 110
        %v3509 = vpop.permute.xlu0 %3508
        %3510 = vrot.lane.b32.xlu0 %v3407, 110
        %v3511 = vpop.permute.xlu0 %3510
        %3512 = vrot.lane.b32.xlu0 %v3408, 110
        %v3513 = vpop.permute.xlu0 %3512
        %3514 = vrot.lane.b32.xlu0 %v3409, 110
        %v3515 = vpop.permute.xlu0 %3514
        %3516 = vrot.lane.b32.xlu0 %v3410, 110
        %v3517 = vpop.permute.xlu0 %3516
        %3518 = vrot.lane.b32.xlu0 %v3411, 110
        %v3519 = vpop.permute.xlu0 %3518
        %3520 = vrot.lane.b32.xlu0 %v3412, 110
        %v3521 = vpop.permute.xlu0 %3520
        %3522 = vrot.lane.b32.xlu0 %v3413, 110
        %v3523 = vpop.permute.xlu0 %3522
        %3524 = vrot.lane.b32.xlu0 %v3414, 110
        %v3525 = vpop.permute.xlu0 %3524
        %3526 = vrot.lane.b32.xlu0 %v3415, 110
        %v3527 = vpop.permute.xlu0 %3526
        %3528 = vrot.lane.b32.xlu0 %v3416, 110
        %v3529 = vpop.permute.xlu0 %3528
        %3530 = vrot.lane.b32.xlu0 %v3417, 110
        %v3531 = vpop.permute.xlu0 %3530
        %3532 = vrot.lane.b32.xlu0 %v3418, 110
        %v3533 = vpop.permute.xlu0 %3532
        %3534 = vrot.lane.b32.xlu0 %v3419, 110
        %v3535 = vpop.permute.xlu0 %3534
        %3536 = vrot.lane.b32.xlu0 %v3420, 110
        %v3537 = vpop.permute.xlu0 %3536
        %3538 = vrot.lane.b32.xlu0 %v3421, 110
        %v3539 = vpop.permute.xlu0 %3538
        %3540 = vrot.lane.b32.xlu0 %v3422, 110
        %v3541 = vpop.permute.xlu0 %3540
        %3542 = vrot.lane.b32.xlu0 %v3423, 110
        %v3543 = vpop.permute.xlu0 %3542
        %3544 = vrot.lane.b32.xlu0 %v3424, 110
        %v3545 = vpop.permute.xlu0 %3544
        %3546 = vrot.lane.b32.xlu0 %v3425, 110
        %v3547 = vpop.permute.xlu0 %3546
        %3548 = vrot.lane.b32.xlu0 %v3426, 110
        %v3549 = vpop.permute.xlu0 %3548
        %3550 = vrot.lane.b32.xlu0 %v3427, 110
        %v3551 = vpop.permute.xlu0 %3550
        %3552 = vrot.lane.b32.xlu0 %v3428, 110
        %v3553 = vpop.permute.xlu0 %3552
        %3554 = vrot.lane.b32.xlu0 %v3429, 110
        %v3555 = vpop.permute.xlu0 %3554
        %3556 = vrot.lane.b32.xlu0 %v3430, 110
        %v3557 = vpop.permute.xlu0 %3556
        %3558 = vrot.lane.b32.xlu0 %v3431, 110
        %v3559 = vpop.permute.xlu0 %3558
        %3560 = vrot.lane.b32.xlu0 %v3432, 110
        %v3561 = vpop.permute.xlu0 %3560
        %3562 = vrot.lane.b32.xlu0 %v3433, 110
        %v3563 = vpop.permute.xlu0 %3562
        %3564 = vrot.lane.b32.xlu0 %v3434, 110
        %v3565 = vpop.permute.xlu0 %3564
        %3566 = vrot.lane.b32.xlu0 %v3435, 110
        %v3567 = vpop.permute.xlu0 %3566
        %3568 = vrot.lane.b32.xlu0 %v3436, 110
        %v3569 = vpop.permute.xlu0 %3568
        %3570 = vrot.lane.b32.xlu0 %v3437, 110
        %v3571 = vpop.permute.xlu0 %3570
        %3572 = vrot.lane.b32.xlu0 %v3438, 110
        %v3573 = vpop.permute.xlu0 %3572
        %3574 = vrot.lane.b32.xlu0 %v3439, 110
        %v3575 = vpop.permute.xlu0 %3574
        %3576 = vrot.lane.b32.xlu0 %v3440, 110
        %v3577 = vpop.permute.xlu0 %3576
        %3578 = vrot.lane.b32.xlu0 %v3441, 110
        %v3579 = vpop.permute.xlu0 %3578
        %3580 = vrot.lane.b32.xlu0 %v3442, 110
        %v3581 = vpop.permute.xlu0 %3580
        %3582 = vrot.lane.b32.xlu0 %v3443, 110
        %v3583 = vpop.permute.xlu0 %3582
        %3584 = vrot.lane.b32.xlu0 %v3444, 110
        %v3585 = vpop.permute.xlu0 %3584
        %3586 = vrot.lane.b32.xlu0 %v3445, 110
        %v3587 = vpop.permute.xlu0 %3586
        %3588 = vrot.lane.b32.xlu0 %v3446, 110
        %v3589 = vpop.permute.xlu0 %3588
        %3590 = vrot.lane.b32.xlu0 %v3447, 110
        %v3591 = vpop.permute.xlu0 %3590
        %v3592 = vsel %vm1362, %v3497, %v3499
        %v3593 = vsel %vm1362, %v3499, %v3501
        %v3594 = vsel %vm1362, %v3501, %v3503
        %v3595 = vsel %vm1362, %v3503, %v3505
        %v3596 = vsel %vm1362, %v3505, %v3507
        %v3597 = vsel %vm1362, %v3509, %v3511
        %v3598 = vsel %vm1362, %v3511, %v3513
        %v3599 = vsel %vm1362, %v3513, %v3515
        %v3600 = vsel %vm1362, %v3515, %v3517
        %v3601 = vsel %vm1362, %v3517, %v3519
        %v3602 = vsel %vm1362, %v3521, %v3523
        %v3603 = vsel %vm1362, %v3523, %v3525
        %v3604 = vsel %vm1362, %v3525, %v3527
        %v3605 = vsel %vm1362, %v3527, %v3529
        %v3606 = vsel %vm1362, %v3529, %v3531
        %v3607 = vsel %vm1362, %v3533, %v3535
        %v3608 = vsel %vm1362, %v3535, %v3537
        %v3609 = vsel %vm1362, %v3537, %v3539
        %v3610 = vsel %vm1362, %v3539, %v3541
        %v3611 = vsel %vm1362, %v3541, %v3543
        %v3612 = vsel %vm1362, %v3545, %v3547
        %v3613 = vsel %vm1362, %v3547, %v3549
        %v3614 = vsel %vm1362, %v3549, %v3551
        %v3615 = vsel %vm1362, %v3551, %v3553
        %v3616 = vsel %vm1362, %v3553, %v3555
        %v3617 = vsel %vm1362, %v3557, %v3559
        %v3618 = vsel %vm1362, %v3559, %v3561
        %v3619 = vsel %vm1362, %v3561, %v3563
        %v3620 = vsel %vm1362, %v3563, %v3565
        %v3621 = vsel %vm1362, %v3565, %v3567
        %v3622 = vsel %vm1362, %v3569, %v3571
        %v3623 = vsel %vm1362, %v3571, %v3573
        %v3624 = vsel %vm1362, %v3573, %v3575
        %v3625 = vsel %vm1362, %v3575, %v3577
        %v3626 = vsel %vm1362, %v3577, %v3579
        %v3627 = vsel %vm1362, %v3581, %v3583
        %v3628 = vsel %vm1362, %v3583, %v3585
        %v3629 = vsel %vm1362, %v3585, %v3587
        %v3630 = vsel %vm1362, %v3587, %v3589
        %v3631 = vsel %vm1362, %v3589, %v3591
        %v3680 = vmax.f32 %v3400, %v3592
        %v3681 = vmax.f32 %v3401, %v3593
        %v3682 = vmax.f32 %v3402, %v3594
        %v3683 = vmax.f32 %v3403, %v3595
        %v3684 = vmax.f32 %v3404, %v3596
        %v3685 = vmax.f32 %v3405, %v3507
        %v3686 = vmax.f32 %v3406, %v3597
        %v3687 = vmax.f32 %v3407, %v3598
        %v3688 = vmax.f32 %v3408, %v3599
        %v3689 = vmax.f32 %v3409, %v3600
        %v3690 = vmax.f32 %v3410, %v3601
        %v3691 = vmax.f32 %v3411, %v3519
        %v3692 = vmax.f32 %v3412, %v3602
        %v3693 = vmax.f32 %v3413, %v3603
        %v3694 = vmax.f32 %v3414, %v3604
        %v3695 = vmax.f32 %v3415, %v3605
        %v3696 = vmax.f32 %v3416, %v3606
        %v3697 = vmax.f32 %v3417, %v3531
        %v3698 = vmax.f32 %v3418, %v3607
        %v3699 = vmax.f32 %v3419, %v3608
        %v3700 = vmax.f32 %v3420, %v3609
        %v3701 = vmax.f32 %v3421, %v3610
        %v3702 = vmax.f32 %v3422, %v3611
        %v3703 = vmax.f32 %v3423, %v3543
        %v3704 = vmax.f32 %v3424, %v3612
        %v3705 = vmax.f32 %v3425, %v3613
        %v3706 = vmax.f32 %v3426, %v3614
        %v3707 = vmax.f32 %v3427, %v3615
        %v3708 = vmax.f32 %v3428, %v3616
        %v3709 = vmax.f32 %v3429, %v3555
        %v3710 = vmax.f32 %v3430, %v3617
        %v3711 = vmax.f32 %v3431, %v3618
        %v3712 = vmax.f32 %v3432, %v3619
        %v3713 = vmax.f32 %v3433, %v3620
        %v3714 = vmax.f32 %v3434, %v3621
        %v3715 = vmax.f32 %v3435, %v3567
        %v3716 = vmax.f32 %v3436, %v3622
        %v3717 = vmax.f32 %v3437, %v3623
        %v3718 = vmax.f32 %v3438, %v3624
        %v3719 = vmax.f32 %v3439, %v3625
        %v3720 = vmax.f32 %v3440, %v3626
        %v3721 = vmax.f32 %v3441, %v3579
        %v3722 = vmax.f32 %v3442, %v3627
        %v3723 = vmax.f32 %v3443, %v3628
        %v3724 = vmax.f32 %v3444, %v3629
        %v3725 = vmax.f32 %v3445, %v3630
        %v3726 = vmax.f32 %v3446, %v3631
        %v3727 = vmax.f32 %v3447, %v3591
        %v3728 = vld [vmem:[#allocation3] sm:$0xff]
        %v3729 = vld [vmem:[#allocation3 + $0x8] sm:$0xff]
        %v3730 = vld [vmem:[#allocation3 + $0x10] sm:$0xff]
        %v3731 = vld [vmem:[#allocation3 + $0x18] sm:$0xff]
        %v3732 = vld [vmem:[#allocation3 + $0x20] sm:$0xff]
        %v3733 = vld [vmem:[#allocation3 + $0x28] sm:$0xff]
        %v3734 = vld [vmem:[#allocation3 + $0x30] sm:$0xff]
        %v3735 = vld [vmem:[#allocation3 + $0x38] sm:$0xff]
        %v3736 = vld [vmem:[#allocation3 + $0x40] sm:$0xff]
        %v3737 = vld [vmem:[#allocation3 + $0x48] sm:$0xff]
        %v3738 = vld [vmem:[#allocation3 + $0x50] sm:$0xff]
        %v3739 = vld [vmem:[#allocation3 + $0x58] sm:$0xff]
        %v3740 = vld [vmem:[#allocation3 + $0x60] sm:$0xff]
        %v3741 = vld [vmem:[#allocation3 + $0x68] sm:$0xff]
        %v3742 = vld [vmem:[#allocation3 + $0x70] sm:$0xff]
        %v3743 = vld [vmem:[#allocation3 + $0x78] sm:$0xff]
        %v3744 = vld [vmem:[#allocation3 + $0x80] sm:$0xff]
        %v3745 = vld [vmem:[#allocation3 + $0x88] sm:$0xff]
        %v3746 = vld [vmem:[#allocation3 + $0x90] sm:$0xff]
        %v3747 = vld [vmem:[#allocation3 + $0x98] sm:$0xff]
        %v3748 = vld [vmem:[#allocation3 + $0xa0] sm:$0xff]
        %v3749 = vld [vmem:[#allocation3 + $0xa8] sm:$0xff]
        %v3750 = vld [vmem:[#allocation3 + $0xb0] sm:$0xff]
        %v3751 = vld [vmem:[#allocation3 + $0xb8] sm:$0xff]
        %v3752 = vld [vmem:[#allocation3 + $0xc0] sm:$0xff]
        %v3753 = vld [vmem:[#allocation3 + $0xc8] sm:$0xff]
        %v3754 = vld [vmem:[#allocation3 + $0xd0] sm:$0xff]
        %v3755 = vld [vmem:[#allocation3 + $0xd8] sm:$0xff]
        %v3756 = vld [vmem:[#allocation3 + $0xe0] sm:$0xff]
        %v3757 = vld [vmem:[#allocation3 + $0xe8] sm:$0xff]
        %v3758 = vld [vmem:[#allocation3 + $0xf0] sm:$0xff]
        %v3759 = vld [vmem:[#allocation3 + $0xf8] sm:$0xff]
        %v3760 = vld [vmem:[#allocation3 + $0x100] sm:$0xff]
        %v3761 = vld [vmem:[#allocation3 + $0x108] sm:$0xff]
        %v3762 = vld [vmem:[#allocation3 + $0x110] sm:$0xff]
        %v3763 = vld [vmem:[#allocation3 + $0x118] sm:$0xff]
        %v3764 = vld [vmem:[#allocation3 + $0x120] sm:$0xff]
        %v3765 = vld [vmem:[#allocation3 + $0x128] sm:$0xff]
        %v3766 = vld [vmem:[#allocation3 + $0x130] sm:$0xff]
        %v3767 = vld [vmem:[#allocation3 + $0x138] sm:$0xff]
        %v3768 = vld [vmem:[#allocation3 + $0x140] sm:$0xff]
        %v3769 = vld [vmem:[#allocation3 + $0x148] sm:$0xff]
        %v3770 = vld [vmem:[#allocation3 + $0x150] sm:$0xff]
        %v3771 = vld [vmem:[#allocation3 + $0x158] sm:$0xff]
        %v3772 = vld [vmem:[#allocation3 + $0x160] sm:$0xff]
        %v3773 = vld [vmem:[#allocation3 + $0x168] sm:$0xff]
        %v3774 = vld [vmem:[#allocation3 + $0x170] sm:$0xff]
        %v3775 = vld [vmem:[#allocation3 + $0x178] sm:$0xff]
        %v3776 = vld [vmem:[#allocation3 + $0x180] sm:$0xff]
        %v3777 = vld [vmem:[#allocation3 + $0x188] sm:$0xff]
        %v3778 = vld [vmem:[#allocation3 + $0x190] sm:$0xff]
        %v3779 = vld [vmem:[#allocation3 + $0x198] sm:$0xff]
        %v3780 = vld [vmem:[#allocation3 + $0x1a0] sm:$0xff]
        %v3781 = vld [vmem:[#allocation3 + $0x1a8] sm:$0xff]
        %v3782 = vld [vmem:[#allocation3 + $0x1b0] sm:$0xff]
        %v3783 = vld [vmem:[#allocation3 + $0x1b8] sm:$0xff]
        %v3784 = vld [vmem:[#allocation3 + $0x1c0] sm:$0xff]
        %v3785 = vld [vmem:[#allocation3 + $0x1c8] sm:$0xff]
        %v3786 = vld [vmem:[#allocation3 + $0x1d0] sm:$0xff]
        %v3787 = vld [vmem:[#allocation3 + $0x1d8] sm:$0xff]
        %v3788 = vld [vmem:[#allocation3 + $0x1e0] sm:$0xff]
        %v3789 = vld [vmem:[#allocation3 + $0x1e8] sm:$0xff]
        %v3790 = vld [vmem:[#allocation3 + $0x1f0] sm:$0xff]
        %v3791 = vld [vmem:[#allocation3 + $0x1f8] sm:$0xff]
        %v3792 = vld [vmem:[#allocation3 + $0x200] sm:$0xff]
        %v3793 = vld [vmem:[#allocation3 + $0x208] sm:$0xff]
        %v3794 = vld [vmem:[#allocation3 + $0x210] sm:$0xff]
        %v3795 = vld [vmem:[#allocation3 + $0x218] sm:$0xff]
        %v3796 = vld [vmem:[#allocation3 + $0x220] sm:$0xff]
        %v3797 = vld [vmem:[#allocation3 + $0x228] sm:$0xff]
        %v3798 = vld [vmem:[#allocation3 + $0x230] sm:$0xff]
        %v3799 = vld [vmem:[#allocation3 + $0x238] sm:$0xff]
        %v3800 = vld [vmem:[#allocation3 + $0x240] sm:$0xff]
        %v3801 = vld [vmem:[#allocation3 + $0x248] sm:$0xff]
        %v3802 = vld [vmem:[#allocation3 + $0x250] sm:$0xff]
        %v3803 = vld [vmem:[#allocation3 + $0x258] sm:$0xff]
        %v3804 = vld [vmem:[#allocation3 + $0x260] sm:$0xff]
        %v3805 = vld [vmem:[#allocation3 + $0x268] sm:$0xff]
        %v3806 = vld [vmem:[#allocation3 + $0x270] sm:$0xff]
        %v3807 = vld [vmem:[#allocation3 + $0x278] sm:$0xff]
        %v3808 = vld [vmem:[#allocation3 + $0x280] sm:$0xff]
        %v3809 = vld [vmem:[#allocation3 + $0x288] sm:$0xff]
        %v3810 = vld [vmem:[#allocation3 + $0x290] sm:$0xff]
        %v3811 = vld [vmem:[#allocation3 + $0x298] sm:$0xff]
        %v3812 = vld [vmem:[#allocation3 + $0x2a0] sm:$0xff]
        %v3813 = vld [vmem:[#allocation3 + $0x2a8] sm:$0xff]
        %v3814 = vld [vmem:[#allocation3 + $0x2b0] sm:$0xff]
        %v3815 = vld [vmem:[#allocation3 + $0x2b8] sm:$0xff]
        %v3816 = vld [vmem:[#allocation3 + $0x2c0] sm:$0xff]
        %v3817 = vld [vmem:[#allocation3 + $0x2c8] sm:$0xff]
        %v3818 = vld [vmem:[#allocation3 + $0x2d0] sm:$0xff]
        %v3819 = vld [vmem:[#allocation3 + $0x2d8] sm:$0xff]
        %v3820 = vld [vmem:[#allocation3 + $0x2e0] sm:$0xff]
        %v3821 = vld [vmem:[#allocation3 + $0x2e8] sm:$0xff]
        %v3822 = vld [vmem:[#allocation3 + $0x2f0] sm:$0xff]
        %v3823 = vld [vmem:[#allocation3 + $0x2f8] sm:$0xff]
        %v3824 = vld [vmem:[#allocation3 + $0x300] sm:$0xff]
        %v3825 = vld [vmem:[#allocation3 + $0x308] sm:$0xff]
        %v3826 = vld [vmem:[#allocation3 + $0x310] sm:$0xff]
        %v3827 = vld [vmem:[#allocation3 + $0x318] sm:$0xff]
        %v3828 = vld [vmem:[#allocation3 + $0x320] sm:$0xff]
        %v3829 = vld [vmem:[#allocation3 + $0x328] sm:$0xff]
        %v3830 = vld [vmem:[#allocation3 + $0x330] sm:$0xff]
        %v3831 = vld [vmem:[#allocation3 + $0x338] sm:$0xff]
        %v3832 = vld [vmem:[#allocation3 + $0x340] sm:$0xff]
        %v3833 = vld [vmem:[#allocation3 + $0x348] sm:$0xff]
        %v3834 = vld [vmem:[#allocation3 + $0x350] sm:$0xff]
        %v3835 = vld [vmem:[#allocation3 + $0x358] sm:$0xff]
        %v3836 = vld [vmem:[#allocation3 + $0x360] sm:$0xff]
        %v3837 = vld [vmem:[#allocation3 + $0x368] sm:$0xff]
        %v3838 = vld [vmem:[#allocation3 + $0x370] sm:$0xff]
        %v3839 = vld [vmem:[#allocation3 + $0x378] sm:$0xff]
        %v3840 = vld [vmem:[#allocation3 + $0x380] sm:$0xff]
        %v3841 = vld [vmem:[#allocation3 + $0x388] sm:$0xff]
        %v3842 = vld [vmem:[#allocation3 + $0x390] sm:$0xff]
        %v3843 = vld [vmem:[#allocation3 + $0x398] sm:$0xff]
        %v3844 = vld [vmem:[#allocation3 + $0x3a0] sm:$0xff]
        %v3845 = vld [vmem:[#allocation3 + $0x3a8] sm:$0xff]
        %v3846 = vld [vmem:[#allocation3 + $0x3b0] sm:$0xff]
        %v3847 = vld [vmem:[#allocation3 + $0x3b8] sm:$0xff]
        %v3848 = vld [vmem:[#allocation3 + $0x3c0] sm:$0xff]
        %v3849 = vld [vmem:[#allocation3 + $0x3c8] sm:$0xff]
        %v3850 = vld [vmem:[#allocation3 + $0x3d0] sm:$0xff]
        %v3851 = vld [vmem:[#allocation3 + $0x3d8] sm:$0xff]
        %v3852 = vld [vmem:[#allocation3 + $0x3e0] sm:$0xff]
        %v3853 = vld [vmem:[#allocation3 + $0x3e8] sm:$0xff]
        %v3854 = vld [vmem:[#allocation3 + $0x3f0] sm:$0xff]
        %v3855 = vld [vmem:[#allocation3 + $0x3f8] sm:$0xff]
        %v3856 = vld [vmem:[#allocation3 + $0x400] sm:$0xff]
        %v3857 = vld [vmem:[#allocation3 + $0x408] sm:$0xff]
        %v3858 = vld [vmem:[#allocation3 + $0x410] sm:$0xff]
        %v3859 = vld [vmem:[#allocation3 + $0x418] sm:$0xff]
        %v3860 = vld [vmem:[#allocation3 + $0x420] sm:$0xff]
        %v3861 = vld [vmem:[#allocation3 + $0x428] sm:$0xff]
        %v3862 = vld [vmem:[#allocation3 + $0x430] sm:$0xff]
        %v3863 = vld [vmem:[#allocation3 + $0x438] sm:$0xff]
        %v3864 = vld [vmem:[#allocation3 + $0x440] sm:$0xff]
        %v3865 = vld [vmem:[#allocation3 + $0x448] sm:$0xff]
        %v3866 = vld [vmem:[#allocation3 + $0x450] sm:$0xff]
        %v3867 = vld [vmem:[#allocation3 + $0x458] sm:$0xff]
        %v3868 = vld [vmem:[#allocation3 + $0x460] sm:$0xff]
        %v3869 = vld [vmem:[#allocation3 + $0x468] sm:$0xff]
        %v3870 = vld [vmem:[#allocation3 + $0x470] sm:$0xff]
        %v3871 = vld [vmem:[#allocation3 + $0x478] sm:$0xff]
        %v3872 = vld [vmem:[#allocation3 + $0x480] sm:$0xff]
        %v3873 = vld [vmem:[#allocation3 + $0x488] sm:$0xff]
        %v3874 = vld [vmem:[#allocation3 + $0x490] sm:$0xff]
        %v3875 = vld [vmem:[#allocation3 + $0x498] sm:$0xff]
        %v3876 = vld [vmem:[#allocation3 + $0x4a0] sm:$0xff]
        %v3877 = vld [vmem:[#allocation3 + $0x4a8] sm:$0xff]
        %v3878 = vld [vmem:[#allocation3 + $0x4b0] sm:$0xff]
        %v3879 = vld [vmem:[#allocation3 + $0x4b8] sm:$0xff]
        %v3880 = vld [vmem:[#allocation3 + $0x4c0] sm:$0xff]
        %v3881 = vld [vmem:[#allocation3 + $0x4c8] sm:$0xff]
        %v3882 = vld [vmem:[#allocation3 + $0x4d0] sm:$0xff]
        %v3883 = vld [vmem:[#allocation3 + $0x4d8] sm:$0xff]
        %v3884 = vld [vmem:[#allocation3 + $0x4e0] sm:$0xff]
        %v3885 = vld [vmem:[#allocation3 + $0x4e8] sm:$0xff]
        %v3886 = vld [vmem:[#allocation3 + $0x4f0] sm:$0xff]
        %v3887 = vld [vmem:[#allocation3 + $0x4f8] sm:$0xff]
        %v3888 = vld [vmem:[#allocation3 + $0x500] sm:$0xff]
        %v3889 = vld [vmem:[#allocation3 + $0x508] sm:$0xff]
        %vm3890 = vcmask 64512
        %v3892 = vsel %vm3890, %v3685, 0
        %v3895 = vsel %vm3890, %v3691, 0
        %v3898 = vsel %vm3890, %v3697, 0
        %v3901 = vsel %vm3890, %v3703, 0
        %v3904 = vsel %vm3890, %v3709, 0
        %v3907 = vsel %vm3890, %v3715, 0
        %v3910 = vsel %vm3890, %v3721, 0
        %v3913 = vsel %vm3890, %v3727, 0
        %3915 = vmatprep.subr.mxu0 %v3729
        %3916 = vmatpush1.msra.mxu0 %v3728
        %3917 = vmatprep.subr.mxu0 %v3731
        %3918 = vmatpush1.msra.mxu0 %v3730
        %3919 = vmatprep.subr.mxu0 %v3733
        %3920 = vmatpush1.msra.mxu0 %v3732
        %3921 = vmatprep.subr.mxu0 %v3735
        %3922 = vmatpush1.msra.mxu0 %v3734
        %3923 = vmatprep.subr.mxu0 %v3737
        %3924 = vmatpush1.msra.mxu0 %v3736
        %3925 = vmatprep.subr.mxu0 %v3739
        %3926 = vmatpush1.msra.mxu0 %v3738
        %3927 = vmatprep.subr.mxu0 %v3741
        %3928 = vmatpush1.msra.mxu0 %v3740
        %3929 = vmatprep.subr.mxu0 %v3743
        %3930 = vmatpush1.msra.mxu0 %v3742
        %3931 = vmatprep.subr.mxu0 %v3745
        %3932 = vmatpush1.msra.mxu0 %v3744
        %3933 = vmatprep.subr.mxu0 %v3747
        %3934 = vmatpush1.msra.mxu0 %v3746
        %3935 = vmatprep.subr.mxu0 %v3749
        %3936 = vmatpush1.msra.mxu0 %v3748
        %3937 = vmatprep.subr.mxu0 %v3751
        %3938 = vmatpush1.msra.mxu0 %v3750
        %3939 = vmatprep.subr.mxu0 %v3753
        %3940 = vmatpush1.msra.mxu0 %v3752
        %3941 = vmatprep.subr.mxu0 %v3755
        %3942 = vmatpush1.msra.mxu0 %v3754
        %3943 = vmatprep.subr.mxu0 %v3757
        %3944 = vmatpush1.msra.mxu0 %v3756
        %3945 = vmatprep.subr.mxu0 %v3759
        %3946 = vmatpush1.msra.mxu0 %v3758
        %3947 = vmatprep.subr.mxu0 %v3761
        %3948 = vmatpush1.msra.mxu0 %v3760
        %3949 = vmatprep.subr.mxu0 %v3763
        %3950 = vmatpush1.msra.mxu0 %v3762
        %3951 = vmatprep.subr.mxu0 %v3765
        %3952 = vmatpush1.msra.mxu0 %v3764
        %3953 = vmatprep.subr.mxu0 %v3767
        %3954 = vmatpush1.msra.mxu0 %v3766
        %3955 = vmatprep.subr.mxu0 %v3769
        %3956 = vmatpush1.msra.mxu0 %v3768
        %3957 = vmatprep.subr.mxu0 %v3771
        %3958 = vmatpush1.msra.mxu0 %v3770
        %3959 = vmatprep.subr.mxu0 %v3773
        %3960 = vmatpush1.msra.mxu0 %v3772
        %3961 = vmatprep.subr.mxu0 %v3775
        %3962 = vmatpush1.msra.mxu0 %v3774
        %3963 = vmatprep.subr.mxu0 %v3777
        %3964 = vmatpush1.msra.mxu0 %v3776
        %3965 = vmatprep.subr.mxu0 %v3779
        %3966 = vmatpush1.msra.mxu0 %v3778
        %3967 = vmatprep.subr.mxu0 %v3781
        %3968 = vmatpush1.msra.mxu0 %v3780
        %3969 = vmatprep.subr.mxu0 %v3783
        %3970 = vmatpush1.msra.mxu0 %v3782
        %3971 = vmatprep.subr.mxu0 %v3785
        %3972 = vmatpush1.msra.mxu0 %v3784
        %3973 = vmatprep.subr.mxu0 %v3787
        %3974 = vmatpush1.msra.mxu0 %v3786
        %3975 = vmatprep.subr.mxu0 %v3789
        %3976 = vmatpush1.msra.mxu0 %v3788
        %3977 = vmatprep.subr.mxu0 %v3791
        %3978 = vmatpush1.msra.mxu0 %v3790
        %3979 = vmatprep.mubr.f32.mxu0 %v3681
        %3980 = vmatmul.mubr.f32.gmra.mrb[0].mxu0 %v3680
        %v3981 = vpop.f32.mrb[0].mxu0
        %v3982 = vadd.f32 0.0, %v3981
        %v3983 = vpop.f32.mrb[0].mxu0
        %v3984 = vadd.f32 0.0, %v3983
        %3985 = vmatprep.mubr.f32.mxu0 %v3687
        %3986 = vmatmul.mubr.f32.gmra.mrb[0].mxu0 %v3686
        %v3987 = vpop.f32.mrb[0].mxu0
        %v3988 = vadd.f32 0.0, %v3987
        %v3989 = vpop.f32.mrb[0].mxu0
        %v3990 = vadd.f32 0.0, %v3989
        %3991 = vmatprep.mubr.f32.mxu0 %v3693
        %3992 = vmatmul.mubr.f32.gmra.mrb[0].mxu0 %v3692
        %v3993 = vpop.f32.mrb[0].mxu0
        %v3994 = vadd.f32 0.0, %v3993
        %v3995 = vpop.f32.mrb[0].mxu0
        %v3996 = vadd.f32 0.0, %v3995
        %3997 = vmatprep.mubr.f32.mxu0 %v3699
        %3998 = vmatmul.mubr.f32.gmra.mrb[0].mxu0 %v3698
        %v3999 = vpop.f32.mrb[0].mxu0
        %v4000 = vadd.f32 0.0, %v3999
        %v4001 = vpop.f32.mrb[0].mxu0
        %v4002 = vadd.f32 0.0, %v4001
        %4003 = vmatprep.mubr.f32.mxu0 %v3705
        %4004 = vmatmul.mubr.f32.gmra.mrb[0].mxu0 %v3704
        %v4005 = vpop.f32.mrb[0].mxu0
        %v4006 = vadd.f32 0.0, %v4005
        %v4007 = vpop.f32.mrb[0].mxu0
        %v4008 = vadd.f32 0.0, %v4007
        %4009 = vmatprep.mubr.f32.mxu0 %v3711
        %4010 = vmatmul.mubr.f32.gmra.mrb[0].mxu0 %v3710
        %v4011 = vpop.f32.mrb[0].mxu0
        %v4012 = vadd.f32 0.0, %v4011
        %v4013 = vpop.f32.mrb[0].mxu0
        %v4014 = vadd.f32 0.0, %v4013
        %4015 = vmatprep.mubr.f32.mxu0 %v3717
        %4016 = vmatmul.mubr.f32.gmra.mrb[0].mxu0 %v3716
        %v4017 = vpop.f32.mrb[0].mxu0
        %v4018 = vadd.f32 0.0, %v4017
        %v4019 = vpop.f32.mrb[0].mxu0
        %v4020 = vadd.f32 0.0, %v4019
        %4021 = vmatprep.mubr.f32.mxu0 %v3723
        %4022 = vmatmul.mubr.f32.gmra.mrb[0].mxu0 %v3722
        %v4023 = vpop.f32.mrb[0].mxu0
        %v4024 = vadd.f32 0.0, %v4023
        %v4025 = vpop.f32.mrb[0].mxu0
        %v4026 = vadd.f32 0.0, %v4025
        %4027 = vdwg.mxu0
        %4028 = vmatprep.subr.mxu0 %v3793
        %4029 = vmatpush1.msra.mxu0 %v3792
        %4030 = vmatprep.subr.mxu0 %v3795
        %4031 = vmatpush1.msra.mxu0 %v3794
        %4032 = vmatprep.subr.mxu0 %v3797
        %4033 = vmatpush1.msra.mxu0 %v3796
        %4034 = vmatprep.subr.mxu0 %v3799
        %4035 = vmatpush1.msra.mxu0 %v3798
        %4036 = vmatprep.subr.mxu0 %v3801
        %4037 = vmatpush1.msra.mxu0 %v3800
        %4038 = vmatprep.subr.mxu0 %v3803
        %4039 = vmatpush1.msra.mxu0 %v3802
        %4040 = vmatprep.subr.mxu0 %v3805
        %4041 = vmatpush1.msra.mxu0 %v3804
        %4042 = vmatprep.subr.mxu0 %v3807
        %4043 = vmatpush1.msra.mxu0 %v3806
        %4044 = vmatprep.subr.mxu0 %v3809
        %4045 = vmatpush1.msra.mxu0 %v3808
        %4046 = vmatprep.subr.mxu0 %v3811
        %4047 = vmatpush1.msra.mxu0 %v3810
        %4048 = vmatprep.subr.mxu0 %v3813
        %4049 = vmatpush1.msra.mxu0 %v3812
        %4050 = vmatprep.subr.mxu0 %v3815
        %4051 = vmatpush1.msra.mxu0 %v3814
        %4052 = vmatprep.subr.mxu0 %v3817
        %4053 = vmatpush1.msra.mxu0 %v3816
        %4054 = vmatprep.subr.mxu0 %v3819
        %4055 = vmatpush1.msra.mxu0 %v3818
        %4056 = vmatprep.subr.mxu0 %v3821
        %4057 = vmatpush1.msra.mxu0 %v3820
        %4058 = vmatprep.subr.mxu0 %v3823
        %4059 = vmatpush1.msra.mxu0 %v3822
        %4060 = vmatprep.subr.mxu0 %v3825
        %4061 = vmatpush1.msra.mxu0 %v3824
        %4062 = vmatprep.subr.mxu0 %v3827
        %4063 = vmatpush1.msra.mxu0 %v3826
        %4064 = vmatprep.subr.mxu0 %v3829
        %4065 = vmatpush1.msra.mxu0 %v3828
        %4066 = vmatprep.subr.mxu0 %v3831
        %4067 = vmatpush1.msra.mxu0 %v3830
        %4068 = vmatprep.subr.mxu0 %v3833
        %4069 = vmatpush1.msra.mxu0 %v3832
        %4070 = vmatprep.subr.mxu0 %v3835
        %4071 = vmatpush1.msra.mxu0 %v3834
        %4072 = vmatprep.subr.mxu0 %v3837
        %4073 = vmatpush1.msra.mxu0 %v3836
        %4074 = vmatprep.subr.mxu0 %v3839
        %4075 = vmatpush1.msra.mxu0 %v3838
        %4076 = vmatprep.subr.mxu0 %v3841
        %4077 = vmatpush1.msra.mxu0 %v3840
        %4078 = vmatprep.subr.mxu0 %v3843
        %4079 = vmatpush1.msra.mxu0 %v3842
        %4080 = vmatprep.subr.mxu0 %v3845
        %4081 = vmatpush1.msra.mxu0 %v3844
        %4082 = vmatprep.subr.mxu0 %v3847
        %4083 = vmatpush1.msra.mxu0 %v3846
        %4084 = vmatprep.subr.mxu0 %v3849
        %4085 = vmatpush1.msra.mxu0 %v3848
        %4086 = vmatprep.subr.mxu0 %v3851
        %4087 = vmatpush1.msra.mxu0 %v3850
        %4088 = vmatprep.subr.mxu0 %v3853
        %4089 = vmatpush1.msra.mxu0 %v3852
        %4090 = vmatprep.subr.mxu0 %v3855
        %4091 = vmatpush1.msra.mxu0 %v3854
        %4092 = vmatprep.mubr.f32.mxu0 %v3683
        %4093 = vmatmul.mubr.f32.gmra.mrb[0].mxu0 %v3682
        %v4094 = vpop.f32.mrb[0].mxu0
        %v4095 = vadd.f32 %v3982, %v4094
        %v4096 = vpop.f32.mrb[0].mxu0
        %v4097 = vadd.f32 %v3984, %v4096
        %4098 = vmatprep.mubr.f32.mxu0 %v3689
        %4099 = vmatmul.mubr.f32.gmra.mrb[0].mxu0 %v3688
        %v4100 = vpop.f32.mrb[0].mxu0
        %v4101 = vadd.f32 %v3988, %v4100
        %v4102 = vpop.f32.mrb[0].mxu0
        %v4103 = vadd.f32 %v3990, %v4102
        %4104 = vmatprep.mubr.f32.mxu0 %v3695
        %4105 = vmatmul.mubr.f32.gmra.mrb[0].mxu0 %v3694
        %v4106 = vpop.f32.mrb[0].mxu0
        %v4107 = vadd.f32 %v3994, %v4106
        %v4108 = vpop.f32.mrb[0].mxu0
        %v4109 = vadd.f32 %v3996, %v4108
        %4110 = vmatprep.mubr.f32.mxu0 %v3701
        %4111 = vmatmul.mubr.f32.gmra.mrb[0].mxu0 %v3700
        %v4112 = vpop.f32.mrb[0].mxu0
        %v4113 = vadd.f32 %v4000, %v4112
        %v4114 = vpop.f32.mrb[0].mxu0
        %v4115 = vadd.f32 %v4002, %v4114
        %4116 = vmatprep.mubr.f32.mxu0 %v3707
        %4117 = vmatmul.mubr.f32.gmra.mrb[0].mxu0 %v3706
        %v4118 = vpop.f32.mrb[0].mxu0
        %v4119 = vadd.f32 %v4006, %v4118
        %v4120 = vpop.f32.mrb[0].mxu0
        %v4121 = vadd.f32 %v4008, %v4120
        %4122 = vmatprep.mubr.f32.mxu0 %v3713
        %4123 = vmatmul.mubr.f32.gmra.mrb[0].mxu0 %v3712
        %v4124 = vpop.f32.mrb[0].mxu0
        %v4125 = vadd.f32 %v4012, %v4124
        %v4126 = vpop.f32.mrb[0].mxu0
        %v4127 = vadd.f32 %v4014, %v4126
        %4128 = vmatprep.mubr.f32.mxu0 %v3719
        %4129 = vmatmul.mubr.f32.gmra.mrb[0].mxu0 %v3718
        %v4130 = vpop.f32.mrb[0].mxu0
        %v4131 = vadd.f32 %v4018, %v4130
        %v4132 = vpop.f32.mrb[0].mxu0
        %v4133 = vadd.f32 %v4020, %v4132
        %4134 = vmatprep.mubr.f32.mxu0 %v3725
        %4135 = vmatmul.mubr.f32.gmra.mrb[0].mxu0 %v3724
        %v4136 = vpop.f32.mrb[0].mxu0
        %v4137 = vadd.f32 %v4024, %v4136
        %v4138 = vpop.f32.mrb[0].mxu0
        %v4139 = vadd.f32 %v4026, %v4138
        %4140 = vdwg.mxu0
        %4141 = vmatprep.subr.mxu0 %v3857
        %4142 = vmatpush1.msra.mxu0 %v3856
        %4143 = vmatprep.subr.mxu0 %v3859
        %4144 = vmatpush1.msra.mxu0 %v3858
        %4145 = vmatprep.subr.mxu0 %v3861
        %4146 = vmatpush1.msra.mxu0 %v3860
        %4147 = vmatprep.subr.mxu0 %v3863
        %4148 = vmatpush1.msra.mxu0 %v3862
        %4149 = vmatprep.subr.mxu0 %v3865
        %4150 = vmatpush1.msra.mxu0 %v3864
        %4151 = vmatprep.subr.mxu0 %v3867
        %4152 = vmatpush1.msra.mxu0 %v3866
        %4153 = vmatprep.subr.mxu0 %v3869
        %4154 = vmatpush1.msra.mxu0 %v3868
        %4155 = vmatprep.subr.mxu0 %v3871
        %4156 = vmatpush1.msra.mxu0 %v3870
        %4157 = vmatprep.subr.mxu0 %v3873
        %4158 = vmatpush1.msra.mxu0 %v3872
        %4159 = vmatprep.subr.mxu0 %v3875
        %4160 = vmatpush1.msra.mxu0 %v3874
        %4161 = vmatprep.subr.mxu0 %v3877
        %4162 = vmatpush1.msra.mxu0 %v3876
        %4163 = vmatprep.subr.mxu0 %v3879
        %4164 = vmatpush1.msra.mxu0 %v3878
        %4165 = vmatprep.subr.mxu0 %v3881
        %4166 = vmatpush1.msra.mxu0 %v3880
        %4167 = vmatprep.subr.mxu0 %v3883
        %4168 = vmatpush1.msra.mxu0 %v3882
        %4169 = vmatprep.subr.mxu0 %v3885
        %4170 = vmatpush1.msra.mxu0 %v3884
        %4171 = vmatprep.subr.mxu0 %v3887
        %4172 = vmatpush1.msra.mxu0 %v3886
        %4173 = vmatprep.subr.mxu0 %v3889
        %4174 = vmatpush1.msra.mxu0 %v3888
        %4175 = vmatprep.subr.mxu0 0.0
        %4176 = vmatpush1.msra.mxu0 0.0
        %4177 = vmatprep.subr.mxu0 0.0
        %4178 = vmatpush1.msra.mxu0 0.0
        %4179 = vmatprep.subr.mxu0 0.0
        %4180 = vmatpush1.msra.mxu0 0.0
        %4181 = vmatprep.subr.mxu0 0.0
        %4182 = vmatpush1.msra.mxu0 0.0
        %4183 = vmatprep.subr.mxu0 0.0
        %4184 = vmatpush1.msra.mxu0 0.0
        %4185 = vmatprep.subr.mxu0 0.0
        %4186 = vmatpush1.msra.mxu0 0.0
        %4187 = vmatprep.subr.mxu0 0.0
        %4188 = vmatpush1.msra.mxu0 0.0
        %4189 = vmatprep.subr.mxu0 0.0
        %4190 = vmatpush1.msra.mxu0 0.0
        %4191 = vmatprep.subr.mxu0 0.0
        %4192 = vmatpush1.msra.mxu0 0.0
        %4193 = vmatprep.subr.mxu0 0.0
        %4194 = vmatpush1.msra.mxu0 0.0
        %4195 = vmatprep.subr.mxu0 0.0
        %4196 = vmatpush1.msra.mxu0 0.0
        %4197 = vmatprep.subr.mxu0 0.0
        %4198 = vmatpush1.msra.mxu0 0.0
        %4199 = vmatprep.subr.mxu0 0.0
        %4200 = vmatpush1.msra.mxu0 0.0
        %4201 = vmatprep.subr.mxu0 0.0
        %4202 = vmatpush1.msra.mxu0 0.0
        %4203 = vmatprep.subr.mxu0 0.0
        %4204 = vmatpush1.msra.mxu0 0.0
        %4205 = vmatprep.mubr.f32.mxu0 %v3892
        %4206 = vmatmul.mubr.f32.gmra.mrb[0].mxu0 %v3684
        %v4207 = vpop.f32.mrb[0].mxu0
        %v4208 = vadd.f32 %v4095, %v4207
        %v4209 = vpop.f32.mrb[0].mxu0
        %v4210 = vadd.f32 %v4097, %v4209
        %4211 = vmatprep.mubr.f32.mxu0 %v3895
        %4212 = vmatmul.mubr.f32.gmra.mrb[0].mxu0 %v3690
        %v4213 = vpop.f32.mrb[0].mxu0
        %v4214 = vadd.f32 %v4101, %v4213
        %v4215 = vpop.f32.mrb[0].mxu0
        %v4216 = vadd.f32 %v4103, %v4215
        %4217 = vmatprep.mubr.f32.mxu0 %v3898
        %4218 = vmatmul.mubr.f32.gmra.mrb[0].mxu0 %v3696
        %v4219 = vpop.f32.mrb[0].mxu0
        %v4220 = vadd.f32 %v4107, %v4219
        %v4221 = vpop.f32.mrb[0].mxu0
        %v4222 = vadd.f32 %v4109, %v4221
        %4223 = vmatprep.mubr.f32.mxu0 %v3901
        %4224 = vmatmul.mubr.f32.gmra.mrb[0].mxu0 %v3702
        %v4225 = vpop.f32.mrb[0].mxu0
        %v4226 = vadd.f32 %v4113, %v4225
        %v4227 = vpop.f32.mrb[0].mxu0
        %v4228 = vadd.f32 %v4115, %v4227
        %4229 = vmatprep.mubr.f32.mxu0 %v3904
        %4230 = vmatmul.mubr.f32.gmra.mrb[0].mxu0 %v3708
        %v4231 = vpop.f32.mrb[0].mxu0
        %v4232 = vadd.f32 %v4119, %v4231
        %v4233 = vpop.f32.mrb[0].mxu0
        %v4234 = vadd.f32 %v4121, %v4233
        %4235 = vmatprep.mubr.f32.mxu0 %v3907
        %4236 = vmatmul.mubr.f32.gmra.mrb[0].mxu0 %v3714
        %v4237 = vpop.f32.mrb[0].mxu0
        %v4238 = vadd.f32 %v4125, %v4237
        %v4239 = vpop.f32.mrb[0].mxu0
        %v4240 = vadd.f32 %v4127, %v4239
        %4241 = vmatprep.mubr.f32.mxu0 %v3910
        %4242 = vmatmul.mubr.f32.gmra.mrb[0].mxu0 %v3720
        %v4243 = vpop.f32.mrb[0].mxu0
        %v4244 = vadd.f32 %v4131, %v4243
        %v4245 = vpop.f32.mrb[0].mxu0
        %v4246 = vadd.f32 %v4133, %v4245
        %4247 = vmatprep.mubr.f32.mxu0 %v3913
        %4248 = vmatmul.mubr.f32.gmra.mrb[0].mxu0 %v3726
        %v4249 = vpop.f32.mrb[0].mxu0
        %v4250 = vadd.f32 %v4137, %v4249
        %v4251 = vpop.f32.mrb[0].mxu0
        %v4252 = vadd.f32 %v4139, %v4251
        %4253 = vdwg.mxu0
        %v4254 = vmax.f32 %v4208, %v4210
        %v4255 = vmax.f32 %v4214, %v4216
        %v4256 = vmax.f32 %v4220, %v4222
        %v4257 = vmax.f32 %v4226, %v4228
        %v4258 = vmax.f32 %v4232, %v4234
        %v4259 = vmax.f32 %v4238, %v4240
        %v4260 = vmax.f32 %v4244, %v4246
        %v4261 = vmax.f32 %v4250, %v4252
        %v4262 = vld [vmem:[%s4] sm:$0xff]
        %v4263 = vld [vmem:[%s4 + $0x8] sm:$0xff]
        %v4264 = vld [vmem:[%s4 + $0x10] sm:$0xff]
        %v4265 = vld [vmem:[%s4 + $0x18] sm:$0xff]
        %v4266 = vld [vmem:[%s4 + $0x20] sm:$0xff]
        %v4267 = vld [vmem:[%s4 + $0x28] sm:$0xff]
        %v4268 = vld [vmem:[%s4 + $0x30] sm:$0xff]
        %v4269 = vld [vmem:[%s4 + $0x38] sm:$0xff]
        %v4270 = vld [vmem:[%s5] sm:$0xff]
        %v4271 = vld [vmem:[%s5 + $0x8] sm:$0x1]
        %4280 = vrot.lane.b32.xlu0 %v4254, 9
        %v4281 = vpop.permute.xlu0 %4280
        %4282 = vrot.lane.b32.xlu0 %v4255, 9
        %v4283 = vpop.permute.xlu0 %4282
        %4284 = vrot.lane.b32.xlu0 %v4256, 9
        %v4285 = vpop.permute.xlu0 %4284
        %4286 = vrot.lane.b32.xlu0 %v4257, 9
        %v4287 = vpop.permute.xlu0 %4286
        %4288 = vrot.lane.b32.xlu0 %v4258, 9
        %v4289 = vpop.permute.xlu0 %4288
        %4290 = vrot.lane.b32.xlu0 %v4259, 9
        %v4291 = vpop.permute.xlu0 %4290
        %4292 = vrot.lane.b32.xlu0 %v4260, 9
        %v4293 = vpop.permute.xlu0 %4292
        %4294 = vrot.lane.b32.xlu0 %v4261, 9
        %v4295 = vpop.permute.xlu0 %4294
        %vm4304 = vcmask 72704
        %v4305 = vsel %vm4304, 0.0, %v4281
        %v4306 = vsel %vm4304, 0.0, %v4283
        %v4307 = vsel %vm4304, 0.0, %v4285
        %v4308 = vsel %vm4304, 0.0, %v4287
        %v4309 = vsel %vm4304, 0.0, %v4289
        %v4310 = vsel %vm4304, 0.0, %v4291
        %v4311 = vsel %vm4304, 0.0, %v4293
        %v4312 = vsel %vm4304, 0.0, %v4295
        %v4313 = vsel %vm4304, %v4281, 0.0
        %v4314 = vsel %vm4304, %v4283, 0.0
        %v4315 = vsel %vm4304, %v4285, 0.0
        %v4316 = vsel %vm4304, %v4287, 0.0
        %v4317 = vsel %vm4304, %v4289, 0.0
        %v4318 = vsel %vm4304, %v4291, 0.0
        %v4319 = vsel %vm4304, %v4293, 0.0
        %v4320 = vsel %vm4304, %v4295, 0.0
        %v4321 = vlaneseq
        %v4322 = vshrl.u32 %v4321, 7
        %v4323 = vsub.s32 0, %v4322
        %v4324 = vrot.slane %v4270, %v4323
        %v4325 = vmul.f32 %v4305, %v4324
        %v4326 = vmul.f32 %v4306, %v4324
        %v4327 = vmul.f32 %v4307, %v4324
        %v4328 = vmul.f32 %v4308, %v4324
        %v4329 = vmul.f32 %v4309, %v4324
        %v4330 = vmul.f32 %v4310, %v4324
        %v4331 = vmul.f32 %v4311, %v4324
        %v4332 = vmul.f32 %v4312, %v4324
        %4334 = vset.pattern.permute.xlu0 0
        %4335 = vperm.xlu0 %4334, %v4262
        %v4336 = vpop.permute.xlu0 %4335
        %4339 = vset.pattern.permute.xlu0 0
        %4340 = vperm.xlu0 %4339, %v4263
        %v4341 = vpop.permute.xlu0 %4340
        %4344 = vset.pattern.permute.xlu0 0
        %4345 = vperm.xlu0 %4344, %v4264
        %v4346 = vpop.permute.xlu0 %4345
        %4349 = vset.pattern.permute.xlu0 0
        %4350 = vperm.xlu0 %4349, %v4265
        %v4351 = vpop.permute.xlu0 %4350
        %4354 = vset.pattern.permute.xlu0 0
        %4355 = vperm.xlu0 %4354, %v4266
        %v4356 = vpop.permute.xlu0 %4355
        %4359 = vset.pattern.permute.xlu0 0
        %4360 = vperm.xlu0 %4359, %v4267
        %v4361 = vpop.permute.xlu0 %4360
        %4364 = vset.pattern.permute.xlu0 0
        %4365 = vperm.xlu0 %4364, %v4268
        %v4366 = vpop.permute.xlu0 %4365
        %4369 = vset.pattern.permute.xlu0 0
        %4370 = vperm.xlu0 %4369, %v4269
        %v4371 = vpop.permute.xlu0 %4370
        %v4373 = vmul.f32 %v4325, %v4336
        %v4374 = vmul.f32 %v4326, %v4341
        %v4375 = vmul.f32 %v4327, %v4346
        %v4376 = vmul.f32 %v4328, %v4351
        %v4377 = vmul.f32 %v4329, %v4356
        %v4378 = vmul.f32 %v4330, %v4361
        %v4379 = vmul.f32 %v4331, %v4366
        %v4380 = vmul.f32 %v4332, %v4371
        %v4381 = vadd.f32 %v4373, 0.0
        %v4382 = vadd.f32 %v4374, 0.0
        %v4383 = vadd.f32 %v4375, 0.0
        %v4384 = vadd.f32 %v4376, 0.0
        %v4385 = vadd.f32 %v4377, 0.0
        %v4386 = vadd.f32 %v4378, 0.0
        %v4387 = vadd.f32 %v4379, 0.0
        %v4388 = vadd.f32 %v4380, 0.0
        %v4389 = vlaneseq
        %v4390 = vshrl.u32 %v4389, 7
        %v4391 = vsub.s32 1, %v4390
        %v4392 = vrot.slane %v4270, %v4391
        %4394 = vrot.lane.b32.xlu0 %v4392, 1
        %v4395 = vpop.permute.xlu0 %4394
        %v4397 = vmul.f32 %v4305, %v4395
        %v4398 = vmul.f32 %v4313, %v4395
        %v4399 = vmul.f32 %v4306, %v4395
        %v4400 = vmul.f32 %v4314, %v4395
        %v4401 = vmul.f32 %v4307, %v4395
        %v4402 = vmul.f32 %v4315, %v4395
        %v4403 = vmul.f32 %v4308, %v4395
        %v4404 = vmul.f32 %v4316, %v4395
        %v4405 = vmul.f32 %v4309, %v4395
        %v4406 = vmul.f32 %v4317, %v4395
        %v4407 = vmul.f32 %v4310, %v4395
        %v4408 = vmul.f32 %v4318, %v4395
        %v4409 = vmul.f32 %v4311, %v4395
        %v4410 = vmul.f32 %v4319, %v4395
        %v4411 = vmul.f32 %v4312, %v4395
        %v4412 = vmul.f32 %v4320, %v4395
        %4413 = vset.pattern.permute.xlu0 1
        %4414 = vperm.xlu0 %4413, %v4262
        %v4415 = vpop.permute.xlu0 %4414
        %4417 = vset.pattern.permute.xlu0 1
        %4418 = vperm.xlu0 %4417, %v4263
        %v4419 = vpop.permute.xlu0 %4418
        %4421 = vset.pattern.permute.xlu0 1
        %4422 = vperm.xlu0 %4421, %v4264
        %v4423 = vpop.permute.xlu0 %4422
        %4425 = vset.pattern.permute.xlu0 1
        %4426 = vperm.xlu0 %4425, %v4265
        %v4427 = vpop.permute.xlu0 %4426
        %4429 = vset.pattern.permute.xlu0 1
        %4430 = vperm.xlu0 %4429, %v4266
        %v4431 = vpop.permute.xlu0 %4430
        %4433 = vset.pattern.permute.xlu0 1
        %4434 = vperm.xlu0 %4433, %v4267
        %v4435 = vpop.permute.xlu0 %4434
        %4437 = vset.pattern.permute.xlu0 1
        %4438 = vperm.xlu0 %4437, %v4268
        %v4439 = vpop.permute.xlu0 %4438
        %4441 = vset.pattern.permute.xlu0 1
        %4442 = vperm.xlu0 %4441, %v4269
        %v4443 = vpop.permute.xlu0 %4442
        %v4445 = vmul.f32 %v4397, %v4415
        %v4446 = vmul.f32 %v4398, %v4415
        %v4447 = vmul.f32 %v4399, %v4419
        %v4448 = vmul.f32 %v4400, %v4419
        %v4449 = vmul.f32 %v4401, %v4423
        %v4450 = vmul.f32 %v4402, %v4423
        %v4451 = vmul.f32 %v4403, %v4427
        %v4452 = vmul.f32 %v4404, %v4427
        %v4453 = vmul.f32 %v4405, %v4431
        %v4454 = vmul.f32 %v4406, %v4431
        %v4455 = vmul.f32 %v4407, %v4435
        %v4456 = vmul.f32 %v4408, %v4435
        %v4457 = vmul.f32 %v4409, %v4439
        %v4458 = vmul.f32 %v4410, %v4439
        %v4459 = vmul.f32 %v4411, %v4443
        %v4460 = vmul.f32 %v4412, %v4443
        %4477 = vrot.lane.b32.xlu0 %v4445, 127
        %v4478 = vpop.permute.xlu0 %4477
        %4479 = vrot.lane.b32.xlu0 %v4446, 127
        %v4480 = vpop.permute.xlu0 %4479
        %4481 = vrot.lane.b32.xlu0 %v4447, 127
        %v4482 = vpop.permute.xlu0 %4481
        %4483 = vrot.lane.b32.xlu0 %v4448, 127
        %v4484 = vpop.permute.xlu0 %4483
        %4485 = vrot.lane.b32.xlu0 %v4449, 127
        %v4486 = vpop.permute.xlu0 %4485
        %4487 = vrot.lane.b32.xlu0 %v4450, 127
        %v4488 = vpop.permute.xlu0 %4487
        %4489 = vrot.lane.b32.xlu0 %v4451, 127
        %v4490 = vpop.permute.xlu0 %4489
        %4491 = vrot.lane.b32.xlu0 %v4452, 127
        %v4492 = vpop.permute.xlu0 %4491
        %4493 = vrot.lane.b32.xlu0 %v4453, 127
        %v4494 = vpop.permute.xlu0 %4493
        %4495 = vrot.lane.b32.xlu0 %v4454, 127
        %v4496 = vpop.permute.xlu0 %4495
        %4497 = vrot.lane.b32.xlu0 %v4455, 127
        %v4498 = vpop.permute.xlu0 %4497
        %4499 = vrot.lane.b32.xlu0 %v4456, 127
        %v4500 = vpop.permute.xlu0 %4499
        %4501 = vrot.lane.b32.xlu0 %v4457, 127
        %v4502 = vpop.permute.xlu0 %4501
        %4503 = vrot.lane.b32.xlu0 %v4458, 127
        %v4504 = vpop.permute.xlu0 %4503
        %4505 = vrot.lane.b32.xlu0 %v4459, 127
        %v4506 = vpop.permute.xlu0 %4505
        %4507 = vrot.lane.b32.xlu0 %v4460, 127
        %v4508 = vpop.permute.xlu0 %4507
        %v4509 = vsel %vm640, %v4478, %v4480
        %v4510 = vsel %vm640, %v4482, %v4484
        %v4511 = vsel %vm640, %v4486, %v4488
        %v4512 = vsel %vm640, %v4490, %v4492
        %v4513 = vsel %vm640, %v4494, %v4496
        %v4514 = vsel %vm640, %v4498, %v4500
        %v4515 = vsel %vm640, %v4502, %v4504
        %v4516 = vsel %vm640, %v4506, %v4508
        %v4525 = vadd.f32 %v4381, %v4509
        %v4526 = vadd.f32 %v4382, %v4510
        %v4527 = vadd.f32 %v4383, %v4511
        %v4528 = vadd.f32 %v4384, %v4512
        %v4529 = vadd.f32 %v4385, %v4513
        %v4530 = vadd.f32 %v4386, %v4514
        %v4531 = vadd.f32 %v4387, %v4515
        %v4532 = vadd.f32 %v4388, %v4516
        %v4533 = vlaneseq
        %v4534 = vshrl.u32 %v4533, 7
        %v4535 = vsub.s32 2, %v4534
        %v4536 = vrot.slane %v4270, %v4535
        %4538 = vrot.lane.b32.xlu0 %v4536, 2
        %v4539 = vpop.permute.xlu0 %4538
        %v4541 = vmul.f32 %v4305, %v4539
        %v4542 = vmul.f32 %v4313, %v4539
        %v4543 = vmul.f32 %v4306, %v4539
        %v4544 = vmul.f32 %v4314, %v4539
        %v4545 = vmul.f32 %v4307, %v4539
        %v4546 = vmul.f32 %v4315, %v4539
        %v4547 = vmul.f32 %v4308, %v4539
        %v4548 = vmul.f32 %v4316, %v4539
        %v4549 = vmul.f32 %v4309, %v4539
        %v4550 = vmul.f32 %v4317, %v4539
        %v4551 = vmul.f32 %v4310, %v4539
        %v4552 = vmul.f32 %v4318, %v4539
        %v4553 = vmul.f32 %v4311, %v4539
        %v4554 = vmul.f32 %v4319, %v4539
        %v4555 = vmul.f32 %v4312, %v4539
        %v4556 = vmul.f32 %v4320, %v4539
        %4557 = vset.pattern.permute.xlu0 2
        %4558 = vperm.xlu0 %4557, %v4262
        %v4559 = vpop.permute.xlu0 %4558
        %4561 = vset.pattern.permute.xlu0 2
        %4562 = vperm.xlu0 %4561, %v4263
        %v4563 = vpop.permute.xlu0 %4562
        %4565 = vset.pattern.permute.xlu0 2
        %4566 = vperm.xlu0 %4565, %v4264
        %v4567 = vpop.permute.xlu0 %4566
        %4569 = vset.pattern.permute.xlu0 2
        %4570 = vperm.xlu0 %4569, %v4265
        %v4571 = vpop.permute.xlu0 %4570
        %4573 = vset.pattern.permute.xlu0 2
        %4574 = vperm.xlu0 %4573, %v4266
        %v4575 = vpop.permute.xlu0 %4574
        %4577 = vset.pattern.permute.xlu0 2
        %4578 = vperm.xlu0 %4577, %v4267
        %v4579 = vpop.permute.xlu0 %4578
        %4581 = vset.pattern.permute.xlu0 2
        %4582 = vperm.xlu0 %4581, %v4268
        %v4583 = vpop.permute.xlu0 %4582
        %4585 = vset.pattern.permute.xlu0 2
        %4586 = vperm.xlu0 %4585, %v4269
        %v4587 = vpop.permute.xlu0 %4586
        %v4589 = vmul.f32 %v4541, %v4559
        %v4590 = vmul.f32 %v4542, %v4559
        %v4591 = vmul.f32 %v4543, %v4563
        %v4592 = vmul.f32 %v4544, %v4563
        %v4593 = vmul.f32 %v4545, %v4567
        %v4594 = vmul.f32 %v4546, %v4567
        %v4595 = vmul.f32 %v4547, %v4571
        %v4596 = vmul.f32 %v4548, %v4571
        %v4597 = vmul.f32 %v4549, %v4575
        %v4598 = vmul.f32 %v4550, %v4575
        %v4599 = vmul.f32 %v4551, %v4579
        %v4600 = vmul.f32 %v4552, %v4579
        %v4601 = vmul.f32 %v4553, %v4583
        %v4602 = vmul.f32 %v4554, %v4583
        %v4603 = vmul.f32 %v4555, %v4587
        %v4604 = vmul.f32 %v4556, %v4587
        %4621 = vrot.lane.b32.xlu0 %v4589, 126
        %v4622 = vpop.permute.xlu0 %4621
        %4623 = vrot.lane.b32.xlu0 %v4590, 126
        %v4624 = vpop.permute.xlu0 %4623
        %4625 = vrot.lane.b32.xlu0 %v4591, 126
        %v4626 = vpop.permute.xlu0 %4625
        %4627 = vrot.lane.b32.xlu0 %v4592, 126
        %v4628 = vpop.permute.xlu0 %4627
        %4629 = vrot.lane.b32.xlu0 %v4593, 126
        %v4630 = vpop.permute.xlu0 %4629
        %4631 = vrot.lane.b32.xlu0 %v4594, 126
        %v4632 = vpop.permute.xlu0 %4631
        %4633 = vrot.lane.b32.xlu0 %v4595, 126
        %v4634 = vpop.permute.xlu0 %4633
        %4635 = vrot.lane.b32.xlu0 %v4596, 126
        %v4636 = vpop.permute.xlu0 %4635
        %4637 = vrot.lane.b32.xlu0 %v4597, 126
        %v4638 = vpop.permute.xlu0 %4637
        %4639 = vrot.lane.b32.xlu0 %v4598, 126
        %v4640 = vpop.permute.xlu0 %4639
        %4641 = vrot.lane.b32.xlu0 %v4599, 126
        %v4642 = vpop.permute.xlu0 %4641
        %4643 = vrot.lane.b32.xlu0 %v4600, 126
        %v4644 = vpop.permute.xlu0 %4643
        %4645 = vrot.lane.b32.xlu0 %v4601, 126
        %v4646 = vpop.permute.xlu0 %4645
        %4647 = vrot.lane.b32.xlu0 %v4602, 126
        %v4648 = vpop.permute.xlu0 %4647
        %4649 = vrot.lane.b32.xlu0 %v4603, 126
        %v4650 = vpop.permute.xlu0 %4649
        %4651 = vrot.lane.b32.xlu0 %v4604, 126
        %v4652 = vpop.permute.xlu0 %4651
        %v4653 = vsel %vm1001, %v4622, %v4624
        %v4654 = vsel %vm1001, %v4626, %v4628
        %v4655 = vsel %vm1001, %v4630, %v4632
        %v4656 = vsel %vm1001, %v4634, %v4636
        %v4657 = vsel %vm1001, %v4638, %v4640
        %v4658 = vsel %vm1001, %v4642, %v4644
        %v4659 = vsel %vm1001, %v4646, %v4648
        %v4660 = vsel %vm1001, %v4650, %v4652
        %v4669 = vadd.f32 %v4525, %v4653
        %v4670 = vadd.f32 %v4526, %v4654
        %v4671 = vadd.f32 %v4527, %v4655
        %v4672 = vadd.f32 %v4528, %v4656
        %v4673 = vadd.f32 %v4529, %v4657
        %v4674 = vadd.f32 %v4530, %v4658
        %v4675 = vadd.f32 %v4531, %v4659
        %v4676 = vadd.f32 %v4532, %v4660
        %v4677 = vlaneseq
        %v4678 = vshrl.u32 %v4677, 7
        %v4679 = vsub.s32 3, %v4678
        %v4680 = vrot.slane %v4270, %v4679
        %4682 = vrot.lane.b32.xlu0 %v4680, 8
        %v4683 = vpop.permute.xlu0 %4682
        %v4685 = vmul.f32 %v4305, %v4683
        %v4686 = vmul.f32 %v4313, %v4683
        %v4687 = vmul.f32 %v4306, %v4683
        %v4688 = vmul.f32 %v4314, %v4683
        %v4689 = vmul.f32 %v4307, %v4683
        %v4690 = vmul.f32 %v4315, %v4683
        %v4691 = vmul.f32 %v4308, %v4683
        %v4692 = vmul.f32 %v4316, %v4683
        %v4693 = vmul.f32 %v4309, %v4683
        %v4694 = vmul.f32 %v4317, %v4683
        %v4695 = vmul.f32 %v4310, %v4683
        %v4696 = vmul.f32 %v4318, %v4683
        %v4697 = vmul.f32 %v4311, %v4683
        %v4698 = vmul.f32 %v4319, %v4683
        %v4699 = vmul.f32 %v4312, %v4683
        %v4700 = vmul.f32 %v4320, %v4683
        %4701 = vset.pattern.permute.xlu0 3
        %4702 = vperm.xlu0 %4701, %v4262
        %v4703 = vpop.permute.xlu0 %4702
        %4705 = vset.pattern.permute.xlu0 3
        %4706 = vperm.xlu0 %4705, %v4263
        %v4707 = vpop.permute.xlu0 %4706
        %4709 = vset.pattern.permute.xlu0 3
        %4710 = vperm.xlu0 %4709, %v4264
        %v4711 = vpop.permute.xlu0 %4710
        %4713 = vset.pattern.permute.xlu0 3
        %4714 = vperm.xlu0 %4713, %v4265
        %v4715 = vpop.permute.xlu0 %4714
        %4717 = vset.pattern.permute.xlu0 3
        %4718 = vperm.xlu0 %4717, %v4266
        %v4719 = vpop.permute.xlu0 %4718
        %4721 = vset.pattern.permute.xlu0 3
        %4722 = vperm.xlu0 %4721, %v4267
        %v4723 = vpop.permute.xlu0 %4722
        %4725 = vset.pattern.permute.xlu0 3
        %4726 = vperm.xlu0 %4725, %v4268
        %v4727 = vpop.permute.xlu0 %4726
        %4729 = vset.pattern.permute.xlu0 3
        %4730 = vperm.xlu0 %4729, %v4269
        %v4731 = vpop.permute.xlu0 %4730
        %v4733 = vmul.f32 %v4685, %v4703
        %v4734 = vmul.f32 %v4686, %v4703
        %v4735 = vmul.f32 %v4687, %v4707
        %v4736 = vmul.f32 %v4688, %v4707
        %v4737 = vmul.f32 %v4689, %v4711
        %v4738 = vmul.f32 %v4690, %v4711
        %v4739 = vmul.f32 %v4691, %v4715
        %v4740 = vmul.f32 %v4692, %v4715
        %v4741 = vmul.f32 %v4693, %v4719
        %v4742 = vmul.f32 %v4694, %v4719
        %v4743 = vmul.f32 %v4695, %v4723
        %v4744 = vmul.f32 %v4696, %v4723
        %v4745 = vmul.f32 %v4697, %v4727
        %v4746 = vmul.f32 %v4698, %v4727
        %v4747 = vmul.f32 %v4699, %v4731
        %v4748 = vmul.f32 %v4700, %v4731
        %4765 = vrot.lane.b32.xlu0 %v4733, 120
        %v4766 = vpop.permute.xlu0 %4765
        %4767 = vrot.lane.b32.xlu0 %v4734, 120
        %v4768 = vpop.permute.xlu0 %4767
        %4769 = vrot.lane.b32.xlu0 %v4735, 120
        %v4770 = vpop.permute.xlu0 %4769
        %4771 = vrot.lane.b32.xlu0 %v4736, 120
        %v4772 = vpop.permute.xlu0 %4771
        %4773 = vrot.lane.b32.xlu0 %v4737, 120
        %v4774 = vpop.permute.xlu0 %4773
        %4775 = vrot.lane.b32.xlu0 %v4738, 120
        %v4776 = vpop.permute.xlu0 %4775
        %4777 = vrot.lane.b32.xlu0 %v4739, 120
        %v4778 = vpop.permute.xlu0 %4777
        %4779 = vrot.lane.b32.xlu0 %v4740, 120
        %v4780 = vpop.permute.xlu0 %4779
        %4781 = vrot.lane.b32.xlu0 %v4741, 120
        %v4782 = vpop.permute.xlu0 %4781
        %4783 = vrot.lane.b32.xlu0 %v4742, 120
        %v4784 = vpop.permute.xlu0 %4783
        %4785 = vrot.lane.b32.xlu0 %v4743, 120
        %v4786 = vpop.permute.xlu0 %4785
        %4787 = vrot.lane.b32.xlu0 %v4744, 120
        %v4788 = vpop.permute.xlu0 %4787
        %4789 = vrot.lane.b32.xlu0 %v4745, 120
        %v4790 = vpop.permute.xlu0 %4789
        %4791 = vrot.lane.b32.xlu0 %v4746, 120
        %v4792 = vpop.permute.xlu0 %4791
        %4793 = vrot.lane.b32.xlu0 %v4747, 120
        %v4794 = vpop.permute.xlu0 %4793
        %4795 = vrot.lane.b32.xlu0 %v4748, 120
        %v4796 = vpop.permute.xlu0 %4795
        %vm4797 = vcmask 982016
        %v4798 = vsel %vm4797, %v4766, %v4768
        %v4799 = vsel %vm4797, %v4770, %v4772
        %v4800 = vsel %vm4797, %v4774, %v4776
        %v4801 = vsel %vm4797, %v4778, %v4780
        %v4802 = vsel %vm4797, %v4782, %v4784
        %v4803 = vsel %vm4797, %v4786, %v4788
        %v4804 = vsel %vm4797, %v4790, %v4792
        %v4805 = vsel %vm4797, %v4794, %v4796
        %v4814 = vadd.f32 %v4669, %v4798
        %v4815 = vadd.f32 %v4670, %v4799
        %v4816 = vadd.f32 %v4671, %v4800
        %v4817 = vadd.f32 %v4672, %v4801
        %v4818 = vadd.f32 %v4673, %v4802
        %v4819 = vadd.f32 %v4674, %v4803
        %v4820 = vadd.f32 %v4675, %v4804
        %v4821 = vadd.f32 %v4676, %v4805
        %v4822 = vlaneseq
        %v4823 = vshrl.u32 %v4822, 7
        %v4824 = vsub.s32 4, %v4823
        %v4825 = vrot.slane %v4270, %v4824
        %4827 = vrot.lane.b32.xlu0 %v4825, 9
        %v4828 = vpop.permute.xlu0 %4827
        %v4830 = vmul.f32 %v4305, %v4828
        %v4831 = vmul.f32 %v4313, %v4828
        %v4832 = vmul.f32 %v4306, %v4828
        %v4833 = vmul.f32 %v4314, %v4828
        %v4834 = vmul.f32 %v4307, %v4828
        %v4835 = vmul.f32 %v4315, %v4828
        %v4836 = vmul.f32 %v4308, %v4828
        %v4837 = vmul.f32 %v4316, %v4828
        %v4838 = vmul.f32 %v4309, %v4828
        %v4839 = vmul.f32 %v4317, %v4828
        %v4840 = vmul.f32 %v4310, %v4828
        %v4841 = vmul.f32 %v4318, %v4828
        %v4842 = vmul.f32 %v4311, %v4828
        %v4843 = vmul.f32 %v4319, %v4828
        %v4844 = vmul.f32 %v4312, %v4828
        %v4845 = vmul.f32 %v4320, %v4828
        %4846 = vset.pattern.permute.xlu0 4
        %4847 = vperm.xlu0 %4846, %v4262
        %v4848 = vpop.permute.xlu0 %4847
        %4850 = vset.pattern.permute.xlu0 4
        %4851 = vperm.xlu0 %4850, %v4263
        %v4852 = vpop.permute.xlu0 %4851
        %4854 = vset.pattern.permute.xlu0 4
        %4855 = vperm.xlu0 %4854, %v4264
        %v4856 = vpop.permute.xlu0 %4855
        %4858 = vset.pattern.permute.xlu0 4
        %4859 = vperm.xlu0 %4858, %v4265
        %v4860 = vpop.permute.xlu0 %4859
        %4862 = vset.pattern.permute.xlu0 4
        %4863 = vperm.xlu0 %4862, %v4266
        %v4864 = vpop.permute.xlu0 %4863
        %4866 = vset.pattern.permute.xlu0 4
        %4867 = vperm.xlu0 %4866, %v4267
        %v4868 = vpop.permute.xlu0 %4867
        %4870 = vset.pattern.permute.xlu0 4
        %4871 = vperm.xlu0 %4870, %v4268
        %v4872 = vpop.permute.xlu0 %4871
        %4874 = vset.pattern.permute.xlu0 4
        %4875 = vperm.xlu0 %4874, %v4269
        %v4876 = vpop.permute.xlu0 %4875
        %v4878 = vmul.f32 %v4830, %v4848
        %v4879 = vmul.f32 %v4831, %v4848
        %v4880 = vmul.f32 %v4832, %v4852
        %v4881 = vmul.f32 %v4833, %v4852
        %v4882 = vmul.f32 %v4834, %v4856
        %v4883 = vmul.f32 %v4835, %v4856
        %v4884 = vmul.f32 %v4836, %v4860
        %v4885 = vmul.f32 %v4837, %v4860
        %v4886 = vmul.f32 %v4838, %v4864
        %v4887 = vmul.f32 %v4839, %v4864
        %v4888 = vmul.f32 %v4840, %v4868
        %v4889 = vmul.f32 %v4841, %v4868
        %v4890 = vmul.f32 %v4842, %v4872
        %v4891 = vmul.f32 %v4843, %v4872
        %v4892 = vmul.f32 %v4844, %v4876
        %v4893 = vmul.f32 %v4845, %v4876
        %4910 = vrot.lane.b32.xlu0 %v4878, 119
        %v4911 = vpop.permute.xlu0 %4910
        %4912 = vrot.lane.b32.xlu0 %v4879, 119
        %v4913 = vpop.permute.xlu0 %4912
        %4914 = vrot.lane.b32.xlu0 %v4880, 119
        %v4915 = vpop.permute.xlu0 %4914
        %4916 = vrot.lane.b32.xlu0 %v4881, 119
        %v4917 = vpop.permute.xlu0 %4916
        %4918 = vrot.lane.b32.xlu0 %v4882, 119
        %v4919 = vpop.permute.xlu0 %4918
        %4920 = vrot.lane.b32.xlu0 %v4883, 119
        %v4921 = vpop.permute.xlu0 %4920
        %4922 = vrot.lane.b32.xlu0 %v4884, 119
        %v4923 = vpop.permute.xlu0 %4922
        %4924 = vrot.lane.b32.xlu0 %v4885, 119
        %v4925 = vpop.permute.xlu0 %4924
        %4926 = vrot.lane.b32.xlu0 %v4886, 119
        %v4927 = vpop.permute.xlu0 %4926
        %4928 = vrot.lane.b32.xlu0 %v4887, 119
        %v4929 = vpop.permute.xlu0 %4928
        %4930 = vrot.lane.b32.xlu0 %v4888, 119
        %v4931 = vpop.permute.xlu0 %4930
        %4932 = vrot.lane.b32.xlu0 %v4889, 119
        %v4933 = vpop.permute.xlu0 %4932
        %4934 = vrot.lane.b32.xlu0 %v4890, 119
        %v4935 = vpop.permute.xlu0 %4934
        %4936 = vrot.lane.b32.xlu0 %v4891, 119
        %v4937 = vpop.permute.xlu0 %4936
        %4938 = vrot.lane.b32.xlu0 %v4892, 119
        %v4939 = vpop.permute.xlu0 %4938
        %4940 = vrot.lane.b32.xlu0 %v4893, 119
        %v4941 = vpop.permute.xlu0 %4940
        %vm4942 = vcmask 973824
        %v4943 = vsel %vm4942, %v4911, %v4913
        %v4944 = vsel %vm4942, %v4915, %v4917
        %v4945 = vsel %vm4942, %v4919, %v4921
        %v4946 = vsel %vm4942, %v4923, %v4925
        %v4947 = vsel %vm4942, %v4927, %v4929
        %v4948 = vsel %vm4942, %v4931, %v4933
        %v4949 = vsel %vm4942, %v4935, %v4937
        %v4950 = vsel %vm4942, %v4939, %v4941
        %v4959 = vadd.f32 %v4814, %v4943
        %v4960 = vadd.f32 %v4815, %v4944
        %v4961 = vadd.f32 %v4816, %v4945
        %v4962 = vadd.f32 %v4817, %v4946
        %v4963 = vadd.f32 %v4818, %v4947
        %v4964 = vadd.f32 %v4819, %v4948
        %v4965 = vadd.f32 %v4820, %v4949
        %v4966 = vadd.f32 %v4821, %v4950
        %v4967 = vlaneseq
        %v4968 = vshrl.u32 %v4967, 7
        %v4969 = vsub.s32 5, %v4968
        %v4970 = vrot.slane %v4270, %v4969
        %4972 = vrot.lane.b32.xlu0 %v4970, 10
        %v4973 = vpop.permute.xlu0 %4972
        %v4975 = vmul.f32 %v4305, %v4973
        %v4976 = vmul.f32 %v4313, %v4973
        %v4977 = vmul.f32 %v4306, %v4973
        %v4978 = vmul.f32 %v4314, %v4973
        %v4979 = vmul.f32 %v4307, %v4973
        %v4980 = vmul.f32 %v4315, %v4973
        %v4981 = vmul.f32 %v4308, %v4973
        %v4982 = vmul.f32 %v4316, %v4973
        %v4983 = vmul.f32 %v4309, %v4973
        %v4984 = vmul.f32 %v4317, %v4973
        %v4985 = vmul.f32 %v4310, %v4973
        %v4986 = vmul.f32 %v4318, %v4973
        %v4987 = vmul.f32 %v4311, %v4973
        %v4988 = vmul.f32 %v4319, %v4973
        %v4989 = vmul.f32 %v4312, %v4973
        %v4990 = vmul.f32 %v4320, %v4973
        %4991 = vset.pattern.permute.xlu0 5
        %4992 = vperm.xlu0 %4991, %v4262
        %v4993 = vpop.permute.xlu0 %4992
        %4995 = vset.pattern.permute.xlu0 5
        %4996 = vperm.xlu0 %4995, %v4263
        %v4997 = vpop.permute.xlu0 %4996
        %4999 = vset.pattern.permute.xlu0 5
        %5000 = vperm.xlu0 %4999, %v4264
        %v5001 = vpop.permute.xlu0 %5000
        %5003 = vset.pattern.permute.xlu0 5
        %5004 = vperm.xlu0 %5003, %v4265
        %v5005 = vpop.permute.xlu0 %5004
        %5007 = vset.pattern.permute.xlu0 5
        %5008 = vperm.xlu0 %5007, %v4266
        %v5009 = vpop.permute.xlu0 %5008
        %5011 = vset.pattern.permute.xlu0 5
        %5012 = vperm.xlu0 %5011, %v4267
        %v5013 = vpop.permute.xlu0 %5012
        %5015 = vset.pattern.permute.xlu0 5
        %5016 = vperm.xlu0 %5015, %v4268
        %v5017 = vpop.permute.xlu0 %5016
        %5019 = vset.pattern.permute.xlu0 5
        %5020 = vperm.xlu0 %5019, %v4269
        %v5021 = vpop.permute.xlu0 %5020
        %v5023 = vmul.f32 %v4975, %v4993
        %v5024 = vmul.f32 %v4976, %v4993
        %v5025 = vmul.f32 %v4977, %v4997
        %v5026 = vmul.f32 %v4978, %v4997
        %v5027 = vmul.f32 %v4979, %v5001
        %v5028 = vmul.f32 %v4980, %v5001
        %v5029 = vmul.f32 %v4981, %v5005
        %v5030 = vmul.f32 %v4982, %v5005
        %v5031 = vmul.f32 %v4983, %v5009
        %v5032 = vmul.f32 %v4984, %v5009
        %v5033 = vmul.f32 %v4985, %v5013
        %v5034 = vmul.f32 %v4986, %v5013
        %v5035 = vmul.f32 %v4987, %v5017
        %v5036 = vmul.f32 %v4988, %v5017
        %v5037 = vmul.f32 %v4989, %v5021
        %v5038 = vmul.f32 %v4990, %v5021
        %5055 = vrot.lane.b32.xlu0 %v5023, 118
        %v5056 = vpop.permute.xlu0 %5055
        %5057 = vrot.lane.b32.xlu0 %v5024, 118
        %v5058 = vpop.permute.xlu0 %5057
        %5059 = vrot.lane.b32.xlu0 %v5025, 118
        %v5060 = vpop.permute.xlu0 %5059
        %5061 = vrot.lane.b32.xlu0 %v5026, 118
        %v5062 = vpop.permute.xlu0 %5061
        %5063 = vrot.lane.b32.xlu0 %v5027, 118
        %v5064 = vpop.permute.xlu0 %5063
        %5065 = vrot.lane.b32.xlu0 %v5028, 118
        %v5066 = vpop.permute.xlu0 %5065
        %5067 = vrot.lane.b32.xlu0 %v5029, 118
        %v5068 = vpop.permute.xlu0 %5067
        %5069 = vrot.lane.b32.xlu0 %v5030, 118
        %v5070 = vpop.permute.xlu0 %5069
        %5071 = vrot.lane.b32.xlu0 %v5031, 118
        %v5072 = vpop.permute.xlu0 %5071
        %5073 = vrot.lane.b32.xlu0 %v5032, 118
        %v5074 = vpop.permute.xlu0 %5073
        %5075 = vrot.lane.b32.xlu0 %v5033, 118
        %v5076 = vpop.permute.xlu0 %5075
        %5077 = vrot.lane.b32.xlu0 %v5034, 118
        %v5078 = vpop.permute.xlu0 %5077
        %5079 = vrot.lane.b32.xlu0 %v5035, 118
        %v5080 = vpop.permute.xlu0 %5079
        %5081 = vrot.lane.b32.xlu0 %v5036, 118
        %v5082 = vpop.permute.xlu0 %5081
        %5083 = vrot.lane.b32.xlu0 %v5037, 118
        %v5084 = vpop.permute.xlu0 %5083
        %5085 = vrot.lane.b32.xlu0 %v5038, 118
        %v5086 = vpop.permute.xlu0 %5085
        %vm5087 = vcmask 965632
        %v5088 = vsel %vm5087, %v5056, %v5058
        %v5089 = vsel %vm5087, %v5060, %v5062
        %v5090 = vsel %vm5087, %v5064, %v5066
        %v5091 = vsel %vm5087, %v5068, %v5070
        %v5092 = vsel %vm5087, %v5072, %v5074
        %v5093 = vsel %vm5087, %v5076, %v5078
        %v5094 = vsel %vm5087, %v5080, %v5082
        %v5095 = vsel %vm5087, %v5084, %v5086
        %v5104 = vadd.f32 %v4959, %v5088
        %v5105 = vadd.f32 %v4960, %v5089
        %v5106 = vadd.f32 %v4961, %v5090
        %v5107 = vadd.f32 %v4962, %v5091
        %v5108 = vadd.f32 %v4963, %v5092
        %v5109 = vadd.f32 %v4964, %v5093
        %v5110 = vadd.f32 %v4965, %v5094
        %v5111 = vadd.f32 %v4966, %v5095
        %v5112 = vlaneseq
        %v5113 = vshrl.u32 %v5112, 7
        %v5114 = vsub.s32 6, %v5113
        %v5115 = vrot.slane %v4270, %v5114
        %5117 = vrot.lane.b32.xlu0 %v5115, 16
        %v5118 = vpop.permute.xlu0 %5117
        %v5120 = vmul.f32 %v4305, %v5118
        %v5121 = vmul.f32 %v4313, %v5118
        %v5122 = vmul.f32 %v4306, %v5118
        %v5123 = vmul.f32 %v4314, %v5118
        %v5124 = vmul.f32 %v4307, %v5118
        %v5125 = vmul.f32 %v4315, %v5118
        %v5126 = vmul.f32 %v4308, %v5118
        %v5127 = vmul.f32 %v4316, %v5118
        %v5128 = vmul.f32 %v4309, %v5118
        %v5129 = vmul.f32 %v4317, %v5118
        %v5130 = vmul.f32 %v4310, %v5118
        %v5131 = vmul.f32 %v4318, %v5118
        %v5132 = vmul.f32 %v4311, %v5118
        %v5133 = vmul.f32 %v4319, %v5118
        %v5134 = vmul.f32 %v4312, %v5118
        %v5135 = vmul.f32 %v4320, %v5118
        %5136 = vset.pattern.permute.xlu0 6
        %5137 = vperm.xlu0 %5136, %v4262
        %v5138 = vpop.permute.xlu0 %5137
        %5140 = vset.pattern.permute.xlu0 6
        %5141 = vperm.xlu0 %5140, %v4263
        %v5142 = vpop.permute.xlu0 %5141
        %5144 = vset.pattern.permute.xlu0 6
        %5145 = vperm.xlu0 %5144, %v4264
        %v5146 = vpop.permute.xlu0 %5145
        %5148 = vset.pattern.permute.xlu0 6
        %5149 = vperm.xlu0 %5148, %v4265
        %v5150 = vpop.permute.xlu0 %5149
        %5152 = vset.pattern.permute.xlu0 6
        %5153 = vperm.xlu0 %5152, %v4266
        %v5154 = vpop.permute.xlu0 %5153
        %5156 = vset.pattern.permute.xlu0 6
        %5157 = vperm.xlu0 %5156, %v4267
        %v5158 = vpop.permute.xlu0 %5157
        %5160 = vset.pattern.permute.xlu0 6
        %5161 = vperm.xlu0 %5160, %v4268
        %v5162 = vpop.permute.xlu0 %5161
        %5164 = vset.pattern.permute.xlu0 6
        %5165 = vperm.xlu0 %5164, %v4269
        %v5166 = vpop.permute.xlu0 %5165
        %v5168 = vmul.f32 %v5120, %v5138
        %v5169 = vmul.f32 %v5121, %v5138
        %v5170 = vmul.f32 %v5122, %v5142
        %v5171 = vmul.f32 %v5123, %v5142
        %v5172 = vmul.f32 %v5124, %v5146
        %v5173 = vmul.f32 %v5125, %v5146
        %v5174 = vmul.f32 %v5126, %v5150
        %v5175 = vmul.f32 %v5127, %v5150
        %v5176 = vmul.f32 %v5128, %v5154
        %v5177 = vmul.f32 %v5129, %v5154
        %v5178 = vmul.f32 %v5130, %v5158
        %v5179 = vmul.f32 %v5131, %v5158
        %v5180 = vmul.f32 %v5132, %v5162
        %v5181 = vmul.f32 %v5133, %v5162
        %v5182 = vmul.f32 %v5134, %v5166
        %v5183 = vmul.f32 %v5135, %v5166
        %5200 = vrot.lane.b32.xlu0 %v5168, 112
        %v5201 = vpop.permute.xlu0 %5200
        %5202 = vrot.lane.b32.xlu0 %v5169, 112
        %v5203 = vpop.permute.xlu0 %5202
        %5204 = vrot.lane.b32.xlu0 %v5170, 112
        %v5205 = vpop.permute.xlu0 %5204
        %5206 = vrot.lane.b32.xlu0 %v5171, 112
        %v5207 = vpop.permute.xlu0 %5206
        %5208 = vrot.lane.b32.xlu0 %v5172, 112
        %v5209 = vpop.permute.xlu0 %5208
        %5210 = vrot.lane.b32.xlu0 %v5173, 112
        %v5211 = vpop.permute.xlu0 %5210
        %5212 = vrot.lane.b32.xlu0 %v5174, 112
        %v5213 = vpop.permute.xlu0 %5212
        %5214 = vrot.lane.b32.xlu0 %v5175, 112
        %v5215 = vpop.permute.xlu0 %5214
        %5216 = vrot.lane.b32.xlu0 %v5176, 112
        %v5217 = vpop.permute.xlu0 %5216
        %5218 = vrot.lane.b32.xlu0 %v5177, 112
        %v5219 = vpop.permute.xlu0 %5218
        %5220 = vrot.lane.b32.xlu0 %v5178, 112
        %v5221 = vpop.permute.xlu0 %5220
        %5222 = vrot.lane.b32.xlu0 %v5179, 112
        %v5223 = vpop.permute.xlu0 %5222
        %5224 = vrot.lane.b32.xlu0 %v5180, 112
        %v5225 = vpop.permute.xlu0 %5224
        %5226 = vrot.lane.b32.xlu0 %v5181, 112
        %v5227 = vpop.permute.xlu0 %5226
        %5228 = vrot.lane.b32.xlu0 %v5182, 112
        %v5229 = vpop.permute.xlu0 %5228
        %5230 = vrot.lane.b32.xlu0 %v5183, 112
        %v5231 = vpop.permute.xlu0 %5230
        %vm5232 = vcmask 916480
        %v5233 = vsel %vm5232, %v5201, %v5203
        %v5234 = vsel %vm5232, %v5205, %v5207
        %v5235 = vsel %vm5232, %v5209, %v5211
        %v5236 = vsel %vm5232, %v5213, %v5215
        %v5237 = vsel %vm5232, %v5217, %v5219
        %v5238 = vsel %vm5232, %v5221, %v5223
        %v5239 = vsel %vm5232, %v5225, %v5227
        %v5240 = vsel %vm5232, %v5229, %v5231
        %v5249 = vadd.f32 %v5104, %v5233
        %v5250 = vadd.f32 %v5105, %v5234
        %v5251 = vadd.f32 %v5106, %v5235
        %v5252 = vadd.f32 %v5107, %v5236
        %v5253 = vadd.f32 %v5108, %v5237
        %v5254 = vadd.f32 %v5109, %v5238
        %v5255 = vadd.f32 %v5110, %v5239
        %v5256 = vadd.f32 %v5111, %v5240
        %v5257 = vlaneseq
        %v5258 = vshrl.u32 %v5257, 7
        %v5259 = vsub.s32 7, %v5258
        %v5260 = vrot.slane %v4270, %v5259
        %5262 = vrot.lane.b32.xlu0 %v5260, 17
        %v5263 = vpop.permute.xlu0 %5262
        %v5265 = vmul.f32 %v4305, %v5263
        %v5266 = vmul.f32 %v4313, %v5263
        %v5267 = vmul.f32 %v4306, %v5263
        %v5268 = vmul.f32 %v4314, %v5263
        %v5269 = vmul.f32 %v4307, %v5263
        %v5270 = vmul.f32 %v4315, %v5263
        %v5271 = vmul.f32 %v4308, %v5263
        %v5272 = vmul.f32 %v4316, %v5263
        %v5273 = vmul.f32 %v4309, %v5263
        %v5274 = vmul.f32 %v4317, %v5263
        %v5275 = vmul.f32 %v4310, %v5263
        %v5276 = vmul.f32 %v4318, %v5263
        %v5277 = vmul.f32 %v4311, %v5263
        %v5278 = vmul.f32 %v4319, %v5263
        %v5279 = vmul.f32 %v4312, %v5263
        %v5280 = vmul.f32 %v4320, %v5263
        %5281 = vset.pattern.permute.xlu0 7
        %5282 = vperm.xlu0 %5281, %v4262
        %v5283 = vpop.permute.xlu0 %5282
        %5285 = vset.pattern.permute.xlu0 7
        %5286 = vperm.xlu0 %5285, %v4263
        %v5287 = vpop.permute.xlu0 %5286
        %5289 = vset.pattern.permute.xlu0 7
        %5290 = vperm.xlu0 %5289, %v4264
        %v5291 = vpop.permute.xlu0 %5290
        %5293 = vset.pattern.permute.xlu0 7
        %5294 = vperm.xlu0 %5293, %v4265
        %v5295 = vpop.permute.xlu0 %5294
        %5297 = vset.pattern.permute.xlu0 7
        %5298 = vperm.xlu0 %5297, %v4266
        %v5299 = vpop.permute.xlu0 %5298
        %5301 = vset.pattern.permute.xlu0 7
        %5302 = vperm.xlu0 %5301, %v4267
        %v5303 = vpop.permute.xlu0 %5302
        %5305 = vset.pattern.permute.xlu0 7
        %5306 = vperm.xlu0 %5305, %v4268
        %v5307 = vpop.permute.xlu0 %5306
        %5309 = vset.pattern.permute.xlu0 7
        %5310 = vperm.xlu0 %5309, %v4269
        %v5311 = vpop.permute.xlu0 %5310
        %v5313 = vmul.f32 %v5265, %v5283
        %v5314 = vmul.f32 %v5266, %v5283
        %v5315 = vmul.f32 %v5267, %v5287
        %v5316 = vmul.f32 %v5268, %v5287
        %v5317 = vmul.f32 %v5269, %v5291
        %v5318 = vmul.f32 %v5270, %v5291
        %v5319 = vmul.f32 %v5271, %v5295
        %v5320 = vmul.f32 %v5272, %v5295
        %v5321 = vmul.f32 %v5273, %v5299
        %v5322 = vmul.f32 %v5274, %v5299
        %v5323 = vmul.f32 %v5275, %v5303
        %v5324 = vmul.f32 %v5276, %v5303
        %v5325 = vmul.f32 %v5277, %v5307
        %v5326 = vmul.f32 %v5278, %v5307
        %v5327 = vmul.f32 %v5279, %v5311
        %v5328 = vmul.f32 %v5280, %v5311
        %5345 = vrot.lane.b32.xlu0 %v5313, 111
        %v5346 = vpop.permute.xlu0 %5345
        %5347 = vrot.lane.b32.xlu0 %v5314, 111
        %v5348 = vpop.permute.xlu0 %5347
        %5349 = vrot.lane.b32.xlu0 %v5315, 111
        %v5350 = vpop.permute.xlu0 %5349
        %5351 = vrot.lane.b32.xlu0 %v5316, 111
        %v5352 = vpop.permute.xlu0 %5351
        %5353 = vrot.lane.b32.xlu0 %v5317, 111
        %v5354 = vpop.permute.xlu0 %5353
        %5355 = vrot.lane.b32.xlu0 %v5318, 111
        %v5356 = vpop.permute.xlu0 %5355
        %5357 = vrot.lane.b32.xlu0 %v5319, 111
        %v5358 = vpop.permute.xlu0 %5357
        %5359 = vrot.lane.b32.xlu0 %v5320, 111
        %v5360 = vpop.permute.xlu0 %5359
        %5361 = vrot.lane.b32.xlu0 %v5321, 111
        %v5362 = vpop.permute.xlu0 %5361
        %5363 = vrot.lane.b32.xlu0 %v5322, 111
        %v5364 = vpop.permute.xlu0 %5363
        %5365 = vrot.lane.b32.xlu0 %v5323, 111
        %v5366 = vpop.permute.xlu0 %5365
        %5367 = vrot.lane.b32.xlu0 %v5324, 111
        %v5368 = vpop.permute.xlu0 %5367
        %5369 = vrot.lane.b32.xlu0 %v5325, 111
        %v5370 = vpop.permute.xlu0 %5369
        %5371 = vrot.lane.b32.xlu0 %v5326, 111
        %v5372 = vpop.permute.xlu0 %5371
        %5373 = vrot.lane.b32.xlu0 %v5327, 111
        %v5374 = vpop.permute.xlu0 %5373
        %5375 = vrot.lane.b32.xlu0 %v5328, 111
        %v5376 = vpop.permute.xlu0 %5375
        %vm5377 = vcmask 908288
        %v5378 = vsel %vm5377, %v5346, %v5348
        %v5379 = vsel %vm5377, %v5350, %v5352
        %v5380 = vsel %vm5377, %v5354, %v5356
        %v5381 = vsel %vm5377, %v5358, %v5360
        %v5382 = vsel %vm5377, %v5362, %v5364
        %v5383 = vsel %vm5377, %v5366, %v5368
        %v5384 = vsel %vm5377, %v5370, %v5372
        %v5385 = vsel %vm5377, %v5374, %v5376
        %v5394 = vadd.f32 %v5249, %v5378
        %v5395 = vadd.f32 %v5250, %v5379
        %v5396 = vadd.f32 %v5251, %v5380
        %v5397 = vadd.f32 %v5252, %v5381
        %v5398 = vadd.f32 %v5253, %v5382
        %v5399 = vadd.f32 %v5254, %v5383
        %v5400 = vadd.f32 %v5255, %v5384
        %v5401 = vadd.f32 %v5256, %v5385
        %v5402 = vlaneseq
        %v5403 = vshrl.u32 %v5402, 7
        %v5404 = vsub.s32 0, %v5403
        %v5405 = vrot.slane %v4271, %v5404
        %5407 = vrot.lane.b32.xlu0 %v5405, 18
        %v5408 = vpop.permute.xlu0 %5407
        %v5410 = vmul.f32 %v4305, %v5408
        %v5411 = vmul.f32 %v4313, %v5408
        %v5412 = vmul.f32 %v4306, %v5408
        %v5413 = vmul.f32 %v4314, %v5408
        %v5414 = vmul.f32 %v4307, %v5408
        %v5415 = vmul.f32 %v4315, %v5408
        %v5416 = vmul.f32 %v4308, %v5408
        %v5417 = vmul.f32 %v4316, %v5408
        %v5418 = vmul.f32 %v4309, %v5408
        %v5419 = vmul.f32 %v4317, %v5408
        %v5420 = vmul.f32 %v4310, %v5408
        %v5421 = vmul.f32 %v4318, %v5408
        %v5422 = vmul.f32 %v4311, %v5408
        %v5423 = vmul.f32 %v4319, %v5408
        %v5424 = vmul.f32 %v4312, %v5408
        %v5425 = vmul.f32 %v4320, %v5408
        %5426 = vset.pattern.permute.xlu0 8
        %5427 = vperm.xlu0 %5426, %v4262
        %v5428 = vpop.permute.xlu0 %5427
        %5430 = vset.pattern.permute.xlu0 8
        %5431 = vperm.xlu0 %5430, %v4263
        %v5432 = vpop.permute.xlu0 %5431
        %5434 = vset.pattern.permute.xlu0 8
        %5435 = vperm.xlu0 %5434, %v4264
        %v5436 = vpop.permute.xlu0 %5435
        %5438 = vset.pattern.permute.xlu0 8
        %5439 = vperm.xlu0 %5438, %v4265
        %v5440 = vpop.permute.xlu0 %5439
        %5442 = vset.pattern.permute.xlu0 8
        %5443 = vperm.xlu0 %5442, %v4266
        %v5444 = vpop.permute.xlu0 %5443
        %5446 = vset.pattern.permute.xlu0 8
        %5447 = vperm.xlu0 %5446, %v4267
        %v5448 = vpop.permute.xlu0 %5447
        %5450 = vset.pattern.permute.xlu0 8
        %5451 = vperm.xlu0 %5450, %v4268
        %v5452 = vpop.permute.xlu0 %5451
        %5454 = vset.pattern.permute.xlu0 8
        %5455 = vperm.xlu0 %5454, %v4269
        %v5456 = vpop.permute.xlu0 %5455
        %v5458 = vmul.f32 %v5410, %v5428
        %v5459 = vmul.f32 %v5411, %v5428
        %v5460 = vmul.f32 %v5412, %v5432
        %v5461 = vmul.f32 %v5413, %v5432
        %v5462 = vmul.f32 %v5414, %v5436
        %v5463 = vmul.f32 %v5415, %v5436
        %v5464 = vmul.f32 %v5416, %v5440
        %v5465 = vmul.f32 %v5417, %v5440
        %v5466 = vmul.f32 %v5418, %v5444
        %v5467 = vmul.f32 %v5419, %v5444
        %v5468 = vmul.f32 %v5420, %v5448
        %v5469 = vmul.f32 %v5421, %v5448
        %v5470 = vmul.f32 %v5422, %v5452
        %v5471 = vmul.f32 %v5423, %v5452
        %v5472 = vmul.f32 %v5424, %v5456
        %v5473 = vmul.f32 %v5425, %v5456
        %5490 = vrot.lane.b32.xlu0 %v5458, 110
        %v5491 = vpop.permute.xlu0 %5490
        %5492 = vrot.lane.b32.xlu0 %v5459, 110
        %v5493 = vpop.permute.xlu0 %5492
        %5494 = vrot.lane.b32.xlu0 %v5460, 110
        %v5495 = vpop.permute.xlu0 %5494
        %5496 = vrot.lane.b32.xlu0 %v5461, 110
        %v5497 = vpop.permute.xlu0 %5496
        %5498 = vrot.lane.b32.xlu0 %v5462, 110
        %v5499 = vpop.permute.xlu0 %5498
        %5500 = vrot.lane.b32.xlu0 %v5463, 110
        %v5501 = vpop.permute.xlu0 %5500
        %5502 = vrot.lane.b32.xlu0 %v5464, 110
        %v5503 = vpop.permute.xlu0 %5502
        %5504 = vrot.lane.b32.xlu0 %v5465, 110
        %v5505 = vpop.permute.xlu0 %5504
        %5506 = vrot.lane.b32.xlu0 %v5466, 110
        %v5507 = vpop.permute.xlu0 %5506
        %5508 = vrot.lane.b32.xlu0 %v5467, 110
        %v5509 = vpop.permute.xlu0 %5508
        %5510 = vrot.lane.b32.xlu0 %v5468, 110
        %v5511 = vpop.permute.xlu0 %5510
        %5512 = vrot.lane.b32.xlu0 %v5469, 110
        %v5513 = vpop.permute.xlu0 %5512
        %5514 = vrot.lane.b32.xlu0 %v5470, 110
        %v5515 = vpop.permute.xlu0 %5514
        %5516 = vrot.lane.b32.xlu0 %v5471, 110
        %v5517 = vpop.permute.xlu0 %5516
        %5518 = vrot.lane.b32.xlu0 %v5472, 110
        %v5519 = vpop.permute.xlu0 %5518
        %5520 = vrot.lane.b32.xlu0 %v5473, 110
        %v5521 = vpop.permute.xlu0 %5520
        %v5522 = vsel %vm1362, %v5491, %v5493
        %v5523 = vsel %vm1362, %v5495, %v5497
        %v5524 = vsel %vm1362, %v5499, %v5501
        %v5525 = vsel %vm1362, %v5503, %v5505
        %v5526 = vsel %vm1362, %v5507, %v5509
        %v5527 = vsel %vm1362, %v5511, %v5513
        %v5528 = vsel %vm1362, %v5515, %v5517
        %v5529 = vsel %vm1362, %v5519, %v5521
        %v5538 = vadd.f32 %v5394, %v5522
        %v5539 = vadd.f32 %v5395, %v5523
        %v5540 = vadd.f32 %v5396, %v5524
        %v5541 = vadd.f32 %v5397, %v5525
        %v5542 = vadd.f32 %v5398, %v5526
        %v5543 = vadd.f32 %v5399, %v5527
        %v5544 = vadd.f32 %v5400, %v5528
        %v5545 = vadd.f32 %v5401, %v5529
        %v5546 = vadd.f32 %v5538, %v5539
        %v5547 = vadd.f32 %v5546, %v5540
        %v5548 = vadd.f32 %v5547, %v5541
        %v5549 = vadd.f32 %v5548, %v5542
        %v5550 = vadd.f32 %v5549, %v5543
        %v5551 = vadd.f32 %v5550, %v5544
        %v5552 = vadd.f32 %v5551, %v5545
        %v5553 = vrot.slane %v5552, 4
        %v5554 = vadd.f32 %v5552, %v5553
        %v5555 = vrot.slane %v5554, 2
        %v5556 = vadd.f32 %v5554, %v5555
        %v5557 = vrot.slane %v5556, 1
        %v5558 = vadd.f32 %v5556, %v5557
        %s5559 = sld [smem:[#allocation2]]
        %v5560 = vstv %s5559
        %v5561 = vadd.f32 %v5558, %v5560
        %v5562 = vxor.u32 %v5561, 2147483648
        %v5563 = vmul.f32 %v5562, 1.442695
        %v5564 = vpow.pop %v5563
        %v5565 = vadd.f32 %v5564, 1.0
        %v5566 = vrcp.pop %v5565
        %v5567 = vmul.f32 1.0, %v5566
        %5568 = vst [vmem:[%s287] sm:$0x1] %v5567
        %p5569 = scmp.lt.s32.totalorder %s20, 1
        %s5570 = scalar_select %p5569, %s20, 1
        %s5571 = scalar_lea.vmem %s7, %s5570
        // Predicated region
        $region53: #{unet_forward.1} parent=47 // pred_check
          %p5572 = pneg %p190
        $region54: #{unet_forward.1} parent=47 // pred_check_branch
          %5574 = sbr.rel (%p5572) target = $region56
        $region55: #{unet_forward.1} parent=47 // pred_region
          _
        $region56: #{unet_forward.1} parent=47 // pred_fallthru
          _
      $region48: #{unet_forward.1} parent=5 // pred_fallthru
        _
      %p5575 = scmp.le.s32.totalorder 2, %s15
      // Predicated region
      $region57: #{unet_forward.1} parent=5 // pred_check
        %p5576 = pneg %p5575
      $region58: #{unet_forward.1} parent=5 // pred_check_branch
        %5578 = sbr.rel (%p5576) target = $region60
      $region59: #{unet_forward.1} parent=5 // pred_region
        %s5579 = ssub.s32 %s15, 2
        // Predicated region
        $region61: #{unet_forward.1} parent=59 // pred_check
          %p5580 = pneg %p196
        $region62: #{unet_forward.1} parent=59 // pred_check_branch
          %5582 = sbr.rel (%p5580) target = $region64
        $region63: #{unet_forward.1} parent=59 // pred_region
          %p5583 = scmp.lt.s32.totalorder %s21, 1
          %s5584 = scalar_select %p5583, %s21, 1
          %s5585 = scalar_lea.vmem %s7, %s5584
        $region64: #{unet_forward.1} parent=59 // pred_fallthru
          _
      $region60: #{unet_forward.1} parent=5 // pred_fallthru
        _
    $region6: #{unet_forward.1} parent=1 // loop_footer
      %s19 = sadd.s32 1, %s15
    $region7: #{unet_forward.1} parent=1 // loop_footer_branch
      %14 = sbr.rel target = $region3
    $region8: #{unet_forward.1} parent=1 // loop_exit
      _
    %5586 = vsyncpa [#allocation4], 1
    %s5587 = scalar_lea.sflag [#allocation4], 1
    %5588 = vsyncpa %s5587, 1

</llo_original>
